<compile_context>
chip_gen: v6e
topology: v6e:2x2x1
jax: 0.10.0
libtpu: 0.0.40
codegen_flags: <defaults>
</compile_context>

<pallas_src>
import functools

import numpy as np
import jax
import jax.numpy as jnp
from jax.experimental import pallas as pl
from jax.experimental.pallas import tpu as pltpu


def _round_up(n, m):
    return ((n + m - 1) // m) * m


# ----------------------------------------------------------------------------
# Kernel
# ----------------------------------------------------------------------------
def rqvae_kernel(x_ref, w1_ref, b1_ref, w2_ref, b2_ref,
                 emb_ref, e2_ref,
                 wd1_ref, bd1_ref, wd2_ref, bd2_ref,
                 dec_ref, loss_ref, *, n_levels):
    wdt = w1_ref.dtype   # MXU operand dtype (bf16 default, f32 optional)

    # ---------------- encoder MLP ----------------
    x = x_ref[...].astype(wdt)
    h = jnp.dot(x, w1_ref[...], preferred_element_type=jnp.float32) + b1_ref[...]
    h = jnp.maximum(h, 0.0)
    enc = jnp.dot(h.astype(wdt), w2_ref[...],
                  preferred_element_type=jnp.float32) + b2_ref[...]

    bt, _ = enc.shape
    kp = emb_ref.shape[2]
    lane = jax.lax.broadcasted_iota(jnp.int32, (bt, kp), 1)

    res = enc
    quantized = jnp.zeros_like(enc)
    sq_acc = jnp.zeros_like(enc)          # accumulated squared error (B, D2p)

    # ---------------- residual quantization (L static levels) ----------------
    for lvl in range(n_levels):
        embed = emb_ref[lvl]              # (D2p, Kp), padded rows are zero
        e2 = e2_ref[lvl]                  # (1, Kp), padded cols = 1e30

        # argmin distance: |res|^2 term dropped (constant per row).
        dist = e2 - 2.0 * jnp.dot(res.astype(wdt), embed,
                                  preferred_element_type=jnp.float32)
        min_d = jnp.min(dist, axis=1, keepdims=True)
        # first-index tie-break (matches torch (-dist).max(1)); exact float
        # equality is safe because min_d is taken from this same dist array.
        ind = jnp.min(jnp.where(dist == min_d, lane, kp), axis=1, keepdims=True)

        # one-hot gather of codewords via MXU, contracting on the K axis.
        onehot = (lane == ind).astype(wdt)
        quant = jax.lax.dot_general(
            onehot, embed,
            dimension_numbers=(((1,), (1,)), ((), ())),
            preferred_element_type=jnp.float32)

        diff = quant - res
        sq_acc = sq_acc + diff * diff     # elementwise; reduced once below
        quantized = quantized + quant
        res = res - quant

    # ---------------- decoder MLP ----------------
    hd = jnp.dot(quantized.astype(wdt), wd1_ref[...],
                 preferred_element_type=jnp.float32) + bd1_ref[...]
    hd = jnp.maximum(hd, 0.0)
    dec = jnp.dot(hd.astype(wdt), wd2_ref[...],
                  preferred_element_type=jnp.float32) + bd2_ref[...]
    dec_ref[...] = dec.astype(dec_ref.dtype)

    # per-row SSE partial (single lane reduction); padded batch rows are
    # discarded in the wrapper, so no in-kernel mask is needed.
    loss_ref[...] = jnp.sum(sq_acc, axis=1, keepdims=True)


# ----------------------------------------------------------------------------
# Parameter prep: lane-pad internal dims only, precompute |E|^2
# ----------------------------------------------------------------------------
def prepare_kernel_params(params, mxu_dtype=jnp.bfloat16, lane_multiple=128):
    (w1, b1, w2, b2, embeds, _cluster_size, wd1, bd1, wd2, bd2) = params
    d0, d1 = w1.shape
    d2 = w2.shape[1]
    n_levels, _, k = embeds.shape
    # d0 (the streamed in/out feature dim) is intentionally NOT padded.
    d1p = _round_up(d1, lane_multiple)
    d2p = _round_up(d2, lane_multiple)
    kp = _round_up(k, lane_multiple)

    def pad2(a, r, c):
        return jnp.pad(a, ((0, r - a.shape[0]), (0, c - a.shape[1])))

    w1p = pad2(w1, d0, d1p).astype(mxu_dtype)        # (D0,  D1p)
    b1p = pad2(b1, 1, d1p).astype(jnp.float32)
    w2p = pad2(w2, d1p, d2p).astype(mxu_dtype)       # (D1p, D2p)
    b2p = pad2(b2, 1, d2p).astype(jnp.float32)
    wd1p = pad2(wd1, d2p, d1p).astype(mxu_dtype)     # (D2p, D1p)
    bd1p = pad2(bd1, 1, d1p).astype(jnp.float32)
    wd2p = pad2(wd2, d1p, d0).astype(mxu_dtype)      # (D1p, D0)
    bd2p = bd2.astype(jnp.float32)                   # (1,   D0)

    embp = jnp.pad(embeds, ((0, 0), (0, d2p - d2), (0, kp - k))).astype(mxu_dtype)
    # |E|^2 per level from the ORIGINAL f32 codebooks (kept f32 in-kernel);
    # padded codeword columns -> huge so the argmin can never pick them.
    e2 = jnp.sum(embeds.astype(jnp.float32) ** 2, axis=1, keepdims=True)  # (L,1,K)
    e2 = jnp.pad(e2, ((0, 0), (0, 0), (0, kp - k)), constant_values=1e30)
    e2 = e2.astype(jnp.float32)

    dims = dict(d0=d0, d1=d1, d2=d2, k=k, d1p=d1p, d2p=d2p, kp=kp,
                n_levels=n_levels)
    padded = (w1p, b1p, w2p, b2p, embp, e2, wd1p, bd1p, wd2p, bd2p)
    return padded, dims


def _vmem_block_bytes(shape, dtype):
    """Conservative VMEM footprint of one block (lane/sublane padded)."""
    s = list(shape)
    s[-1] = _round_up(s[-1], 128)
    if len(s) >= 2:
        s[-2] = _round_up(s[-2], 8)
    n = 1
    for d in s:
        n *= int(d)
    return n * jnp.dtype(dtype).itemsize


# ----------------------------------------------------------------------------
# Wrapper
# ----------------------------------------------------------------------------
def rqvae_forward(x, params, *, tile_b=None, mxu_dtype=jnp.bfloat16,
                  io_dtype=jnp.float32, lane_multiple=128, max_tile_b=1024):
    cluster_size = params[5]
    padded, dims = prepare_kernel_params(params, mxu_dtype, lane_multiple)
    (w1p, b1p, w2p, b2p, embp, e2, wd1p, bd1p, wd2p, bd2p) = padded
    d0, d2 = dims["d0"], dims["d2"]
    d1p, d2p, kp = dims["d1p"], dims["d2p"], dims["kp"]
    n_levels = dims["n_levels"]

    b = x.shape[0]
    # Batch tile: large (per-grid-step overhead dominates at these feature
    # sizes) but at least 2 blocks so "parallel" can use both v7x TCs.
    if tile_b is None:
        tile_b = min(max_tile_b, _round_up(pl.cdiv(b, 2), 8))
    tile_b = max(8, _round_up(int(tile_b), 8))
    bp = _round_up(b, tile_b)
    num_blocks = bp // tile_b

    xp = x.astype(io_dtype)
    if bp != b:
        xp = jnp.pad(xp, ((0, bp - b), (0, 0)))

    grid_spec = pltpu.PrefetchScalarGridSpec(
        num_scalar_prefetch=0,
        grid=(num_blocks,),
        in_specs=[
            pl.BlockSpec((tile_b, d0), lambda i: (i, 0)),          # x (streamed)
            pl.BlockSpec((d0, d1p), lambda i: (0, 0)),             # w1 (resident)
            pl.BlockSpec((1, d1p), lambda i: (0, 0)),              # b1
            pl.BlockSpec((d1p, d2p), lambda i: (0, 0)),            # w2
            pl.BlockSpec((1, d2p), lambda i: (0, 0)),              # b2
            pl.BlockSpec((n_levels, d2p, kp), lambda i: (0, 0, 0)),  # codebooks
            pl.BlockSpec((n_levels, 1, kp), lambda i: (0, 0, 0)),    # |E|^2
            pl.BlockSpec((d2p, d1p), lambda i: (0, 0)),            # wd1
            pl.BlockSpec((1, d1p), lambda i: (0, 0)),              # bd1
            pl.BlockSpec((d1p, d0), lambda i: (0, 0)),             # wd2
            pl.BlockSpec((1, d0), lambda i: (0, 0)),               # bd2
        ],
        out_specs=(
            pl.BlockSpec((tile_b, d0), lambda i: (i, 0)),          # decoded
            pl.BlockSpec((tile_b, 1), lambda i: (i, 0)),           # per-row SSE
        ),
    )

    # VMEM budget from actual block sizes (everything double-buffered by
    # default), clamped so the limit is valid on v7x's 64 MiB as well.
    blocks = [
        ((tile_b, d0), io_dtype), ((tile_b, d0), io_dtype),
        ((tile_b, 1), jnp.float32),
        (w1p.shape, w1p.dtype), (b1p.shape, b1p.dtype),
        (w2p.shape, w2p.dtype), (b2p.shape, b2p.dtype),
        (embp.shape, embp.dtype), (e2.shape, e2.dtype),
        (wd1p.shape, wd1p.dtype), (bd1p.shape, bd1p.dtype),
        (wd2p.shape, wd2p.dtype), (bd2p.shape, bd2p.dtype),
    ]
    block_bytes = 2 * sum(_vmem_block_bytes(s, dt) for s, dt in blocks)
    vmem_limit = int(min(max(2 * block_bytes + (4 << 20), 16 << 20), 64 << 20))

    # advisory cost estimate for XLA scheduling
    wbytes = jnp.dtype(mxu_dtype).itemsize
    io_bytes = jnp.dtype(io_dtype).itemsize
    flops = 2 * bp * (d0 * d1p + d1p * d2p + 2 * n_levels * d2p * kp
                      + d2p * d1p + d1p * d0)
    param_bytes = ((w1p.size + w2p.size + wd1p.size + wd2p.size + embp.size)
                   * wbytes
                   + (b1p.size + b2p.size + bd1p.size + bd2p.size + e2.size) * 4)
    bytes_accessed = param_bytes + 2 * bp * d0 * io_bytes + bp * 4
    cost = pl.CostEstimate(flops=flops, transcendentals=0,
                           bytes_accessed=bytes_accessed)

    kernel = functools.partial(rqvae_kernel, n_levels=n_levels)
    dec_p, loss_rows = pl.pallas_call(
        kernel,
        out_shape=(
            jax.ShapeDtypeStruct((bp, d0), io_dtype),
            jax.ShapeDtypeStruct((bp, 1), jnp.float32),
        ),
        grid_spec=grid_spec,
        compiler_params=pltpu.CompilerParams(
            dimension_semantics=("parallel",),
            vmem_limit_bytes=vmem_limit,
        ),
        cost_estimate=cost,
    )(xp, w1p, b1p, w2p, b2p, embp, e2, wd1p, bd1p, wd2p, bd2p)

    decoded = dec_p[:b] if bp != b else dec_p
    sse = loss_rows[:b, 0] if bp != b else loss_rows[:, 0]
    quant_loss = jnp.sum(sse) / jnp.float32(b * d2)
    # depends only on a constant buffer -> plain JAX, not the kernel
    n_small = jnp.sum((cluster_size < 1.0).astype(jnp.float32))
    return decoded, quant_loss, n_small


# ----------------------------------------------------------------------------
# Pure-JAX reference mirroring the PyTorch eval-mode forward
# ----------------------------------------------------------------------------
def reference_forward(x, params):
    (w1, b1, w2, b2, embeds, cluster_size, wd1, bd1, wd2, bd2) = params
    h = jnp.maximum(x @ w1 + b1, 0.0)
    enc = h @ w2 + b2
    res = enc
    quantized = jnp.zeros_like(enc)
    loss = 0.0
    for lvl in range(embeds.shape[0]):
        emb = embeds[lvl]
        dist = (jnp.sum(res ** 2, axis=1, keepdims=True) - 2.0 * res @ emb
                + jnp.sum(emb ** 2, axis=0, keepdims=True))
        ind = jnp.argmin(dist, axis=1)
        quant = emb.T[ind]
        loss = loss + jnp.mean((quant - res) ** 2)
        quantized = quantized + quant
        res = res - quant
    hd = jnp.maximum(quantized @ wd1 + bd1, 0.0)
    dec = hd @ wd2 + bd2
    nsmall = jnp.sum((cluster_size < 1.0).astype(jnp.float32))
    return dec, loss, nsmall


def init_params(key, hidden_sizes, n_codebooks, codebook_size):
    """Deterministic synthetic parameters (PyTorch-Linear-style uniform init)."""
    d0, d1, d2 = hidden_sizes
    ks = jax.random.split(key, 9)

    def lin(k, din, dout):
        bound = 1.0 / np.sqrt(din)
        kw, kb = jax.random.split(k)
        w = jax.random.uniform(kw, (din, dout), jnp.float32, -bound, bound)
        b = jax.random.uniform(kb, (1, dout), jnp.float32, -bound, bound)
        return w, b

    w1, b1 = lin(ks[0], d0, d1)          # encoder Linear(D0 -> D1)
    w2, b2 = lin(ks[1], d1, d2)          # encoder Linear(D1 -> D2)
    wd1, bd1 = lin(ks[2], d2, d1)        # decoder Linear(D2 -> D1)
    wd2, bd2 = lin(ks[3], d1, d0)        # decoder Linear(D1 -> D0)
    # codebooks: torch init is zeros; use small deterministic random values so
    # the quantization path is non-degenerate.
    embeds = 0.1 * jax.random.normal(ks[4], (n_codebooks, d2, codebook_size),
                                     jnp.float32)
    cluster_size = jnp.zeros((n_codebooks, codebook_size), jnp.float32)
    return (w1, b1, w2, b2, embeds, cluster_size, wd1, bd1, wd2, bd2)


if __name__ == "__main__":
    hidden_sizes = [32, 64, 16]   # input dim 32, latent dim 16
    n_codebooks = 3
    codebook_size = 8

    key = jax.random.PRNGKey(0)
    kx, kprm, kx2 = jax.random.split(key, 3)
    params = init_params(kprm, hidden_sizes, n_codebooks, codebook_size)

    # ---- strict correctness checks use the f32 MXU path (bf16 can flip
    # near-tie codeword indices, which is a semantic index difference) ----
    x = jax.random.normal(kx, (512, hidden_sizes[0]), jnp.float32)
    decoded, quant_loss, n_small = rqvae_forward(x, params,
                                                 mxu_dtype=jnp.float32)
    jax.block_until_ready((decoded, quant_loss, n_small))

    dec_ref, loss_r, nsmall_ref = reference_forward(x, params)
    np.testing.assert_allclose(np.asarray(decoded), np.asarray(dec_ref),
                               rtol=2e-3, atol=2e-3)
    np.testing.assert_allclose(float(quant_loss), float(loss_r),
                               rtol=2e-3, atol=2e-3)
    np.testing.assert_allclose(float(n_small), float(nsmall_ref))

    # batch-padding path: b=13 -> bp=16, 2 blocks of 8, 3 padded rows dropped
    x_small = jax.random.normal(kx2, (13, hidden_sizes[0]), jnp.float32)
    dec_s, loss_s, ns_s = rqvae_forward(x_small, params,
                                        mxu_dtype=jnp.float32)
    jax.block_until_ready((dec_s, loss_s, ns_s))
    dec_sr, loss_sr, ns_sr = reference_forward(x_small, params)
    np.testing.assert_allclose(np.asarray(dec_s), np.asarray(dec_sr),
                               rtol=2e-3, atol=2e-3)
    np.testing.assert_allclose(float(loss_s), float(loss_sr),
                               rtol=2e-3, atol=2e-3)
    np.testing.assert_allclose(float(ns_s), float(ns_sr))

    # ---- perf-default path: bf16 MXU operands + bf16 streamed x/decoded ----
    dec_bf, loss_bf, ns_bf = rqvae_forward(x, params, io_dtype=jnp.bfloat16)
    jax.block_until_ready((dec_bf, loss_bf, ns_bf))
    assert dec_bf.shape == (512, hidden_sizes[0])
    assert bool(jnp.all(jnp.isfinite(dec_bf.astype(jnp.float32))))
    assert bool(jnp.isfinite(loss_bf))
    assert float(ns_bf) == float(nsmall_ref)

    print("KERNEL_OK")
</pallas_src>

<mosaic_0001>
module attributes {stable_mosaic.version = 11 : i64} {
  func.func @rqvae_kernel(%arg0: i32, %arg1: memref<256x32xf32, #tpu.memory_space<vmem>>, %arg2: memref<32x128xf32, #tpu.memory_space<vmem>>, %arg3: memref<1x128xf32, #tpu.memory_space<vmem>>, %arg4: memref<128x128xf32, #tpu.memory_space<vmem>>, %arg5: memref<1x128xf32, #tpu.memory_space<vmem>>, %arg6: memref<3x128x128xf32, #tpu.memory_space<vmem>>, %arg7: memref<3x1x128xf32, #tpu.memory_space<vmem>>, %arg8: memref<128x128xf32, #tpu.memory_space<vmem>>, %arg9: memref<1x128xf32, #tpu.memory_space<vmem>>, %arg10: memref<128x32xf32, #tpu.memory_space<vmem>>, %arg11: memref<1x32xf32, #tpu.memory_space<vmem>>, %arg12: memref<256x32xf32, #tpu.memory_space<vmem>>, %arg13: memref<256x1xf32, #tpu.memory_space<vmem>>) attributes {dimension_semantics = [#tpu.dimension_semantics<parallel>], iteration_bounds = array<i64: 2>, scalar_prefetch = 0 : i64, scratch_operands = 0 : i64, tpu.core_type = #tpu.core_type<tc>, window_params = [{transform_indices = @transform_0, window_bounds = array<i64: 256, 32>}, {pipeline_mode = #tpu.pipeline_mode<synchronous>, transform_indices = @transform_1, window_bounds = array<i64: 32, 128>}, {pipeline_mode = #tpu.pipeline_mode<synchronous>, transform_indices = @transform_2, window_bounds = array<i64: 1, 128>}, {pipeline_mode = #tpu.pipeline_mode<synchronous>, transform_indices = @transform_3, window_bounds = array<i64: 128, 128>}, {pipeline_mode = #tpu.pipeline_mode<synchronous>, transform_indices = @transform_4, window_bounds = array<i64: 1, 128>}, {pipeline_mode = #tpu.pipeline_mode<synchronous>, transform_indices = @transform_5, window_bounds = array<i64: 3, 128, 128>}, {pipeline_mode = #tpu.pipeline_mode<synchronous>, transform_indices = @transform_6, window_bounds = array<i64: 3, 1, 128>}, {pipeline_mode = #tpu.pipeline_mode<synchronous>, transform_indices = @transform_7, window_bounds = array<i64: 128, 128>}, {pipeline_mode = #tpu.pipeline_mode<synchronous>, transform_indices = @transform_8, window_bounds = array<i64: 1, 128>}, {pipeline_mode = #tpu.pipeline_mode<synchronous>, transform_indices = @transform_9, window_bounds = array<i64: 128, 32>}, {pipeline_mode = #tpu.pipeline_mode<synchronous>, transform_indices = @transform_10, window_bounds = array<i64: 1, 32>}, {transform_indices = @transform_11, window_bounds = array<i64: 256, 32>}, {transform_indices = @transform_12, window_bounds = array<i64: 256, 1>}]} {
    %c0 = arith.constant 0 : index
    %c0_0 = arith.constant 0 : index
    %0 = vector.load %arg1[%c0, %c0_0] : memref<256x32xf32, #tpu.memory_space<vmem>>, vector<256x32xf32>
    %c0_1 = arith.constant 0 : index
    %c0_2 = arith.constant 0 : index
    %1 = vector.load %arg2[%c0_1, %c0_2] : memref<32x128xf32, #tpu.memory_space<vmem>>, vector<32x128xf32>
    %cst = arith.constant dense<0.000000e+00> : vector<256x128xf32>
    %2 = tpu.matmul %0, %1, %cst {dimension_numbers = #tpu.dot_dimension_numbers<[1], [0], [0], [1], [0, 0, 1, 1], [], []>} : vector<256x32xf32>, vector<32x128xf32>, vector<256x128xf32> -> vector<256x128xf32>
    %c0_3 = arith.constant 0 : index
    %c0_4 = arith.constant 0 : index
    %3 = vector.load %arg3[%c0_3, %c0_4] : memref<1x128xf32, #tpu.memory_space<vmem>>, vector<1x128xf32>
    %4 = vector.broadcast %3 : vector<1x128xf32> to vector<256x128xf32>
    %5 = arith.addf %2, %4 : vector<256x128xf32>
    %cst_5 = arith.constant 0.000000e+00 : f32
    %6 = vector.broadcast %cst_5 : f32 to vector<256x128xf32>
    %7 = arith.maximumf %5, %6 : vector<256x128xf32>
    %c0_6 = arith.constant 0 : index
    %c0_7 = arith.constant 0 : index
    %8 = vector.load %arg4[%c0_6, %c0_7] : memref<128x128xf32, #tpu.memory_space<vmem>>, vector<128x128xf32>
    %cst_8 = arith.constant dense<0.000000e+00> : vector<256x128xf32>
    %9 = tpu.matmul %7, %8, %cst_8 {dimension_numbers = #tpu.dot_dimension_numbers<[1], [0], [0], [1], [0, 0, 1, 1], [], []>} : vector<256x128xf32>, vector<128x128xf32>, vector<256x128xf32> -> vector<256x128xf32>
    %c0_9 = arith.constant 0 : index
    %c0_10 = arith.constant 0 : index
    %10 = vector.load %arg5[%c0_9, %c0_10] : memref<1x128xf32, #tpu.memory_space<vmem>>, vector<1x128xf32>
    %11 = vector.broadcast %10 : vector<1x128xf32> to vector<256x128xf32>
    %12 = arith.addf %9, %11 : vector<256x128xf32>
    %13 = tpu.iota {dimensions = array<i32: 1>} : vector<256x128xi32>
    %cst_11 = arith.constant 0.000000e+00 : f32
    %14 = vector.broadcast %cst_11 : f32 to vector<256x128xf32>
    %cst_12 = arith.constant 0.000000e+00 : f32
    %15 = vector.broadcast %cst_12 : f32 to vector<256x128xf32>
    %c0_13 = arith.constant 0 : index
    %c0_14 = arith.constant 0 : index
    %c0_15 = arith.constant 0 : index
    %16 = vector.load %arg6[%c0_13, %c0_14, %c0_15] : memref<3x128x128xf32, #tpu.memory_space<vmem>>, vector<1x128x128xf32>
    %17 = vector.shape_cast %16 : vector<1x128x128xf32> to vector<128x128xf32>
    %c0_16 = arith.constant 0 : index
    %c0_17 = arith.constant 0 : index
    %c0_18 = arith.constant 0 : index
    %18 = vector.load %arg7[%c0_16, %c0_17, %c0_18] : memref<3x1x128xf32, #tpu.memory_space<vmem>>, vector<1x1x128xf32>
    %19 = vector.shape_cast %18 : vector<1x1x128xf32> to vector<1x128xf32>
    %cst_19 = arith.constant dense<0.000000e+00> : vector<256x128xf32>
    %20 = tpu.matmul %12, %17, %cst_19 {dimension_numbers = #tpu.dot_dimension_numbers<[1], [0], [0], [1], [0, 0, 1, 1], [], []>} : vector<256x128xf32>, vector<128x128xf32>, vector<256x128xf32> -> vector<256x128xf32>
    %cst_20 = arith.constant 2.000000e+00 : f32
    %21 = vector.broadcast %cst_20 : f32 to vector<256x128xf32>
    %22 = arith.mulf %21, %20 : vector<256x128xf32>
    %23 = vector.broadcast %19 : vector<1x128xf32> to vector<256x128xf32>
    %24 = arith.subf %23, %22 : vector<256x128xf32>
    %cst_21 = arith.constant dense<0x7F800000> : vector<256xf32>
    %25 = vector.multi_reduction <minimumf>, %24, %cst_21 [1] : vector<256x128xf32> to vector<256xf32>
    %26 = vector.shape_cast %25 : vector<256xf32> to vector<256x1xf32>
    %27 = vector.broadcast %26 : vector<256x1xf32> to vector<256x128xf32>
    %28 = arith.cmpf oeq, %24, %27 : vector<256x128xf32>
    %c128_i32 = arith.constant 128 : i32
    %29 = vector.broadcast %c128_i32 : i32 to vector<256x128xi32>
    %30 = arith.select %28, %13, %29 : vector<256x128xi1>, vector<256x128xi32>
    %cst_22 = arith.constant dense<2147483647> : vector<256xi32>
    %31 = vector.multi_reduction <minsi>, %30, %cst_22 [1] : vector<256x128xi32> to vector<256xi32>
    %32 = vector.shape_cast %31 : vector<256xi32> to vector<256x1xi32>
    %33 = vector.broadcast %32 : vector<256x1xi32> to vector<256x128xi32>
    %34 = arith.cmpi eq, %13, %33 : vector<256x128xi32>
    %35 = arith.extui %34 : vector<256x128xi1> to vector<256x128xi32>
    %36 = arith.sitofp %35 : vector<256x128xi32> to vector<256x128xf32>
    %cst_23 = arith.constant dense<0.000000e+00> : vector<256x128xf32>
    %37 = tpu.matmul %36, %17, %cst_23 {dimension_numbers = #tpu.dot_dimension_numbers<[1], [1], [0], [0], [0, 0, 1, 0], [], []>} : vector<256x128xf32>, vector<128x128xf32>, vector<256x128xf32> -> vector<256x128xf32>
    %38 = arith.subf %37, %12 : vector<256x128xf32>
    %39 = arith.mulf %38, %38 : vector<256x128xf32>
    %40 = arith.addf %15, %39 : vector<256x128xf32>
    %41 = arith.addf %14, %37 : vector<256x128xf32>
    %42 = arith.subf %12, %37 : vector<256x128xf32>
    %c1 = arith.constant 1 : index
    %c0_24 = arith.constant 0 : index
    %c0_25 = arith.constant 0 : index
    %43 = vector.load %arg6[%c1, %c0_24, %c0_25] : memref<3x128x128xf32, #tpu.memory_space<vmem>>, vector<1x128x128xf32>
    %44 = vector.shape_cast %43 : vector<1x128x128xf32> to vector<128x128xf32>
    %c1_26 = arith.constant 1 : index
    %c0_27 = arith.constant 0 : index
    %c0_28 = arith.constant 0 : index
    %45 = vector.load %arg7[%c1_26, %c0_27, %c0_28] : memref<3x1x128xf32, #tpu.memory_space<vmem>>, vector<1x1x128xf32>
    %46 = vector.shape_cast %45 : vector<1x1x128xf32> to vector<1x128xf32>
    %cst_29 = arith.constant dense<0.000000e+00> : vector<256x128xf32>
    %47 = tpu.matmul %42, %44, %cst_29 {dimension_numbers = #tpu.dot_dimension_numbers<[1], [0], [0], [1], [0, 0, 1, 1], [], []>} : vector<256x128xf32>, vector<128x128xf32>, vector<256x128xf32> -> vector<256x128xf32>
    %cst_30 = arith.constant 2.000000e+00 : f32
    %48 = vector.broadcast %cst_30 : f32 to vector<256x128xf32>
    %49 = arith.mulf %48, %47 : vector<256x128xf32>
    %50 = vector.broadcast %46 : vector<1x128xf32> to vector<256x128xf32>
    %51 = arith.subf %50, %49 : vector<256x128xf32>
    %cst_31 = arith.constant dense<0x7F800000> : vector<256xf32>
    %52 = vector.multi_reduction <minimumf>, %51, %cst_31 [1] : vector<256x128xf32> to vector<256xf32>
    %53 = vector.shape_cast %52 : vector<256xf32> to vector<256x1xf32>
    %54 = vector.broadcast %53 : vector<256x1xf32> to vector<256x128xf32>
    %55 = arith.cmpf oeq, %51, %54 : vector<256x128xf32>
    %c128_i32_32 = arith.constant 128 : i32
    %56 = vector.broadcast %c128_i32_32 : i32 to vector<256x128xi32>
    %57 = arith.select %55, %13, %56 : vector<256x128xi1>, vector<256x128xi32>
    %cst_33 = arith.constant dense<2147483647> : vector<256xi32>
    %58 = vector.multi_reduction <minsi>, %57, %cst_33 [1] : vector<256x128xi32> to vector<256xi32>
    %59 = vector.shape_cast %58 : vector<256xi32> to vector<256x1xi32>
    %60 = vector.broadcast %59 : vector<256x1xi32> to vector<256x128xi32>
    %61 = arith.cmpi eq, %13, %60 : vector<256x128xi32>
    %62 = arith.extui %61 : vector<256x128xi1> to vector<256x128xi32>
    %63 = arith.sitofp %62 : vector<256x128xi32> to vector<256x128xf32>
    %cst_34 = arith.constant dense<0.000000e+00> : vector<256x128xf32>
    %64 = tpu.matmul %63, %44, %cst_34 {dimension_numbers = #tpu.dot_dimension_numbers<[1], [1], [0], [0], [0, 0, 1, 0], [], []>} : vector<256x128xf32>, vector<128x128xf32>, vector<256x128xf32> -> vector<256x128xf32>
    %65 = arith.subf %64, %42 : vector<256x128xf32>
    %66 = arith.mulf %65, %65 : vector<256x128xf32>
    %67 = arith.addf %40, %66 : vector<256x128xf32>
    %68 = arith.addf %41, %64 : vector<256x128xf32>
    %69 = arith.subf %42, %64 : vector<256x128xf32>
    %c2 = arith.constant 2 : index
    %c0_35 = arith.constant 0 : index
    %c0_36 = arith.constant 0 : index
    %70 = vector.load %arg6[%c2, %c0_35, %c0_36] : memref<3x128x128xf32, #tpu.memory_space<vmem>>, vector<1x128x128xf32>
    %71 = vector.shape_cast %70 : vector<1x128x128xf32> to vector<128x128xf32>
    %c2_37 = arith.constant 2 : index
    %c0_38 = arith.constant 0 : index
    %c0_39 = arith.constant 0 : index
    %72 = vector.load %arg7[%c2_37, %c0_38, %c0_39] : memref<3x1x128xf32, #tpu.memory_space<vmem>>, vector<1x1x128xf32>
    %73 = vector.shape_cast %72 : vector<1x1x128xf32> to vector<1x128xf32>
    %cst_40 = arith.constant dense<0.000000e+00> : vector<256x128xf32>
    %74 = tpu.matmul %69, %71, %cst_40 {dimension_numbers = #tpu.dot_dimension_numbers<[1], [0], [0], [1], [0, 0, 1, 1], [], []>} : vector<256x128xf32>, vector<128x128xf32>, vector<256x128xf32> -> vector<256x128xf32>
    %cst_41 = arith.constant 2.000000e+00 : f32
    %75 = vector.broadcast %cst_41 : f32 to vector<256x128xf32>
    %76 = arith.mulf %75, %74 : vector<256x128xf32>
    %77 = vector.broadcast %73 : vector<1x128xf32> to vector<256x128xf32>
    %78 = arith.subf %77, %76 : vector<256x128xf32>
    %cst_42 = arith.constant dense<0x7F800000> : vector<256xf32>
    %79 = vector.multi_reduction <minimumf>, %78, %cst_42 [1] : vector<256x128xf32> to vector<256xf32>
    %80 = vector.shape_cast %79 : vector<256xf32> to vector<256x1xf32>
    %81 = vector.broadcast %80 : vector<256x1xf32> to vector<256x128xf32>
    %82 = arith.cmpf oeq, %78, %81 : vector<256x128xf32>
    %c128_i32_43 = arith.constant 128 : i32
    %83 = vector.broadcast %c128_i32_43 : i32 to vector<256x128xi32>
    %84 = arith.select %82, %13, %83 : vector<256x128xi1>, vector<256x128xi32>
    %cst_44 = arith.constant dense<2147483647> : vector<256xi32>
    %85 = vector.multi_reduction <minsi>, %84, %cst_44 [1] : vector<256x128xi32> to vector<256xi32>
    %86 = vector.shape_cast %85 : vector<256xi32> to vector<256x1xi32>
    %87 = vector.broadcast %86 : vector<256x1xi32> to vector<256x128xi32>
    %88 = arith.cmpi eq, %13, %87 : vector<256x128xi32>
    %89 = arith.extui %88 : vector<256x128xi1> to vector<256x128xi32>
    %90 = arith.sitofp %89 : vector<256x128xi32> to vector<256x128xf32>
    %cst_45 = arith.constant dense<0.000000e+00> : vector<256x128xf32>
    %91 = tpu.matmul %90, %71, %cst_45 {dimension_numbers = #tpu.dot_dimension_numbers<[1], [1], [0], [0], [0, 0, 1, 0], [], []>} : vector<256x128xf32>, vector<128x128xf32>, vector<256x128xf32> -> vector<256x128xf32>
    %92 = arith.subf %91, %69 : vector<256x128xf32>
    %93 = arith.mulf %92, %92 : vector<256x128xf32>
    %94 = arith.addf %67, %93 : vector<256x128xf32>
    %95 = arith.addf %68, %91 : vector<256x128xf32>
    %c0_46 = arith.constant 0 : index
    %c0_47 = arith.constant 0 : index
    %96 = vector.load %arg8[%c0_46, %c0_47] : memref<128x128xf32, #tpu.memory_space<vmem>>, vector<128x128xf32>
    %cst_48 = arith.constant dense<0.000000e+00> : vector<256x128xf32>
    %97 = tpu.matmul %95, %96, %cst_48 {dimension_numbers = #tpu.dot_dimension_numbers<[1], [0], [0], [1], [0, 0, 1, 1], [], []>} : vector<256x128xf32>, vector<128x128xf32>, vector<256x128xf32> -> vector<256x128xf32>
    %c0_49 = arith.constant 0 : index
    %c0_50 = arith.constant 0 : index
    %98 = vector.load %arg9[%c0_49, %c0_50] : memref<1x128xf32, #tpu.memory_space<vmem>>, vector<1x128xf32>
    %99 = vector.broadcast %98 : vector<1x128xf32> to vector<256x128xf32>
    %100 = arith.addf %97, %99 : vector<256x128xf32>
    %cst_51 = arith.constant 0.000000e+00 : f32
    %101 = vector.broadcast %cst_51 : f32 to vector<256x128xf32>
    %102 = arith.maximumf %100, %101 : vector<256x128xf32>
    %c0_52 = arith.constant 0 : index
    %c0_53 = arith.constant 0 : index
    %103 = vector.load %arg10[%c0_52, %c0_53] : memref<128x32xf32, #tpu.memory_space<vmem>>, vector<128x32xf32>
    %cst_54 = arith.constant dense<0.000000e+00> : vector<256x32xf32>
    %104 = tpu.matmul %102, %103, %cst_54 {dimension_numbers = #tpu.dot_dimension_numbers<[1], [0], [0], [1], [0, 0, 1, 1], [], []>} : vector<256x128xf32>, vector<128x32xf32>, vector<256x32xf32> -> vector<256x32xf32>
    %c0_55 = arith.constant 0 : index
    %c0_56 = arith.constant 0 : index
    %105 = vector.load %arg11[%c0_55, %c0_56] : memref<1x32xf32, #tpu.memory_space<vmem>>, vector<1x32xf32>
    %106 = vector.broadcast %105 : vector<1x32xf32> to vector<256x32xf32>
    %107 = arith.addf %104, %106 : vector<256x32xf32>
    %c0_57 = arith.constant 0 : index
    %c0_58 = arith.constant 0 : index
    %108 = vector.load %arg12[%c0_57, %c0_58] : memref<256x32xf32, #tpu.memory_space<vmem>>, vector<256x32xf32>
    tpu.vector_store %arg12[%c0_57, %c0_58], %107 {strides = array<i32>} : memref<256x32xf32, #tpu.memory_space<vmem>>, vector<256x32xf32>,
    %cst_59 = arith.constant dense<0.000000e+00> : vector<256xf32>
    %109 = vector.multi_reduction <add>, %94, %cst_59 [1] : vector<256x128xf32> to vector<256xf32>
    %110 = vector.shape_cast %109 : vector<256xf32> to vector<256x1xf32>
    %c0_60 = arith.constant 0 : index
    %c0_61 = arith.constant 0 : index
    %111 = vector.load %arg13[%c0_60, %c0_61] : memref<256x1xf32, #tpu.memory_space<vmem>>, vector<256x1xf32>
    tpu.vector_store %arg13[%c0_60, %c0_61], %110 {strides = array<i32>} : memref<256x1xf32, #tpu.memory_space<vmem>>, vector<256x1xf32>,
    return
  }
  func.func @transform_0(%arg0: i32) -> (i32, i32) {
    %c0_i32 = arith.constant 0 : i32
    %c0_i32_0 = arith.constant 0 : i32
    return %arg0, %c0_i32 : i32, i32
  }
  func.func @transform_1(%arg0: i32) -> (i32, i32) {
    %c0_i32 = arith.constant 0 : i32
    %c0_i32_0 = arith.constant 0 : i32
    %c0_i32_1 = arith.constant 0 : i32
    return %c0_i32, %c0_i32_0 : i32, i32
  }
  func.func @transform_2(%arg0: i32) -> (i32, i32) {
    %c0_i32 = arith.constant 0 : i32
    %c0_i32_0 = arith.constant 0 : i32
    %c0_i32_1 = arith.constant 0 : i32
    return %c0_i32, %c0_i32_0 : i32, i32
  }
  func.func @transform_3(%arg0: i32) -> (i32, i32) {
    %c0_i32 = arith.constant 0 : i32
    %c0_i32_0 = arith.constant 0 : i32
    %c0_i32_1 = arith.constant 0 : i32
    return %c0_i32, %c0_i32_0 : i32, i32
  }
  func.func @transform_4(%arg0: i32) -> (i32, i32) {
    %c0_i32 = arith.constant 0 : i32
    %c0_i32_0 = arith.constant 0 : i32
    %c0_i32_1 = arith.constant 0 : i32
    return %c0_i32, %c0_i32_0 : i32, i32
  }
  func.func @transform_5(%arg0: i32) -> (i32, i32, i32) {
    %c0_i32 = arith.constant 0 : i32
    %c0_i32_0 = arith.constant 0 : i32
    %c0_i32_1 = arith.constant 0 : i32
    %c0_i32_2 = arith.constant 0 : i32
    return %c0_i32, %c0_i32_0, %c0_i32_1 : i32, i32, i32
  }
  func.func @transform_6(%arg0: i32) -> (i32, i32, i32) {
    %c0_i32 = arith.constant 0 : i32
    %c0_i32_0 = arith.constant 0 : i32
    %c0_i32_1 = arith.constant 0 : i32
    %c0_i32_2 = arith.constant 0 : i32
    return %c0_i32, %c0_i32_0, %c0_i32_1 : i32, i32, i32
  }
  func.func @transform_7(%arg0: i32) -> (i32, i32) {
    %c0_i32 = arith.constant 0 : i32
    %c0_i32_0 = arith.constant 0 : i32
    %c0_i32_1 = arith.constant 0 : i32
    return %c0_i32, %c0_i32_0 : i32, i32
  }
  func.func @transform_8(%arg0: i32) -> (i32, i32) {
    %c0_i32 = arith.constant 0 : i32
    %c0_i32_0 = arith.constant 0 : i32
    %c0_i32_1 = arith.constant 0 : i32
    return %c0_i32, %c0_i32_0 : i32, i32
  }
  func.func @transform_9(%arg0: i32) -> (i32, i32) {
    %c0_i32 = arith.constant 0 : i32
    %c0_i32_0 = arith.constant 0 : i32
    %c0_i32_1 = arith.constant 0 : i32
    return %c0_i32, %c0_i32_0 : i32, i32
  }
  func.func @transform_10(%arg0: i32) -> (i32, i32) {
    %c0_i32 = arith.constant 0 : i32
    %c0_i32_0 = arith.constant 0 : i32
    %c0_i32_1 = arith.constant 0 : i32
    return %c0_i32, %c0_i32_0 : i32, i32
  }
  func.func @transform_11(%arg0: i32) -> (i32, i32) {
    %c0_i32 = arith.constant 0 : i32
    %c0_i32_0 = arith.constant 0 : i32
    return %arg0, %c0_i32 : i32, i32
  }
  func.func @transform_12(%arg0: i32) -> (i32, i32) {
    %c0_i32 = arith.constant 0 : i32
    %c0_i32_0 = arith.constant 0 : i32
    return %arg0, %c0_i32 : i32, i32
  }
}

</mosaic_0001>

<llo_original>
// kernel: tpu_custom_call.1
$region0: #{tpu_custom_call.1}
  #allocation0 [shape = 'u32[]', space=smem, size = 0x4, offset = 0x4, fixed_abs, tag = 'smem constant byte address 0x4 - core index']
  #allocation1 [shape = 'u32[144,128]{1,0:T(1,128)}', space=vmem, size = 0x12000, scoped, tag = 'internal scratch']
  %s0 = inlined_call_operand.vmem [shape: f32[512,32], index: 0, kind: input, shape index: {}]
  %s1 = inlined_call_operand.vmem [shape: f32[32,128], index: 1, kind: input, shape index: {}]
  %s2 = inlined_call_operand.vmem [shape: f32[1,128], index: 2, kind: input, shape index: {}]
  %s3 = inlined_call_operand.vmem [shape: f32[128,128], index: 3, kind: input, shape index: {}]
  %s4 = inlined_call_operand.vmem [shape: f32[1,128], index: 4, kind: input, shape index: {}]
  %s5 = inlined_call_operand.vmem [shape: f32[3,128,128], index: 5, kind: input, shape index: {}]
  %s6 = inlined_call_operand.vmem [shape: f32[3,1,128], index: 6, kind: input, shape index: {}]
  %s7 = inlined_call_operand.vmem [shape: f32[128,128], index: 7, kind: input, shape index: {}]
  %s8 = inlined_call_operand.vmem [shape: f32[1,128], index: 8, kind: input, shape index: {}]
  %s9 = inlined_call_operand.vmem [shape: f32[128,32], index: 9, kind: input, shape index: {}]
  %s10 = inlined_call_operand.vmem [shape: f32[1,32], index: 10, kind: input, shape index: {}]
  %s11 = inlined_call_operand.vmem [shape: f32[512,32], index: 11, kind: output, shape index: {0}]
  %s12 = inlined_call_operand.vmem [shape: f32[512,1], index: 12, kind: output, shape index: {1}]
  %13 = xla_tuple %s11, %s12
  %s14 = sld [smem:[#allocation0]]
  $region85: #{tpu_custom_call.1} parent=0
    _
  %s16 = ssub.s32 1, %s14
  %s17 = scalar_select 0, %s16, %s14
  loop: start=0, step=1, limit=4
  $region2: #{tpu_custom_call.1} parent=0 // loop_pre_header
    _
  $region3: #{tpu_custom_call.1} parent=0 // loop_header
    %s19 = sphi 0, %s23
    %p20 = scmp.ge.s32.totalorder %s19, 4
    %s29 = sphi 0, %s31
    %s32 = sphi 0, %s29
    %s33 = sphi 0, %s32
    %s49 = sphi 0, %s33
    %s53 = sphi 0, %s53
    %s55 = sphi 0, %s53
    %s56 = sphi 0, %s55
    %s70 = sphi 0, %s56
    %s74 = sphi 0, %s74
    %s76 = sphi 0, %s74
    %s77 = sphi 0, %s76
    %s91 = sphi 0, %s77
    %s95 = sphi 0, %s95
    %s97 = sphi 0, %s95
    %s98 = sphi 0, %s97
    %s112 = sphi 0, %s98
    %s116 = sphi 0, %s116
    %s118 = sphi 0, %s116
    %s119 = sphi 0, %s118
    %s133 = sphi 0, %s119
    %s137 = sphi 0, %s137
    %s139 = sphi 0, %s137
    %s140 = sphi 0, %s139
    %s154 = sphi 0, %s140
    %s158 = sphi 0, %s158
    %s160 = sphi 0, %s158
    %s161 = sphi 0, %s160
    %s175 = sphi 0, %s161
    %s179 = sphi 0, %s179
    %s181 = sphi 0, %s179
    %s182 = sphi 0, %s181
    %s196 = sphi 0, %s182
    %s200 = sphi 0, %s200
    %s202 = sphi 0, %s200
    %s203 = sphi 0, %s202
    %s217 = sphi 0, %s203
    %s221 = sphi 0, %s221
    %s223 = sphi 0, %s221
    %s224 = sphi 0, %s223
    %s238 = sphi 0, %s224
    %s242 = sphi 0, %s242
    %s244 = sphi 0, %s242
    %s245 = sphi 0, %s244
    %s259 = sphi 0, %s245
    %s265 = sphi 0, %s267
    %s268 = sphi 0, %s265
    %s269 = sphi 0, %s268
    %s285 = sphi 0, %s269
    %s291 = sphi 0, %s293
    %s294 = sphi 0, %s291
    %s295 = sphi 0, %s294
    %s311 = sphi 0, %s295
  $region4: #{tpu_custom_call.1} parent=0 // loop_header_branch
    %22 = sbr.rel (%p20) target = $region8
  $region5: #{tpu_custom_call.1} parent=0 // loop_body
    %s24 = ssub.s32 %s19, 1
    %s25 = ssub.s32 %s19, 2
    %s26 = sadd.s32 %s19, 1
    %s27 = ssub.s32 %s19, %s26
    %p28 = scmp.eq.s32.totalorder %s27, 0
    %s30 = sadd.s32 %s29, 1
    %s31 = scalar_select %p28, %s29, %s30
    %p34 = pneg %p28
    %p35 = scmp.eq.s32.totalorder %s19, 1
    %p36 = por %p34, %p35
    %p37 = scmp.ne.s32.totalorder %s29, %s32
    %p38 = scmp.eq.s32.totalorder %s19, 0
    %p39 = por %p37, %p38
    %p40 = scmp.ne.s32.totalorder %s29, %s32
    %p41 = scmp.eq.s32.totalorder %s24, 1
    %p42 = por %p40, %p41
    %p43 = scmp.ne.s32.totalorder %s32, %s33
    %p44 = scmp.eq.s32.totalorder %s24, 0
    %p45 = por %p43, %p44
    %p46 = scmp.ne.s32.totalorder %s32, %s33
    %p47 = scmp.eq.s32.totalorder %s25, 1
    %p48 = por %p46, %p47
    %p50 = scmp.ne.s32.totalorder %s33, %s49
    %p51 = scmp.eq.s32.totalorder %s25, 0
    %p52 = por %p50, %p51
    %s54 = sadd.s32 %s53, 1
    %p57 = scmp.eq.s32.totalorder %s19, 1
    %p58 = scmp.ne.s32.totalorder %s53, %s55
    %p59 = scmp.eq.s32.totalorder %s19, 0
    %p60 = por %p58, %p59
    %p61 = scmp.ne.s32.totalorder %s53, %s55
    %p62 = scmp.eq.s32.totalorder %s24, 1
    %p63 = por %p61, %p62
    %p64 = scmp.ne.s32.totalorder %s55, %s56
    %p65 = scmp.eq.s32.totalorder %s24, 0
    %p66 = por %p64, %p65
    %p67 = scmp.ne.s32.totalorder %s55, %s56
    %p68 = scmp.eq.s32.totalorder %s25, 1
    %p69 = por %p67, %p68
    %p71 = scmp.ne.s32.totalorder %s56, %s70
    %p72 = scmp.eq.s32.totalorder %s25, 0
    %p73 = por %p71, %p72
    %s75 = sadd.s32 %s74, 1
    %p78 = scmp.eq.s32.totalorder %s19, 1
    %p79 = scmp.ne.s32.totalorder %s74, %s76
    %p80 = scmp.eq.s32.totalorder %s19, 0
    %p81 = por %p79, %p80
    %p82 = scmp.ne.s32.totalorder %s74, %s76
    %p83 = scmp.eq.s32.totalorder %s24, 1
    %p84 = por %p82, %p83
    %p85 = scmp.ne.s32.totalorder %s76, %s77
    %p86 = scmp.eq.s32.totalorder %s24, 0
    %p87 = por %p85, %p86
    %p88 = scmp.ne.s32.totalorder %s76, %s77
    %p89 = scmp.eq.s32.totalorder %s25, 1
    %p90 = por %p88, %p89
    %p92 = scmp.ne.s32.totalorder %s77, %s91
    %p93 = scmp.eq.s32.totalorder %s25, 0
    %p94 = por %p92, %p93
    %s96 = sadd.s32 %s95, 1
    %p99 = scmp.eq.s32.totalorder %s19, 1
    %p100 = scmp.ne.s32.totalorder %s95, %s97
    %p101 = scmp.eq.s32.totalorder %s19, 0
    %p102 = por %p100, %p101
    %p103 = scmp.ne.s32.totalorder %s95, %s97
    %p104 = scmp.eq.s32.totalorder %s24, 1
    %p105 = por %p103, %p104
    %p106 = scmp.ne.s32.totalorder %s97, %s98
    %p107 = scmp.eq.s32.totalorder %s24, 0
    %p108 = por %p106, %p107
    %p109 = scmp.ne.s32.totalorder %s97, %s98
    %p110 = scmp.eq.s32.totalorder %s25, 1
    %p111 = por %p109, %p110
    %p113 = scmp.ne.s32.totalorder %s98, %s112
    %p114 = scmp.eq.s32.totalorder %s25, 0
    %p115 = por %p113, %p114
    %s117 = sadd.s32 %s116, 1
    %p120 = scmp.eq.s32.totalorder %s19, 1
    %p121 = scmp.ne.s32.totalorder %s116, %s118
    %p122 = scmp.eq.s32.totalorder %s19, 0
    %p123 = por %p121, %p122
    %p124 = scmp.ne.s32.totalorder %s116, %s118
    %p125 = scmp.eq.s32.totalorder %s24, 1
    %p126 = por %p124, %p125
    %p127 = scmp.ne.s32.totalorder %s118, %s119
    %p128 = scmp.eq.s32.totalorder %s24, 0
    %p129 = por %p127, %p128
    %p130 = scmp.ne.s32.totalorder %s118, %s119
    %p131 = scmp.eq.s32.totalorder %s25, 1
    %p132 = por %p130, %p131
    %p134 = scmp.ne.s32.totalorder %s119, %s133
    %p135 = scmp.eq.s32.totalorder %s25, 0
    %p136 = por %p134, %p135
    %s138 = sadd.s32 %s137, 1
    %p141 = scmp.eq.s32.totalorder %s19, 1
    %p142 = scmp.ne.s32.totalorder %s137, %s139
    %p143 = scmp.eq.s32.totalorder %s19, 0
    %p144 = por %p142, %p143
    %p145 = scmp.ne.s32.totalorder %s137, %s139
    %p146 = scmp.eq.s32.totalorder %s24, 1
    %p147 = por %p145, %p146
    %p148 = scmp.ne.s32.totalorder %s139, %s140
    %p149 = scmp.eq.s32.totalorder %s24, 0
    %p150 = por %p148, %p149
    %p151 = scmp.ne.s32.totalorder %s139, %s140
    %p152 = scmp.eq.s32.totalorder %s25, 1
    %p153 = por %p151, %p152
    %p155 = scmp.ne.s32.totalorder %s140, %s154
    %p156 = scmp.eq.s32.totalorder %s25, 0
    %p157 = por %p155, %p156
    %s159 = sadd.s32 %s158, 1
    %p162 = scmp.eq.s32.totalorder %s19, 1
    %p163 = scmp.ne.s32.totalorder %s158, %s160
    %p164 = scmp.eq.s32.totalorder %s19, 0
    %p165 = por %p163, %p164
    %p166 = scmp.ne.s32.totalorder %s158, %s160
    %p167 = scmp.eq.s32.totalorder %s24, 1
    %p168 = por %p166, %p167
    %p169 = scmp.ne.s32.totalorder %s160, %s161
    %p170 = scmp.eq.s32.totalorder %s24, 0
    %p171 = por %p169, %p170
    %p172 = scmp.ne.s32.totalorder %s160, %s161
    %p173 = scmp.eq.s32.totalorder %s25, 1
    %p174 = por %p172, %p173
    %p176 = scmp.ne.s32.totalorder %s161, %s175
    %p177 = scmp.eq.s32.totalorder %s25, 0
    %p178 = por %p176, %p177
    %s180 = sadd.s32 %s179, 1
    %p183 = scmp.eq.s32.totalorder %s19, 1
    %p184 = scmp.ne.s32.totalorder %s179, %s181
    %p185 = scmp.eq.s32.totalorder %s19, 0
    %p186 = por %p184, %p185
    %p187 = scmp.ne.s32.totalorder %s179, %s181
    %p188 = scmp.eq.s32.totalorder %s24, 1
    %p189 = por %p187, %p188
    %p190 = scmp.ne.s32.totalorder %s181, %s182
    %p191 = scmp.eq.s32.totalorder %s24, 0
    %p192 = por %p190, %p191
    %p193 = scmp.ne.s32.totalorder %s181, %s182
    %p194 = scmp.eq.s32.totalorder %s25, 1
    %p195 = por %p193, %p194
    %p197 = scmp.ne.s32.totalorder %s182, %s196
    %p198 = scmp.eq.s32.totalorder %s25, 0
    %p199 = por %p197, %p198
    %s201 = sadd.s32 %s200, 1
    %p204 = scmp.eq.s32.totalorder %s19, 1
    %p205 = scmp.ne.s32.totalorder %s200, %s202
    %p206 = scmp.eq.s32.totalorder %s19, 0
    %p207 = por %p205, %p206
    %p208 = scmp.ne.s32.totalorder %s200, %s202
    %p209 = scmp.eq.s32.totalorder %s24, 1
    %p210 = por %p208, %p209
    %p211 = scmp.ne.s32.totalorder %s202, %s203
    %p212 = scmp.eq.s32.totalorder %s24, 0
    %p213 = por %p211, %p212
    %p214 = scmp.ne.s32.totalorder %s202, %s203
    %p215 = scmp.eq.s32.totalorder %s25, 1
    %p216 = por %p214, %p215
    %p218 = scmp.ne.s32.totalorder %s203, %s217
    %p219 = scmp.eq.s32.totalorder %s25, 0
    %p220 = por %p218, %p219
    %s222 = sadd.s32 %s221, 1
    %p225 = scmp.eq.s32.totalorder %s19, 1
    %p226 = scmp.ne.s32.totalorder %s221, %s223
    %p227 = scmp.eq.s32.totalorder %s19, 0
    %p228 = por %p226, %p227
    %p229 = scmp.ne.s32.totalorder %s221, %s223
    %p230 = scmp.eq.s32.totalorder %s24, 1
    %p231 = por %p229, %p230
    %p232 = scmp.ne.s32.totalorder %s223, %s224
    %p233 = scmp.eq.s32.totalorder %s24, 0
    %p234 = por %p232, %p233
    %p235 = scmp.ne.s32.totalorder %s223, %s224
    %p236 = scmp.eq.s32.totalorder %s25, 1
    %p237 = por %p235, %p236
    %p239 = scmp.ne.s32.totalorder %s224, %s238
    %p240 = scmp.eq.s32.totalorder %s25, 0
    %p241 = por %p239, %p240
    %s243 = sadd.s32 %s242, 1
    %p246 = scmp.eq.s32.totalorder %s19, 1
    %p247 = scmp.ne.s32.totalorder %s242, %s244
    %p248 = scmp.eq.s32.totalorder %s19, 0
    %p249 = por %p247, %p248
    %p250 = scmp.ne.s32.totalorder %s242, %s244
    %p251 = scmp.eq.s32.totalorder %s24, 1
    %p252 = por %p250, %p251
    %p253 = scmp.ne.s32.totalorder %s244, %s245
    %p254 = scmp.eq.s32.totalorder %s24, 0
    %p255 = por %p253, %p254
    %p256 = scmp.ne.s32.totalorder %s244, %s245
    %p257 = scmp.eq.s32.totalorder %s25, 1
    %p258 = por %p256, %p257
    %p260 = scmp.ne.s32.totalorder %s245, %s259
    %p261 = scmp.eq.s32.totalorder %s25, 0
    %p262 = por %p260, %p261
    %s263 = ssub.s32 %s19, %s26
    %p264 = scmp.eq.s32.totalorder %s263, 0
    %s266 = sadd.s32 %s265, 1
    %s267 = scalar_select %p264, %s265, %s266
    %p270 = pneg %p264
    %p271 = scmp.eq.s32.totalorder %s19, 1
    %p272 = por %p270, %p271
    %p273 = scmp.ne.s32.totalorder %s265, %s268
    %p274 = scmp.eq.s32.totalorder %s19, 0
    %p275 = por %p273, %p274
    %p276 = scmp.ne.s32.totalorder %s265, %s268
    %p277 = scmp.eq.s32.totalorder %s24, 1
    %p278 = por %p276, %p277
    %p279 = scmp.ne.s32.totalorder %s268, %s269
    %p280 = scmp.eq.s32.totalorder %s24, 0
    %p281 = por %p279, %p280
    %p282 = scmp.ne.s32.totalorder %s268, %s269
    %p283 = scmp.eq.s32.totalorder %s25, 1
    %p284 = por %p282, %p283
    %p286 = scmp.ne.s32.totalorder %s269, %s285
    %p287 = scmp.eq.s32.totalorder %s25, 0
    %p288 = por %p286, %p287
    %s289 = ssub.s32 %s19, %s26
    %p290 = scmp.eq.s32.totalorder %s289, 0
    %s292 = sadd.s32 %s291, 1
    %s293 = scalar_select %p290, %s291, %s292
    %p296 = pneg %p290
    %p297 = scmp.eq.s32.totalorder %s19, 1
    %p298 = por %p296, %p297
    %p299 = scmp.ne.s32.totalorder %s291, %s294
    %p300 = scmp.eq.s32.totalorder %s19, 0
    %p301 = por %p299, %p300
    %p302 = scmp.ne.s32.totalorder %s291, %s294
    %p303 = scmp.eq.s32.totalorder %s24, 1
    %p304 = por %p302, %p303
    %p305 = scmp.ne.s32.totalorder %s294, %s295
    %p306 = scmp.eq.s32.totalorder %s24, 0
    %p307 = por %p305, %p306
    %p308 = scmp.ne.s32.totalorder %s294, %s295
    %p309 = scmp.eq.s32.totalorder %s25, 1
    %p310 = por %p308, %p309
    %p312 = scmp.ne.s32.totalorder %s295, %s311
    %p313 = scmp.eq.s32.totalorder %s25, 0
    %p314 = por %p312, %p313
    %p315 = scmp.le.s32.totalorder 1, %s19
    %p316 = scmp.lt.s32.totalorder %s19, 3
    %p317 = pnand %p315, %p316
    %p318 = pneg %p317
    // Predicated region
    $region9: #{tpu_custom_call.1} parent=5 // pred_check
      _
    $region10: #{tpu_custom_call.1} parent=5 // pred_check_branch
      %320 = sbr.rel (%p317) target = $region12
    $region11: #{tpu_custom_call.1} parent=5 // pred_region
      %s321 = ssub.s32 %s19, 1
      // Predicated region
      $region13: #{tpu_custom_call.1} parent=11 // pred_check
        %p322 = pneg %p66
      $region14: #{tpu_custom_call.1} parent=11 // pred_check_branch
        %324 = sbr.rel (%p322) target = $region16
      $region15: #{tpu_custom_call.1} parent=11 // pred_region
        _
      $region16: #{tpu_custom_call.1} parent=11 // pred_fallthru
        _
      // Predicated region
      $region17: #{tpu_custom_call.1} parent=11 // pred_check
        %p325 = pneg %p87
      $region18: #{tpu_custom_call.1} parent=11 // pred_check_branch
        %327 = sbr.rel (%p325) target = $region20
      $region19: #{tpu_custom_call.1} parent=11 // pred_region
        _
      $region20: #{tpu_custom_call.1} parent=11 // pred_fallthru
        _
      // Predicated region
      $region21: #{tpu_custom_call.1} parent=11 // pred_check
        %p328 = pneg %p108
      $region22: #{tpu_custom_call.1} parent=11 // pred_check_branch
        %330 = sbr.rel (%p328) target = $region24
      $region23: #{tpu_custom_call.1} parent=11 // pred_region
        _
      $region24: #{tpu_custom_call.1} parent=11 // pred_fallthru
        _
      // Predicated region
      $region25: #{tpu_custom_call.1} parent=11 // pred_check
        %p331 = pneg %p129
      $region26: #{tpu_custom_call.1} parent=11 // pred_check_branch
        %333 = sbr.rel (%p331) target = $region28
      $region27: #{tpu_custom_call.1} parent=11 // pred_region
        _
      $region28: #{tpu_custom_call.1} parent=11 // pred_fallthru
        _
      // Predicated region
      $region29: #{tpu_custom_call.1} parent=11 // pred_check
        %p334 = pneg %p150
      $region30: #{tpu_custom_call.1} parent=11 // pred_check_branch
        %336 = sbr.rel (%p334) target = $region32
      $region31: #{tpu_custom_call.1} parent=11 // pred_region
        _
      $region32: #{tpu_custom_call.1} parent=11 // pred_fallthru
        _
      // Predicated region
      $region33: #{tpu_custom_call.1} parent=11 // pred_check
        %p337 = pneg %p171
      $region34: #{tpu_custom_call.1} parent=11 // pred_check_branch
        %339 = sbr.rel (%p337) target = $region36
      $region35: #{tpu_custom_call.1} parent=11 // pred_region
        _
      $region36: #{tpu_custom_call.1} parent=11 // pred_fallthru
        _
      // Predicated region
      $region37: #{tpu_custom_call.1} parent=11 // pred_check
        %p340 = pneg %p192
      $region38: #{tpu_custom_call.1} parent=11 // pred_check_branch
        %342 = sbr.rel (%p340) target = $region40
      $region39: #{tpu_custom_call.1} parent=11 // pred_region
        _
      $region40: #{tpu_custom_call.1} parent=11 // pred_fallthru
        _
      // Predicated region
      $region41: #{tpu_custom_call.1} parent=11 // pred_check
        %p343 = pneg %p213
      $region42: #{tpu_custom_call.1} parent=11 // pred_check_branch
        %345 = sbr.rel (%p343) target = $region44
      $region43: #{tpu_custom_call.1} parent=11 // pred_region
        _
      $region44: #{tpu_custom_call.1} parent=11 // pred_fallthru
        _
      // Predicated region
      $region45: #{tpu_custom_call.1} parent=11 // pred_check
        %p346 = pneg %p234
      $region46: #{tpu_custom_call.1} parent=11 // pred_check_branch
        %348 = sbr.rel (%p346) target = $region48
      $region47: #{tpu_custom_call.1} parent=11 // pred_region
        _
      $region48: #{tpu_custom_call.1} parent=11 // pred_fallthru
        _
      // Predicated region
      $region49: #{tpu_custom_call.1} parent=11 // pred_check
        %p349 = pneg %p255
      $region50: #{tpu_custom_call.1} parent=11 // pred_check_branch
        %351 = sbr.rel (%p349) target = $region52
      $region51: #{tpu_custom_call.1} parent=11 // pred_region
        _
      $region52: #{tpu_custom_call.1} parent=11 // pred_fallthru
        _
    $region12: #{tpu_custom_call.1} parent=5 // pred_fallthru
      _
    %p352 = scmp.lt.s32.totalorder %s19, 2
    // Predicated region
    $region53: #{tpu_custom_call.1} parent=5 // pred_check
      %p353 = pneg %p352
    $region54: #{tpu_custom_call.1} parent=5 // pred_check_branch
      %355 = sbr.rel (%p353) target = $region56
    $region55: #{tpu_custom_call.1} parent=5 // pred_region
      // Predicated region
      $region57: #{tpu_custom_call.1} parent=55 // pred_check
        %p356 = pneg %p39
      $region58: #{tpu_custom_call.1} parent=55 // pred_check_branch
        %358 = sbr.rel (%p356) target = $region60
      $region59: #{tpu_custom_call.1} parent=55 // pred_region
        %s359 = smul.u32 32, %s19
        %p360 = scmp.lt.s32.totalorder %s359, 63
        %s361 = scalar_select %p360, %s359, 63
        %s362 = smul.addr %s361, 8
        %s363 = scalar_lea.vmem %s0, %s362
        %s364 = smul.u32 32, %s19
      $region60: #{tpu_custom_call.1} parent=55 // pred_fallthru
        _
    $region56: #{tpu_custom_call.1} parent=5 // pred_fallthru
      _
    %p365 = scmp.le.s32.totalorder 1, %s19
    %p366 = scmp.lt.s32.totalorder %s19, 3
    %p367 = pnand %p365, %p366
    %p368 = pneg %p367
    // Predicated region
    $region61: #{tpu_custom_call.1} parent=5 // pred_check
      _
    $region62: #{tpu_custom_call.1} parent=5 // pred_check_branch
      %370 = sbr.rel (%p367) target = $region64
    $region63: #{tpu_custom_call.1} parent=5 // pred_region
      %s371 = ssub.s32 %s19, 1
      %s372 = smul.u32 32, %s24
      %p373 = scmp.lt.s32.totalorder %s372, 63
      %s374 = scalar_select %p373, %s372, 63
      %s375 = smul.addr %s374, 8
      %s376 = scalar_lea.vmem %s0, %s375
      %p377 = pneg %p45
      %p378 = pneg %p42
      %p379 = pneg %p66
      %p380 = pneg %p63
      %p381 = pneg %p87
      %p382 = pneg %p84
      %p383 = pneg %p108
      %p384 = pneg %p105
      %p385 = pneg %p129
      %p386 = pneg %p126
      %p387 = pneg %p150
      %p388 = pneg %p147
      %p389 = pneg %p171
      %p390 = pneg %p168
      %p391 = pneg %p192
      %p392 = pneg %p189
      %p393 = pneg %p213
      %p394 = pneg %p210
      %p395 = pneg %p234
      %p396 = pneg %p231
      %p397 = pneg %p255
      %p398 = pneg %p252
      %p399 = pneg %p281
      %p400 = pneg %p278
      %s401 = smul.u32 32, %s24
      %p402 = scmp.lt.s32.totalorder %s401, 63
      %s403 = scalar_select %p402, %s401, 63
      %s404 = smul.addr %s403, 8
      %s405 = scalar_lea.vmem %s11, %s404
      %p406 = pneg %p307
      %p407 = pneg %p304
      %s408 = smul.u32 32, %s24
      %p409 = scmp.lt.s32.totalorder %s408, 63
      %s410 = scalar_select %p409, %s408, 63
      %s411 = smul.addr %s410, 8
      %s412 = scalar_lea.vmem %s12, %s411
      %s413 = smul.u32 32, %s24
      %p414 = scmp.lt.s32.totalorder %s413, 63
      %s415 = scalar_select %p414, %s413, 63
      %s416 = smul.addr %s415, 8
      %s417 = scalar_lea.vmem %s0, %s416
      %s418 = smul.u32 32, %s24
      %s419 = smul.u32 32, %s24
      %p420 = scmp.lt.s32.totalorder %s419, 63
      %s421 = scalar_select %p420, %s419, 63
      %s422 = smul.addr %s421, 8
      %s423 = scalar_lea.vmem %s11, %s422
      %s424 = smul.u32 32, %s24
      %s425 = smul.u32 32, %s24
      %p426 = scmp.lt.s32.totalorder %s425, 63
      %s427 = scalar_select %p426, %s425, 63
      %s428 = smul.addr %s427, 8
      %s429 = scalar_lea.vmem %s12, %s428
      %s430 = smul.u32 32, %s24
      %v431 = vld [vmem:[%s417] sm:$0xff]
      %v432 = vld [vmem:[%s417 + $0x8] sm:$0xff]
      %v433 = vld [vmem:[%s417 + $0x10] sm:$0xff]
      %v434 = vld [vmem:[%s417 + $0x18] sm:$0xff]
      %v435 = vld [vmem:[%s417 + $0x20] sm:$0xff]
      %v436 = vld [vmem:[%s417 + $0x28] sm:$0xff]
      %v437 = vld [vmem:[%s417 + $0x30] sm:$0xff]
      %v438 = vld [vmem:[%s417 + $0x38] sm:$0xff]
      %v439 = vld [vmem:[%s417 + $0x40] sm:$0xff]
      %v440 = vld [vmem:[%s417 + $0x48] sm:$0xff]
      %v441 = vld [vmem:[%s417 + $0x50] sm:$0xff]
      %v442 = vld [vmem:[%s417 + $0x58] sm:$0xff]
      %v443 = vld [vmem:[%s417 + $0x60] sm:$0xff]
      %v444 = vld [vmem:[%s417 + $0x68] sm:$0xff]
      %v445 = vld [vmem:[%s417 + $0x70] sm:$0xff]
      %v446 = vld [vmem:[%s417 + $0x78] sm:$0xff]
      %v447 = vld [vmem:[%s417 + $0x80] sm:$0xff]
      %v448 = vld [vmem:[%s417 + $0x88] sm:$0xff]
      %v449 = vld [vmem:[%s417 + $0x90] sm:$0xff]
      %v450 = vld [vmem:[%s417 + $0x98] sm:$0xff]
      %v451 = vld [vmem:[%s417 + $0xa0] sm:$0xff]
      %v452 = vld [vmem:[%s417 + $0xa8] sm:$0xff]
      %v453 = vld [vmem:[%s417 + $0xb0] sm:$0xff]
      %v454 = vld [vmem:[%s417 + $0xb8] sm:$0xff]
      %v455 = vld [vmem:[%s417 + $0xc0] sm:$0xff]
      %v456 = vld [vmem:[%s417 + $0xc8] sm:$0xff]
      %v457 = vld [vmem:[%s417 + $0xd0] sm:$0xff]
      %v458 = vld [vmem:[%s417 + $0xd8] sm:$0xff]
      %v459 = vld [vmem:[%s417 + $0xe0] sm:$0xff]
      %v460 = vld [vmem:[%s417 + $0xe8] sm:$0xff]
      %v461 = vld [vmem:[%s417 + $0xf0] sm:$0xff]
      %v462 = vld [vmem:[%s417 + $0xf8] sm:$0xff]
      %v463 = vld [vmem:[%s1] sm:$0xff]
      %v464 = vld [vmem:[%s1 + $0x8] sm:$0xff]
      %v465 = vld [vmem:[%s1 + $0x10] sm:$0xff]
      %v466 = vld [vmem:[%s1 + $0x18] sm:$0xff]
      %v467 = vld [vmem:[%s2] sm:$0x1]
      %v469 = vlaneseq
      %v470 = vshrl.u32 %v469, 7
      %v471 = vsub.s32 0, %v470
      %v472 = vrot.slane %v467, %v471
      %vm474 = vcmask 261120
      %v476 = vsel %vm474, %v431, 0
      %v479 = vsel %vm474, %v432, 0
      %v482 = vsel %vm474, %v433, 0
      %v485 = vsel %vm474, %v434, 0
      %v488 = vsel %vm474, %v435, 0
      %v491 = vsel %vm474, %v436, 0
      %v494 = vsel %vm474, %v437, 0
      %v497 = vsel %vm474, %v438, 0
      %v500 = vsel %vm474, %v439, 0
      %v503 = vsel %vm474, %v440, 0
      %v506 = vsel %vm474, %v441, 0
      %v509 = vsel %vm474, %v442, 0
      %v512 = vsel %vm474, %v443, 0
      %v515 = vsel %vm474, %v444, 0
      %v518 = vsel %vm474, %v445, 0
      %v521 = vsel %vm474, %v446, 0
      %v524 = vsel %vm474, %v447, 0
      %v527 = vsel %vm474, %v448, 0
      %v530 = vsel %vm474, %v449, 0
      %v533 = vsel %vm474, %v450, 0
      %v536 = vsel %vm474, %v451, 0
      %v539 = vsel %vm474, %v452, 0
      %v542 = vsel %vm474, %v453, 0
      %v545 = vsel %vm474, %v454, 0
      %v548 = vsel %vm474, %v455, 0
      %v551 = vsel %vm474, %v456, 0
      %v554 = vsel %vm474, %v457, 0
      %v557 = vsel %vm474, %v458, 0
      %v560 = vsel %vm474, %v459, 0
      %v563 = vsel %vm474, %v460, 0
      %v566 = vsel %vm474, %v461, 0
      %v569 = vsel %vm474, %v462, 0
      %571 = vmatprep.subr.mxu0 0.0
      %572 = vmatpush1.msra.mxu0 0.0
      %573 = vmatprep.subr.mxu0 0.0
      %574 = vmatpush1.msra.mxu0 0.0
      %575 = vmatprep.subr.mxu0 0.0
      %576 = vmatpush1.msra.mxu0 0.0
      %577 = vmatprep.subr.mxu0 0.0
      %578 = vmatpush1.msra.mxu0 0.0
      %579 = vmatprep.subr.mxu0 0.0
      %580 = vmatpush1.msra.mxu0 0.0
      %581 = vmatprep.subr.mxu0 0.0
      %582 = vmatpush1.msra.mxu0 0.0
      %583 = vmatprep.subr.mxu0 0.0
      %584 = vmatpush1.msra.mxu0 0.0
      %585 = vmatprep.subr.mxu0 0.0
      %586 = vmatpush1.msra.mxu0 0.0
      %587 = vmatprep.subr.mxu0 0.0
      %588 = vmatpush1.msra.mxu0 0.0
      %589 = vmatprep.subr.mxu0 0.0
      %590 = vmatpush1.msra.mxu0 0.0
      %591 = vmatprep.subr.mxu0 0.0
      %592 = vmatpush1.msra.mxu0 0.0
      %593 = vmatprep.subr.mxu0 0.0
      %594 = vmatpush1.msra.mxu0 0.0
      %595 = vmatprep.subr.mxu0 0.0
      %596 = vmatpush1.msra.mxu0 %v466
      %597 = vmatprep.subr.mxu0 0.0
      %598 = vmatpush1.msra.mxu0 %v465
      %599 = vmatprep.subr.mxu0 0.0
      %600 = vmatpush1.msra.mxu0 %v464
      %601 = vmatprep.subr.mxu0 0.0
      %602 = vmatpush1.msra.mxu0 %v463
      %603 = vmatprep.subr.mxu0 0.0
      %604 = vmatpush2.msra.mxu0 0.0
      %605 = vmatprep.subr.mxu0 0.0
      %606 = vmatpush2.msra.mxu0 0.0
      %607 = vmatprep.subr.mxu0 0.0
      %608 = vmatpush2.msra.mxu0 0.0
      %609 = vmatprep.subr.mxu0 0.0
      %610 = vmatpush2.msra.mxu0 0.0
      %611 = vmatprep.subr.mxu0 0.0
      %612 = vmatpush2.msra.mxu0 0.0
      %613 = vmatprep.subr.mxu0 0.0
      %614 = vmatpush2.msra.mxu0 0.0
      %615 = vmatprep.subr.mxu0 0.0
      %616 = vmatpush2.msra.mxu0 0.0
      %617 = vmatprep.subr.mxu0 0.0
      %618 = vmatpush2.msra.mxu0 0.0
      %619 = vmatprep.subr.mxu0 0.0
      %620 = vmatpush2.msra.mxu0 0.0
      %621 = vmatprep.subr.mxu0 0.0
      %622 = vmatpush2.msra.mxu0 0.0
      %623 = vmatprep.subr.mxu0 0.0
      %624 = vmatpush2.msra.mxu0 0.0
      %625 = vmatprep.subr.mxu0 0.0
      %626 = vmatpush2.msra.mxu0 0.0
      %627 = vmatprep.subr.mxu0 0.0
      %628 = vmatpush2.msra.mxu0 0.0
      %629 = vmatprep.subr.mxu0 0.0
      %630 = vmatpush2.msra.mxu0 0.0
      %631 = vmatprep.subr.mxu0 0.0
      %632 = vmatpush2.msra.mxu0 0.0
      %633 = vmatprep.subr.mxu0 0.0
      %634 = vmatpush2.msra.mxu0 0.0
      %635 = vmatprep.mubr.f32.mxu0 0.0
      %636 = vmatmul.mubr.f32.gmra.mxu0 %v476
      %v637 = vpop.f32.mrf.mxu0
      %v638 = vadd.f32 %v472, %v637
      %v639 = vpop.f32.mrf.mxu0
      %640 = vmatprep.mubr.f32.mxu0 0.0
      %641 = vmatmul.mubr.f32.gmra.mxu0 %v479
      %v642 = vpop.f32.mrf.mxu0
      %v643 = vadd.f32 %v472, %v642
      %v644 = vpop.f32.mrf.mxu0
      %645 = vmatprep.mubr.f32.mxu0 0.0
      %646 = vmatmul.mubr.f32.gmra.mxu0 %v482
      %v647 = vpop.f32.mrf.mxu0
      %v648 = vadd.f32 %v472, %v647
      %v649 = vpop.f32.mrf.mxu0
      %650 = vmatprep.mubr.f32.mxu0 0.0
      %651 = vmatmul.mubr.f32.gmra.mxu0 %v485
      %v652 = vpop.f32.mrf.mxu0
      %v653 = vadd.f32 %v472, %v652
      %v654 = vpop.f32.mrf.mxu0
      %655 = vmatprep.mubr.f32.mxu0 0.0
      %656 = vmatmul.mubr.f32.gmra.mxu0 %v488
      %v657 = vpop.f32.mrf.mxu0
      %v658 = vadd.f32 %v472, %v657
      %v659 = vpop.f32.mrf.mxu0
      %660 = vmatprep.mubr.f32.mxu0 0.0
      %661 = vmatmul.mubr.f32.gmra.mxu0 %v491
      %v662 = vpop.f32.mrf.mxu0
      %v663 = vadd.f32 %v472, %v662
      %v664 = vpop.f32.mrf.mxu0
      %665 = vmatprep.mubr.f32.mxu0 0.0
      %666 = vmatmul.mubr.f32.gmra.mxu0 %v494
      %v667 = vpop.f32.mrf.mxu0
      %v668 = vadd.f32 %v472, %v667
      %v669 = vpop.f32.mrf.mxu0
      %670 = vmatprep.mubr.f32.mxu0 0.0
      %671 = vmatmul.mubr.f32.gmra.mxu0 %v497
      %v672 = vpop.f32.mrf.mxu0
      %v673 = vadd.f32 %v472, %v672
      %v674 = vpop.f32.mrf.mxu0
      %675 = vmatprep.mubr.f32.mxu0 0.0
      %676 = vmatmul.mubr.f32.gmra.mxu0 %v500
      %v677 = vpop.f32.mrf.mxu0
      %v678 = vadd.f32 %v472, %v677
      %v679 = vpop.f32.mrf.mxu0
      %680 = vmatprep.mubr.f32.mxu0 0.0
      %681 = vmatmul.mubr.f32.gmra.mxu0 %v503
      %v682 = vpop.f32.mrf.mxu0
      %v683 = vadd.f32 %v472, %v682
      %v684 = vpop.f32.mrf.mxu0
      %685 = vmatprep.mubr.f32.mxu0 0.0
      %686 = vmatmul.mubr.f32.gmra.mxu0 %v506
      %v687 = vpop.f32.mrf.mxu0
      %v688 = vadd.f32 %v472, %v687
      %v689 = vpop.f32.mrf.mxu0
      %690 = vmatprep.mubr.f32.mxu0 0.0
      %691 = vmatmul.mubr.f32.gmra.mxu0 %v509
      %v692 = vpop.f32.mrf.mxu0
      %v693 = vadd.f32 %v472, %v692
      %v694 = vpop.f32.mrf.mxu0
      %695 = vmatprep.mubr.f32.mxu0 0.0
      %696 = vmatmul.mubr.f32.gmra.mxu0 %v512
      %v697 = vpop.f32.mrf.mxu0
      %v698 = vadd.f32 %v472, %v697
      %v699 = vpop.f32.mrf.mxu0
      %700 = vmatprep.mubr.f32.mxu0 0.0
      %701 = vmatmul.mubr.f32.gmra.mxu0 %v515
      %v702 = vpop.f32.mrf.mxu0
      %v703 = vadd.f32 %v472, %v702
      %v704 = vpop.f32.mrf.mxu0
      %705 = vmatprep.mubr.f32.mxu0 0.0
      %706 = vmatmul.mubr.f32.gmra.mxu0 %v518
      %v707 = vpop.f32.mrf.mxu0
      %v708 = vadd.f32 %v472, %v707
      %v709 = vpop.f32.mrf.mxu0
      %710 = vmatprep.mubr.f32.mxu0 0.0
      %711 = vmatmul.mubr.f32.gmra.mxu0 %v521
      %v712 = vpop.f32.mrf.mxu0
      %v713 = vadd.f32 %v472, %v712
      %v714 = vpop.f32.mrf.mxu0
      %715 = vmatprep.mubr.f32.mxu0 0.0
      %716 = vmatmul.mubr.f32.gmra.mxu0 %v524
      %v717 = vpop.f32.mrf.mxu0
      %v718 = vadd.f32 %v472, %v717
      %v719 = vpop.f32.mrf.mxu0
      %720 = vmatprep.mubr.f32.mxu0 0.0
      %721 = vmatmul.mubr.f32.gmra.mxu0 %v527
      %v722 = vpop.f32.mrf.mxu0
      %v723 = vadd.f32 %v472, %v722
      %v724 = vpop.f32.mrf.mxu0
      %725 = vmatprep.mubr.f32.mxu0 0.0
      %726 = vmatmul.mubr.f32.gmra.mxu0 %v530
      %v727 = vpop.f32.mrf.mxu0
      %v728 = vadd.f32 %v472, %v727
      %v729 = vpop.f32.mrf.mxu0
      %730 = vmatprep.mubr.f32.mxu0 0.0
      %731 = vmatmul.mubr.f32.gmra.mxu0 %v533
      %v732 = vpop.f32.mrf.mxu0
      %v733 = vadd.f32 %v472, %v732
      %v734 = vpop.f32.mrf.mxu0
      %735 = vmatprep.mubr.f32.mxu0 0.0
      %736 = vmatmul.mubr.f32.gmra.mxu0 %v536
      %v737 = vpop.f32.mrf.mxu0
      %v738 = vadd.f32 %v472, %v737
      %v739 = vpop.f32.mrf.mxu0
      %740 = vmatprep.mubr.f32.mxu0 0.0
      %741 = vmatmul.mubr.f32.gmra.mxu0 %v539
      %v742 = vpop.f32.mrf.mxu0
      %v743 = vadd.f32 %v472, %v742
      %v744 = vpop.f32.mrf.mxu0
      %745 = vmatprep.mubr.f32.mxu0 0.0
      %746 = vmatmul.mubr.f32.gmra.mxu0 %v542
      %v747 = vpop.f32.mrf.mxu0
      %v748 = vadd.f32 %v472, %v747
      %v749 = vpop.f32.mrf.mxu0
      %750 = vmatprep.mubr.f32.mxu0 0.0
      %751 = vmatmul.mubr.f32.gmra.mxu0 %v545
      %v752 = vpop.f32.mrf.mxu0
      %v753 = vadd.f32 %v472, %v752
      %v754 = vpop.f32.mrf.mxu0
      %755 = vmatprep.mubr.f32.mxu0 0.0
      %756 = vmatmul.mubr.f32.gmra.mxu0 %v548
      %v757 = vpop.f32.mrf.mxu0
      %v758 = vadd.f32 %v472, %v757
      %v759 = vpop.f32.mrf.mxu0
      %760 = vmatprep.mubr.f32.mxu0 0.0
      %761 = vmatmul.mubr.f32.gmra.mxu0 %v551
      %v762 = vpop.f32.mrf.mxu0
      %v763 = vadd.f32 %v472, %v762
      %v764 = vpop.f32.mrf.mxu0
      %765 = vmatprep.mubr.f32.mxu0 0.0
      %766 = vmatmul.mubr.f32.gmra.mxu0 %v554
      %v767 = vpop.f32.mrf.mxu0
      %v768 = vadd.f32 %v472, %v767
      %v769 = vpop.f32.mrf.mxu0
      %770 = vmatprep.mubr.f32.mxu0 0.0
      %771 = vmatmul.mubr.f32.gmra.mxu0 %v557
      %v772 = vpop.f32.mrf.mxu0
      %v773 = vadd.f32 %v472, %v772
      %v774 = vpop.f32.mrf.mxu0
      %775 = vmatprep.mubr.f32.mxu0 0.0
      %776 = vmatmul.mubr.f32.gmra.mxu0 %v560
      %v777 = vpop.f32.mrf.mxu0
      %v778 = vadd.f32 %v472, %v777
      %v779 = vpop.f32.mrf.mxu0
      %780 = vmatprep.mubr.f32.mxu0 0.0
      %781 = vmatmul.mubr.f32.gmra.mxu0 %v563
      %v782 = vpop.f32.mrf.mxu0
      %v783 = vadd.f32 %v472, %v782
      %v784 = vpop.f32.mrf.mxu0
      %785 = vmatprep.mubr.f32.mxu0 0.0
      %786 = vmatmul.mubr.f32.gmra.mxu0 %v566
      %v787 = vpop.f32.mrf.mxu0
      %v788 = vadd.f32 %v472, %v787
      %v789 = vpop.f32.mrf.mxu0
      %790 = vmatprep.mubr.f32.mxu0 0.0
      %791 = vmatmul.mubr.f32.gmra.mxu0 %v569
      %v792 = vpop.f32.mrf.mxu0
      %v793 = vadd.f32 %v472, %v792
      %v794 = vpop.f32.mrf.mxu0
      %795 = vdwg.mxu0
      %v796 = vmax.f32 %v638, 0.0
      %v797 = vmax.f32 %v643, 0.0
      %v798 = vmax.f32 %v648, 0.0
      %v799 = vmax.f32 %v653, 0.0
      %v800 = vmax.f32 %v658, 0.0
      %v801 = vmax.f32 %v663, 0.0
      %v802 = vmax.f32 %v668, 0.0
      %v803 = vmax.f32 %v673, 0.0
      %v804 = vmax.f32 %v678, 0.0
      %v805 = vmax.f32 %v683, 0.0
      %v806 = vmax.f32 %v688, 0.0
      %v807 = vmax.f32 %v693, 0.0
      %v808 = vmax.f32 %v698, 0.0
      %v809 = vmax.f32 %v703, 0.0
      %v810 = vmax.f32 %v708, 0.0
      %v811 = vmax.f32 %v713, 0.0
      %v812 = vmax.f32 %v718, 0.0
      %v813 = vmax.f32 %v723, 0.0
      %v814 = vmax.f32 %v728, 0.0
      %v815 = vmax.f32 %v733, 0.0
      %v816 = vmax.f32 %v738, 0.0
      %v817 = vmax.f32 %v743, 0.0
      %v818 = vmax.f32 %v748, 0.0
      %v819 = vmax.f32 %v753, 0.0
      %v820 = vmax.f32 %v758, 0.0
      %v821 = vmax.f32 %v763, 0.0
      %v822 = vmax.f32 %v768, 0.0
      %v823 = vmax.f32 %v773, 0.0
      %v824 = vmax.f32 %v778, 0.0
      %v825 = vmax.f32 %v783, 0.0
      %v826 = vmax.f32 %v788, 0.0
      %v827 = vmax.f32 %v793, 0.0
      %v828 = vld [vmem:[%s3] sm:$0xff]
      %v829 = vld [vmem:[%s3 + $0x8] sm:$0xff]
      %v830 = vld [vmem:[%s3 + $0x10] sm:$0xff]
      %v831 = vld [vmem:[%s3 + $0x18] sm:$0xff]
      %v832 = vld [vmem:[%s3 + $0x20] sm:$0xff]
      %v833 = vld [vmem:[%s3 + $0x28] sm:$0xff]
      %v834 = vld [vmem:[%s3 + $0x30] sm:$0xff]
      %v835 = vld [vmem:[%s3 + $0x38] sm:$0xff]
      %v836 = vld [vmem:[%s3 + $0x40] sm:$0xff]
      %v837 = vld [vmem:[%s3 + $0x48] sm:$0xff]
      %v838 = vld [vmem:[%s3 + $0x50] sm:$0xff]
      %v839 = vld [vmem:[%s3 + $0x58] sm:$0xff]
      %v840 = vld [vmem:[%s3 + $0x60] sm:$0xff]
      %v841 = vld [vmem:[%s3 + $0x68] sm:$0xff]
      %v842 = vld [vmem:[%s3 + $0x70] sm:$0xff]
      %v843 = vld [vmem:[%s3 + $0x78] sm:$0xff]
      %v844 = vld [vmem:[%s4] sm:$0x1]
      %v846 = vlaneseq
      %v847 = vshrl.u32 %v846, 7
      %v848 = vsub.s32 0, %v847
      %v849 = vrot.slane %v844, %v848
      %851 = vmatprep.subr.mxu0 0.0
      %852 = vmatpush1.msra.mxu0 %v843
      %853 = vmatprep.subr.mxu0 0.0
      %854 = vmatpush1.msra.mxu0 %v842
      %855 = vmatprep.subr.mxu0 0.0
      %856 = vmatpush1.msra.mxu0 %v841
      %857 = vmatprep.subr.mxu0 0.0
      %858 = vmatpush1.msra.mxu0 %v840
      %859 = vmatprep.subr.mxu0 0.0
      %860 = vmatpush1.msra.mxu0 %v839
      %861 = vmatprep.subr.mxu0 0.0
      %862 = vmatpush1.msra.mxu0 %v838
      %863 = vmatprep.subr.mxu0 0.0
      %864 = vmatpush1.msra.mxu0 %v837
      %865 = vmatprep.subr.mxu0 0.0
      %866 = vmatpush1.msra.mxu0 %v836
      %867 = vmatprep.subr.mxu0 0.0
      %868 = vmatpush1.msra.mxu0 %v835
      %869 = vmatprep.subr.mxu0 0.0
      %870 = vmatpush1.msra.mxu0 %v834
      %871 = vmatprep.subr.mxu0 0.0
      %872 = vmatpush1.msra.mxu0 %v833
      %873 = vmatprep.subr.mxu0 0.0
      %874 = vmatpush1.msra.mxu0 %v832
      %875 = vmatprep.subr.mxu0 0.0
      %876 = vmatpush1.msra.mxu0 %v831
      %877 = vmatprep.subr.mxu0 0.0
      %878 = vmatpush1.msra.mxu0 %v830
      %879 = vmatprep.subr.mxu0 0.0
      %880 = vmatpush1.msra.mxu0 %v829
      %881 = vmatprep.subr.mxu0 0.0
      %882 = vmatpush1.msra.mxu0 %v828
      %883 = vmatprep.subr.mxu0 0.0
      %884 = vmatpush2.msra.mxu0 0.0
      %885 = vmatprep.subr.mxu0 0.0
      %886 = vmatpush2.msra.mxu0 0.0
      %887 = vmatprep.subr.mxu0 0.0
      %888 = vmatpush2.msra.mxu0 0.0
      %889 = vmatprep.subr.mxu0 0.0
      %890 = vmatpush2.msra.mxu0 0.0
      %891 = vmatprep.subr.mxu0 0.0
      %892 = vmatpush2.msra.mxu0 0.0
      %893 = vmatprep.subr.mxu0 0.0
      %894 = vmatpush2.msra.mxu0 0.0
      %895 = vmatprep.subr.mxu0 0.0
      %896 = vmatpush2.msra.mxu0 0.0
      %897 = vmatprep.subr.mxu0 0.0
      %898 = vmatpush2.msra.mxu0 0.0
      %899 = vmatprep.subr.mxu0 0.0
      %900 = vmatpush2.msra.mxu0 0.0
      %901 = vmatprep.subr.mxu0 0.0
      %902 = vmatpush2.msra.mxu0 0.0
      %903 = vmatprep.subr.mxu0 0.0
      %904 = vmatpush2.msra.mxu0 0.0
      %905 = vmatprep.subr.mxu0 0.0
      %906 = vmatpush2.msra.mxu0 0.0
      %907 = vmatprep.subr.mxu0 0.0
      %908 = vmatpush2.msra.mxu0 0.0
      %909 = vmatprep.subr.mxu0 0.0
      %910 = vmatpush2.msra.mxu0 0.0
      %911 = vmatprep.subr.mxu0 0.0
      %912 = vmatpush2.msra.mxu0 0.0
      %913 = vmatprep.subr.mxu0 0.0
      %914 = vmatpush2.msra.mxu0 0.0
      %915 = vmatprep.mubr.f32.mxu0 0.0
      %916 = vmatmul.mubr.f32.gmra.mxu0 %v796
      %v917 = vpop.f32.mrf.mxu0
      %v918 = vadd.f32 %v849, %v917
      %v919 = vpop.f32.mrf.mxu0
      %920 = vmatprep.mubr.f32.mxu0 0.0
      %921 = vmatmul.mubr.f32.gmra.mxu0 %v797
      %v922 = vpop.f32.mrf.mxu0
      %v923 = vadd.f32 %v849, %v922
      %v924 = vpop.f32.mrf.mxu0
      %925 = vmatprep.mubr.f32.mxu0 0.0
      %926 = vmatmul.mubr.f32.gmra.mxu0 %v798
      %v927 = vpop.f32.mrf.mxu0
      %v928 = vadd.f32 %v849, %v927
      %v929 = vpop.f32.mrf.mxu0
      %930 = vmatprep.mubr.f32.mxu0 0.0
      %931 = vmatmul.mubr.f32.gmra.mxu0 %v799
      %v932 = vpop.f32.mrf.mxu0
      %v933 = vadd.f32 %v849, %v932
      %v934 = vpop.f32.mrf.mxu0
      %935 = vmatprep.mubr.f32.mxu0 0.0
      %936 = vmatmul.mubr.f32.gmra.mxu0 %v800
      %v937 = vpop.f32.mrf.mxu0
      %v938 = vadd.f32 %v849, %v937
      %v939 = vpop.f32.mrf.mxu0
      %940 = vmatprep.mubr.f32.mxu0 0.0
      %941 = vmatmul.mubr.f32.gmra.mxu0 %v801
      %v942 = vpop.f32.mrf.mxu0
      %v943 = vadd.f32 %v849, %v942
      %v944 = vpop.f32.mrf.mxu0
      %945 = vmatprep.mubr.f32.mxu0 0.0
      %946 = vmatmul.mubr.f32.gmra.mxu0 %v802
      %v947 = vpop.f32.mrf.mxu0
      %v948 = vadd.f32 %v849, %v947
      %v949 = vpop.f32.mrf.mxu0
      %950 = vmatprep.mubr.f32.mxu0 0.0
      %951 = vmatmul.mubr.f32.gmra.mxu0 %v803
      %v952 = vpop.f32.mrf.mxu0
      %v953 = vadd.f32 %v849, %v952
      %v954 = vpop.f32.mrf.mxu0
      %955 = vmatprep.mubr.f32.mxu0 0.0
      %956 = vmatmul.mubr.f32.gmra.mxu0 %v804
      %v957 = vpop.f32.mrf.mxu0
      %v958 = vadd.f32 %v849, %v957
      %v959 = vpop.f32.mrf.mxu0
      %960 = vmatprep.mubr.f32.mxu0 0.0
      %961 = vmatmul.mubr.f32.gmra.mxu0 %v805
      %v962 = vpop.f32.mrf.mxu0
      %v963 = vadd.f32 %v849, %v962
      %v964 = vpop.f32.mrf.mxu0
      %965 = vmatprep.mubr.f32.mxu0 0.0
      %966 = vmatmul.mubr.f32.gmra.mxu0 %v806
      %v967 = vpop.f32.mrf.mxu0
      %v968 = vadd.f32 %v849, %v967
      %v969 = vpop.f32.mrf.mxu0
      %970 = vmatprep.mubr.f32.mxu0 0.0
      %971 = vmatmul.mubr.f32.gmra.mxu0 %v807
      %v972 = vpop.f32.mrf.mxu0
      %v973 = vadd.f32 %v849, %v972
      %v974 = vpop.f32.mrf.mxu0
      %975 = vmatprep.mubr.f32.mxu0 0.0
      %976 = vmatmul.mubr.f32.gmra.mxu0 %v808
      %v977 = vpop.f32.mrf.mxu0
      %v978 = vadd.f32 %v849, %v977
      %v979 = vpop.f32.mrf.mxu0
      %980 = vmatprep.mubr.f32.mxu0 0.0
      %981 = vmatmul.mubr.f32.gmra.mxu0 %v809
      %v982 = vpop.f32.mrf.mxu0
      %v983 = vadd.f32 %v849, %v982
      %v984 = vpop.f32.mrf.mxu0
      %985 = vmatprep.mubr.f32.mxu0 0.0
      %986 = vmatmul.mubr.f32.gmra.mxu0 %v810
      %v987 = vpop.f32.mrf.mxu0
      %v988 = vadd.f32 %v849, %v987
      %v989 = vpop.f32.mrf.mxu0
      %990 = vmatprep.mubr.f32.mxu0 0.0
      %991 = vmatmul.mubr.f32.gmra.mxu0 %v811
      %v992 = vpop.f32.mrf.mxu0
      %v993 = vadd.f32 %v849, %v992
      %v994 = vpop.f32.mrf.mxu0
      %995 = vmatprep.mubr.f32.mxu0 0.0
      %996 = vmatmul.mubr.f32.gmra.mxu0 %v812
      %v997 = vpop.f32.mrf.mxu0
      %v998 = vadd.f32 %v849, %v997
      %v999 = vpop.f32.mrf.mxu0
      %1000 = vmatprep.mubr.f32.mxu0 0.0
      %1001 = vmatmul.mubr.f32.gmra.mxu0 %v813
      %v1002 = vpop.f32.mrf.mxu0
      %v1003 = vadd.f32 %v849, %v1002
      %v1004 = vpop.f32.mrf.mxu0
      %1005 = vmatprep.mubr.f32.mxu0 0.0
      %1006 = vmatmul.mubr.f32.gmra.mxu0 %v814
      %v1007 = vpop.f32.mrf.mxu0
      %v1008 = vadd.f32 %v849, %v1007
      %v1009 = vpop.f32.mrf.mxu0
      %1010 = vmatprep.mubr.f32.mxu0 0.0
      %1011 = vmatmul.mubr.f32.gmra.mxu0 %v815
      %v1012 = vpop.f32.mrf.mxu0
      %v1013 = vadd.f32 %v849, %v1012
      %v1014 = vpop.f32.mrf.mxu0
      %1015 = vmatprep.mubr.f32.mxu0 0.0
      %1016 = vmatmul.mubr.f32.gmra.mxu0 %v816
      %v1017 = vpop.f32.mrf.mxu0
      %v1018 = vadd.f32 %v849, %v1017
      %v1019 = vpop.f32.mrf.mxu0
      %1020 = vmatprep.mubr.f32.mxu0 0.0
      %1021 = vmatmul.mubr.f32.gmra.mxu0 %v817
      %v1022 = vpop.f32.mrf.mxu0
      %v1023 = vadd.f32 %v849, %v1022
      %v1024 = vpop.f32.mrf.mxu0
      %1025 = vmatprep.mubr.f32.mxu0 0.0
      %1026 = vmatmul.mubr.f32.gmra.mxu0 %v818
      %v1027 = vpop.f32.mrf.mxu0
      %v1028 = vadd.f32 %v849, %v1027
      %v1029 = vpop.f32.mrf.mxu0
      %1030 = vmatprep.mubr.f32.mxu0 0.0
      %1031 = vmatmul.mubr.f32.gmra.mxu0 %v819
      %v1032 = vpop.f32.mrf.mxu0
      %v1033 = vadd.f32 %v849, %v1032
      %v1034 = vpop.f32.mrf.mxu0
      %1035 = vmatprep.mubr.f32.mxu0 0.0
      %1036 = vmatmul.mubr.f32.gmra.mxu0 %v820
      %v1037 = vpop.f32.mrf.mxu0
      %v1038 = vadd.f32 %v849, %v1037
      %v1039 = vpop.f32.mrf.mxu0
      %1040 = vmatprep.mubr.f32.mxu0 0.0
      %1041 = vmatmul.mubr.f32.gmra.mxu0 %v821
      %v1042 = vpop.f32.mrf.mxu0
      %v1043 = vadd.f32 %v849, %v1042
      %v1044 = vpop.f32.mrf.mxu0
      %1045 = vmatprep.mubr.f32.mxu0 0.0
      %1046 = vmatmul.mubr.f32.gmra.mxu0 %v822
      %v1047 = vpop.f32.mrf.mxu0
      %v1048 = vadd.f32 %v849, %v1047
      %v1049 = vpop.f32.mrf.mxu0
      %1050 = vmatprep.mubr.f32.mxu0 0.0
      %1051 = vmatmul.mubr.f32.gmra.mxu0 %v823
      %v1052 = vpop.f32.mrf.mxu0
      %v1053 = vadd.f32 %v849, %v1052
      %v1054 = vpop.f32.mrf.mxu0
      %1055 = vmatprep.mubr.f32.mxu0 0.0
      %1056 = vmatmul.mubr.f32.gmra.mxu0 %v824
      %v1057 = vpop.f32.mrf.mxu0
      %v1058 = vadd.f32 %v849, %v1057
      %v1059 = vpop.f32.mrf.mxu0
      %1060 = vmatprep.mubr.f32.mxu0 0.0
      %1061 = vmatmul.mubr.f32.gmra.mxu0 %v825
      %v1062 = vpop.f32.mrf.mxu0
      %v1063 = vadd.f32 %v849, %v1062
      %v1064 = vpop.f32.mrf.mxu0
      %1065 = vmatprep.mubr.f32.mxu0 0.0
      %1066 = vmatmul.mubr.f32.gmra.mxu0 %v826
      %v1067 = vpop.f32.mrf.mxu0
      %v1068 = vadd.f32 %v849, %v1067
      %v1069 = vpop.f32.mrf.mxu0
      %1070 = vmatprep.mubr.f32.mxu0 0.0
      %1071 = vmatmul.mubr.f32.gmra.mxu0 %v827
      %v1072 = vpop.f32.mrf.mxu0
      %v1073 = vadd.f32 %v849, %v1072
      %v1074 = vpop.f32.mrf.mxu0
      %1075 = vdwg.mxu0
      %v1076 = vlaneseq
      %v1077 = vand.u32 %v1076, 127
      %v1078 = vld [vmem:[%s5] sm:$0xff]
      %v1079 = vld [vmem:[%s5 + $0x8] sm:$0xff]
      %v1080 = vld [vmem:[%s5 + $0x10] sm:$0xff]
      %v1081 = vld [vmem:[%s5 + $0x18] sm:$0xff]
      %v1082 = vld [vmem:[%s5 + $0x20] sm:$0xff]
      %v1083 = vld [vmem:[%s5 + $0x28] sm:$0xff]
      %v1084 = vld [vmem:[%s5 + $0x30] sm:$0xff]
      %v1085 = vld [vmem:[%s5 + $0x38] sm:$0xff]
      %v1086 = vld [vmem:[%s5 + $0x40] sm:$0xff]
      %v1087 = vld [vmem:[%s5 + $0x48] sm:$0xff]
      %v1088 = vld [vmem:[%s5 + $0x50] sm:$0xff]
      %v1089 = vld [vmem:[%s5 + $0x58] sm:$0xff]
      %v1090 = vld [vmem:[%s5 + $0x60] sm:$0xff]
      %v1091 = vld [vmem:[%s5 + $0x68] sm:$0xff]
      %v1092 = vld [vmem:[%s5 + $0x70] sm:$0xff]
      %v1093 = vld [vmem:[%s5 + $0x78] sm:$0xff]
      %v1094 = vld [vmem:[%s6] sm:$0x1]
      %1095 = vmatprep.subr.mxu0 0.0
      %1096 = vmatpush1.msra.mxu0 %v1093
      %1097 = vmatprep.subr.mxu0 0.0
      %1098 = vmatpush1.msra.mxu0 %v1092
      %1099 = vmatprep.subr.mxu0 0.0
      %1100 = vmatpush1.msra.mxu0 %v1091
      %1101 = vmatprep.subr.mxu0 0.0
      %1102 = vmatpush1.msra.mxu0 %v1090
      %1103 = vmatprep.subr.mxu0 0.0
      %1104 = vmatpush1.msra.mxu0 %v1089
      %1105 = vmatprep.subr.mxu0 0.0
      %1106 = vmatpush1.msra.mxu0 %v1088
      %1107 = vmatprep.subr.mxu0 0.0
      %1108 = vmatpush1.msra.mxu0 %v1087
      %1109 = vmatprep.subr.mxu0 0.0
      %1110 = vmatpush1.msra.mxu0 %v1086
      %1111 = vmatprep.subr.mxu0 0.0
      %1112 = vmatpush1.msra.mxu0 %v1085
      %1113 = vmatprep.subr.mxu0 0.0
      %1114 = vmatpush1.msra.mxu0 %v1084
      %1115 = vmatprep.subr.mxu0 0.0
      %1116 = vmatpush1.msra.mxu0 %v1083
      %1117 = vmatprep.subr.mxu0 0.0
      %1118 = vmatpush1.msra.mxu0 %v1082
      %1119 = vmatprep.subr.mxu0 0.0
      %1120 = vmatpush1.msra.mxu0 %v1081
      %1121 = vmatprep.subr.mxu0 0.0
      %1122 = vmatpush1.msra.mxu0 %v1080
      %1123 = vmatprep.subr.mxu0 0.0
      %1124 = vmatpush1.msra.mxu0 %v1079
      %1125 = vmatprep.subr.mxu0 0.0
      %1126 = vmatpush1.msra.mxu0 %v1078
      %1127 = vmatprep.subr.mxu0 0.0
      %1128 = vmatpush2.msra.mxu0 0.0
      %1129 = vmatprep.subr.mxu0 0.0
      %1130 = vmatpush2.msra.mxu0 0.0
      %1131 = vmatprep.subr.mxu0 0.0
      %1132 = vmatpush2.msra.mxu0 0.0
      %1133 = vmatprep.subr.mxu0 0.0
      %1134 = vmatpush2.msra.mxu0 0.0
      %1135 = vmatprep.subr.mxu0 0.0
      %1136 = vmatpush2.msra.mxu0 0.0
      %1137 = vmatprep.subr.mxu0 0.0
      %1138 = vmatpush2.msra.mxu0 0.0
      %1139 = vmatprep.subr.mxu0 0.0
      %1140 = vmatpush2.msra.mxu0 0.0
      %1141 = vmatprep.subr.mxu0 0.0
      %1142 = vmatpush2.msra.mxu0 0.0
      %1143 = vmatprep.subr.mxu0 0.0
      %1144 = vmatpush2.msra.mxu0 0.0
      %1145 = vmatprep.subr.mxu0 0.0
      %1146 = vmatpush2.msra.mxu0 0.0
      %1147 = vmatprep.subr.mxu0 0.0
      %1148 = vmatpush2.msra.mxu0 0.0
      %1149 = vmatprep.subr.mxu0 0.0
      %1150 = vmatpush2.msra.mxu0 0.0
      %1151 = vmatprep.subr.mxu0 0.0
      %1152 = vmatpush2.msra.mxu0 0.0
      %1153 = vmatprep.subr.mxu0 0.0
      %1154 = vmatpush2.msra.mxu0 0.0
      %1155 = vmatprep.subr.mxu0 0.0
      %1156 = vmatpush2.msra.mxu0 0.0
      %1157 = vmatprep.subr.mxu0 0.0
      %1158 = vmatpush2.msra.mxu0 0.0
      %1159 = vmatprep.mubr.f32.mxu0 0.0
      %1160 = vmatmul.mubr.f32.gmra.mxu0 %v918
      %v1161 = vpop.f32.mrf.mxu0
      %v1162 = vadd.f32 0.0, %v1161
      %v1163 = vpop.f32.mrf.mxu0
      %1164 = vmatprep.mubr.f32.mxu0 0.0
      %1165 = vmatmul.mubr.f32.gmra.mxu0 %v923
      %v1166 = vpop.f32.mrf.mxu0
      %v1167 = vadd.f32 0.0, %v1166
      %v1168 = vpop.f32.mrf.mxu0
      %1169 = vmatprep.mubr.f32.mxu0 0.0
      %1170 = vmatmul.mubr.f32.gmra.mxu0 %v928
      %v1171 = vpop.f32.mrf.mxu0
      %v1172 = vadd.f32 0.0, %v1171
      %v1173 = vpop.f32.mrf.mxu0
      %1174 = vmatprep.mubr.f32.mxu0 0.0
      %1175 = vmatmul.mubr.f32.gmra.mxu0 %v933
      %v1176 = vpop.f32.mrf.mxu0
      %v1177 = vadd.f32 0.0, %v1176
      %v1178 = vpop.f32.mrf.mxu0
      %1179 = vmatprep.mubr.f32.mxu0 0.0
      %1180 = vmatmul.mubr.f32.gmra.mxu0 %v938
      %v1181 = vpop.f32.mrf.mxu0
      %v1182 = vadd.f32 0.0, %v1181
      %v1183 = vpop.f32.mrf.mxu0
      %1184 = vmatprep.mubr.f32.mxu0 0.0
      %1185 = vmatmul.mubr.f32.gmra.mxu0 %v943
      %v1186 = vpop.f32.mrf.mxu0
      %v1187 = vadd.f32 0.0, %v1186
      %v1188 = vpop.f32.mrf.mxu0
      %1189 = vmatprep.mubr.f32.mxu0 0.0
      %1190 = vmatmul.mubr.f32.gmra.mxu0 %v948
      %v1191 = vpop.f32.mrf.mxu0
      %v1192 = vadd.f32 0.0, %v1191
      %v1193 = vpop.f32.mrf.mxu0
      %1194 = vmatprep.mubr.f32.mxu0 0.0
      %1195 = vmatmul.mubr.f32.gmra.mxu0 %v953
      %v1196 = vpop.f32.mrf.mxu0
      %v1197 = vadd.f32 0.0, %v1196
      %v1198 = vpop.f32.mrf.mxu0
      %1199 = vmatprep.mubr.f32.mxu0 0.0
      %1200 = vmatmul.mubr.f32.gmra.mxu0 %v958
      %v1201 = vpop.f32.mrf.mxu0
      %v1202 = vadd.f32 0.0, %v1201
      %v1203 = vpop.f32.mrf.mxu0
      %1204 = vmatprep.mubr.f32.mxu0 0.0
      %1205 = vmatmul.mubr.f32.gmra.mxu0 %v963
      %v1206 = vpop.f32.mrf.mxu0
      %v1207 = vadd.f32 0.0, %v1206
      %v1208 = vpop.f32.mrf.mxu0
      %1209 = vmatprep.mubr.f32.mxu0 0.0
      %1210 = vmatmul.mubr.f32.gmra.mxu0 %v968
      %v1211 = vpop.f32.mrf.mxu0
      %v1212 = vadd.f32 0.0, %v1211
      %v1213 = vpop.f32.mrf.mxu0
      %1214 = vmatprep.mubr.f32.mxu0 0.0
      %1215 = vmatmul.mubr.f32.gmra.mxu0 %v973
      %v1216 = vpop.f32.mrf.mxu0
      %v1217 = vadd.f32 0.0, %v1216
      %v1218 = vpop.f32.mrf.mxu0
      %1219 = vmatprep.mubr.f32.mxu0 0.0
      %1220 = vmatmul.mubr.f32.gmra.mxu0 %v978
      %v1221 = vpop.f32.mrf.mxu0
      %v1222 = vadd.f32 0.0, %v1221
      %v1223 = vpop.f32.mrf.mxu0
      %1224 = vmatprep.mubr.f32.mxu0 0.0
      %1225 = vmatmul.mubr.f32.gmra.mxu0 %v983
      %v1226 = vpop.f32.mrf.mxu0
      %v1227 = vadd.f32 0.0, %v1226
      %v1228 = vpop.f32.mrf.mxu0
      %1229 = vmatprep.mubr.f32.mxu0 0.0
      %1230 = vmatmul.mubr.f32.gmra.mxu0 %v988
      %v1231 = vpop.f32.mrf.mxu0
      %v1232 = vadd.f32 0.0, %v1231
      %v1233 = vpop.f32.mrf.mxu0
      %1234 = vmatprep.mubr.f32.mxu0 0.0
      %1235 = vmatmul.mubr.f32.gmra.mxu0 %v993
      %v1236 = vpop.f32.mrf.mxu0
      %v1237 = vadd.f32 0.0, %v1236
      %v1238 = vpop.f32.mrf.mxu0
      %1239 = vmatprep.mubr.f32.mxu0 0.0
      %1240 = vmatmul.mubr.f32.gmra.mxu0 %v998
      %v1241 = vpop.f32.mrf.mxu0
      %v1242 = vadd.f32 0.0, %v1241
      %v1243 = vpop.f32.mrf.mxu0
      %1244 = vmatprep.mubr.f32.mxu0 0.0
      %1245 = vmatmul.mubr.f32.gmra.mxu0 %v1003
      %v1246 = vpop.f32.mrf.mxu0
      %v1247 = vadd.f32 0.0, %v1246
      %v1248 = vpop.f32.mrf.mxu0
      %1249 = vmatprep.mubr.f32.mxu0 0.0
      %1250 = vmatmul.mubr.f32.gmra.mxu0 %v1008
      %v1251 = vpop.f32.mrf.mxu0
      %v1252 = vadd.f32 0.0, %v1251
      %v1253 = vpop.f32.mrf.mxu0
      %1254 = vmatprep.mubr.f32.mxu0 0.0
      %1255 = vmatmul.mubr.f32.gmra.mxu0 %v1013
      %v1256 = vpop.f32.mrf.mxu0
      %v1257 = vadd.f32 0.0, %v1256
      %v1258 = vpop.f32.mrf.mxu0
      %1259 = vmatprep.mubr.f32.mxu0 0.0
      %1260 = vmatmul.mubr.f32.gmra.mxu0 %v1018
      %v1261 = vpop.f32.mrf.mxu0
      %v1262 = vadd.f32 0.0, %v1261
      %v1263 = vpop.f32.mrf.mxu0
      %1264 = vmatprep.mubr.f32.mxu0 0.0
      %1265 = vmatmul.mubr.f32.gmra.mxu0 %v1023
      %v1266 = vpop.f32.mrf.mxu0
      %v1267 = vadd.f32 0.0, %v1266
      %v1268 = vpop.f32.mrf.mxu0
      %1269 = vmatprep.mubr.f32.mxu0 0.0
      %1270 = vmatmul.mubr.f32.gmra.mxu0 %v1028
      %v1271 = vpop.f32.mrf.mxu0
      %v1272 = vadd.f32 0.0, %v1271
      %v1273 = vpop.f32.mrf.mxu0
      %1274 = vmatprep.mubr.f32.mxu0 0.0
      %1275 = vmatmul.mubr.f32.gmra.mxu0 %v1033
      %v1276 = vpop.f32.mrf.mxu0
      %v1277 = vadd.f32 0.0, %v1276
      %v1278 = vpop.f32.mrf.mxu0
      %1279 = vmatprep.mubr.f32.mxu0 0.0
      %1280 = vmatmul.mubr.f32.gmra.mxu0 %v1038
      %v1281 = vpop.f32.mrf.mxu0
      %v1282 = vadd.f32 0.0, %v1281
      %v1283 = vpop.f32.mrf.mxu0
      %1284 = vmatprep.mubr.f32.mxu0 0.0
      %1285 = vmatmul.mubr.f32.gmra.mxu0 %v1043
      %v1286 = vpop.f32.mrf.mxu0
      %v1287 = vadd.f32 0.0, %v1286
      %v1288 = vpop.f32.mrf.mxu0
      %1289 = vmatprep.mubr.f32.mxu0 0.0
      %1290 = vmatmul.mubr.f32.gmra.mxu0 %v1048
      %v1291 = vpop.f32.mrf.mxu0
      %v1292 = vadd.f32 0.0, %v1291
      %v1293 = vpop.f32.mrf.mxu0
      %1294 = vmatprep.mubr.f32.mxu0 0.0
      %1295 = vmatmul.mubr.f32.gmra.mxu0 %v1053
      %v1296 = vpop.f32.mrf.mxu0
      %v1297 = vadd.f32 0.0, %v1296
      %v1298 = vpop.f32.mrf.mxu0
      %1299 = vmatprep.mubr.f32.mxu0 0.0
      %1300 = vmatmul.mubr.f32.gmra.mxu0 %v1058
      %v1301 = vpop.f32.mrf.mxu0
      %v1302 = vadd.f32 0.0, %v1301
      %v1303 = vpop.f32.mrf.mxu0
      %1304 = vmatprep.mubr.f32.mxu0 0.0
      %1305 = vmatmul.mubr.f32.gmra.mxu0 %v1063
      %v1306 = vpop.f32.mrf.mxu0
      %v1307 = vadd.f32 0.0, %v1306
      %v1308 = vpop.f32.mrf.mxu0
      %1309 = vmatprep.mubr.f32.mxu0 0.0
      %1310 = vmatmul.mubr.f32.gmra.mxu0 %v1068
      %v1311 = vpop.f32.mrf.mxu0
      %v1312 = vadd.f32 0.0, %v1311
      %v1313 = vpop.f32.mrf.mxu0
      %1314 = vmatprep.mubr.f32.mxu0 0.0
      %1315 = vmatmul.mubr.f32.gmra.mxu0 %v1073
      %v1316 = vpop.f32.mrf.mxu0
      %v1317 = vadd.f32 0.0, %v1316
      %v1318 = vpop.f32.mrf.mxu0
      %1319 = vdwg.mxu0
      %v1320 = vmul.f32 %v1162, 2.0
      %v1321 = vmul.f32 %v1167, 2.0
      %v1322 = vmul.f32 %v1172, 2.0
      %v1323 = vmul.f32 %v1177, 2.0
      %v1324 = vmul.f32 %v1182, 2.0
      %v1325 = vmul.f32 %v1187, 2.0
      %v1326 = vmul.f32 %v1192, 2.0
      %v1327 = vmul.f32 %v1197, 2.0
      %v1328 = vmul.f32 %v1202, 2.0
      %v1329 = vmul.f32 %v1207, 2.0
      %v1330 = vmul.f32 %v1212, 2.0
      %v1331 = vmul.f32 %v1217, 2.0
      %v1332 = vmul.f32 %v1222, 2.0
      %v1333 = vmul.f32 %v1227, 2.0
      %v1334 = vmul.f32 %v1232, 2.0
      %v1335 = vmul.f32 %v1237, 2.0
      %v1336 = vmul.f32 %v1242, 2.0
      %v1337 = vmul.f32 %v1247, 2.0
      %v1338 = vmul.f32 %v1252, 2.0
      %v1339 = vmul.f32 %v1257, 2.0
      %v1340 = vmul.f32 %v1262, 2.0
      %v1341 = vmul.f32 %v1267, 2.0
      %v1342 = vmul.f32 %v1272, 2.0
      %v1343 = vmul.f32 %v1277, 2.0
      %v1344 = vmul.f32 %v1282, 2.0
      %v1345 = vmul.f32 %v1287, 2.0
      %v1346 = vmul.f32 %v1292, 2.0
      %v1347 = vmul.f32 %v1297, 2.0
      %v1348 = vmul.f32 %v1302, 2.0
      %v1349 = vmul.f32 %v1307, 2.0
      %v1350 = vmul.f32 %v1312, 2.0
      %v1351 = vmul.f32 %v1317, 2.0
      %v1353 = vlaneseq
      %v1354 = vshrl.u32 %v1353, 7
      %v1355 = vsub.s32 0, %v1354
      %v1356 = vrot.slane %v1094, %v1355
      %v1358 = vsub.f32 %v1356, %v1320
      %v1359 = vsub.f32 %v1356, %v1321
      %v1360 = vsub.f32 %v1356, %v1322
      %v1361 = vsub.f32 %v1356, %v1323
      %v1362 = vsub.f32 %v1356, %v1324
      %v1363 = vsub.f32 %v1356, %v1325
      %v1364 = vsub.f32 %v1356, %v1326
      %v1365 = vsub.f32 %v1356, %v1327
      %v1366 = vsub.f32 %v1356, %v1328
      %v1367 = vsub.f32 %v1356, %v1329
      %v1368 = vsub.f32 %v1356, %v1330
      %v1369 = vsub.f32 %v1356, %v1331
      %v1370 = vsub.f32 %v1356, %v1332
      %v1371 = vsub.f32 %v1356, %v1333
      %v1372 = vsub.f32 %v1356, %v1334
      %v1373 = vsub.f32 %v1356, %v1335
      %v1374 = vsub.f32 %v1356, %v1336
      %v1375 = vsub.f32 %v1356, %v1337
      %v1376 = vsub.f32 %v1356, %v1338
      %v1377 = vsub.f32 %v1356, %v1339
      %v1378 = vsub.f32 %v1356, %v1340
      %v1379 = vsub.f32 %v1356, %v1341
      %v1380 = vsub.f32 %v1356, %v1342
      %v1381 = vsub.f32 %v1356, %v1343
      %v1382 = vsub.f32 %v1356, %v1344
      %v1383 = vsub.f32 %v1356, %v1345
      %v1384 = vsub.f32 %v1356, %v1346
      %v1385 = vsub.f32 %v1356, %v1347
      %v1386 = vsub.f32 %v1356, %v1348
      %v1387 = vsub.f32 %v1356, %v1349
      %v1388 = vsub.f32 %v1356, %v1350
      %v1389 = vsub.f32 %v1356, %v1351
      %1390 = vmin.xlane.f32.xlu0 %v1358
      %v1391 = vpop.xlane.xlu0 %1390
      %1392 = vmin.xlane.f32.xlu0 %v1359
      %v1393 = vpop.xlane.xlu0 %1392
      %1394 = vmin.xlane.f32.xlu0 %v1360
      %v1395 = vpop.xlane.xlu0 %1394
      %1396 = vmin.xlane.f32.xlu0 %v1361
      %v1397 = vpop.xlane.xlu0 %1396
      %1398 = vmin.xlane.f32.xlu0 %v1362
      %v1399 = vpop.xlane.xlu0 %1398
      %1400 = vmin.xlane.f32.xlu0 %v1363
      %v1401 = vpop.xlane.xlu0 %1400
      %1402 = vmin.xlane.f32.xlu0 %v1364
      %v1403 = vpop.xlane.xlu0 %1402
      %1404 = vmin.xlane.f32.xlu0 %v1365
      %v1405 = vpop.xlane.xlu0 %1404
      %1406 = vmin.xlane.f32.xlu0 %v1366
      %v1407 = vpop.xlane.xlu0 %1406
      %1408 = vmin.xlane.f32.xlu0 %v1367
      %v1409 = vpop.xlane.xlu0 %1408
      %1410 = vmin.xlane.f32.xlu0 %v1368
      %v1411 = vpop.xlane.xlu0 %1410
      %1412 = vmin.xlane.f32.xlu0 %v1369
      %v1413 = vpop.xlane.xlu0 %1412
      %1414 = vmin.xlane.f32.xlu0 %v1370
      %v1415 = vpop.xlane.xlu0 %1414
      %1416 = vmin.xlane.f32.xlu0 %v1371
      %v1417 = vpop.xlane.xlu0 %1416
      %1418 = vmin.xlane.f32.xlu0 %v1372
      %v1419 = vpop.xlane.xlu0 %1418
      %1420 = vmin.xlane.f32.xlu0 %v1373
      %v1421 = vpop.xlane.xlu0 %1420
      %1422 = vmin.xlane.f32.xlu0 %v1374
      %v1423 = vpop.xlane.xlu0 %1422
      %1424 = vmin.xlane.f32.xlu0 %v1375
      %v1425 = vpop.xlane.xlu0 %1424
      %1426 = vmin.xlane.f32.xlu0 %v1376
      %v1427 = vpop.xlane.xlu0 %1426
      %1428 = vmin.xlane.f32.xlu0 %v1377
      %v1429 = vpop.xlane.xlu0 %1428
      %1430 = vmin.xlane.f32.xlu0 %v1378
      %v1431 = vpop.xlane.xlu0 %1430
      %1432 = vmin.xlane.f32.xlu0 %v1379
      %v1433 = vpop.xlane.xlu0 %1432
      %1434 = vmin.xlane.f32.xlu0 %v1380
      %v1435 = vpop.xlane.xlu0 %1434
      %1436 = vmin.xlane.f32.xlu0 %v1381
      %v1437 = vpop.xlane.xlu0 %1436
      %1438 = vmin.xlane.f32.xlu0 %v1382
      %v1439 = vpop.xlane.xlu0 %1438
      %1440 = vmin.xlane.f32.xlu0 %v1383
      %v1441 = vpop.xlane.xlu0 %1440
      %1442 = vmin.xlane.f32.xlu0 %v1384
      %v1443 = vpop.xlane.xlu0 %1442
      %1444 = vmin.xlane.f32.xlu0 %v1385
      %v1445 = vpop.xlane.xlu0 %1444
      %1446 = vmin.xlane.f32.xlu0 %v1386
      %v1447 = vpop.xlane.xlu0 %1446
      %1448 = vmin.xlane.f32.xlu0 %v1387
      %v1449 = vpop.xlane.xlu0 %1448
      %1450 = vmin.xlane.f32.xlu0 %v1388
      %v1451 = vpop.xlane.xlu0 %1450
      %1452 = vmin.xlane.f32.xlu0 %v1389
      %v1453 = vpop.xlane.xlu0 %1452
      %vm1454 = vcmp.eq.f32.partialorder %v1358, %v1391
      %vm1455 = vcmp.eq.f32.partialorder %v1359, %v1393
      %vm1456 = vcmp.eq.f32.partialorder %v1360, %v1395
      %vm1457 = vcmp.eq.f32.partialorder %v1361, %v1397
      %vm1458 = vcmp.eq.f32.partialorder %v1362, %v1399
      %vm1459 = vcmp.eq.f32.partialorder %v1363, %v1401
      %vm1460 = vcmp.eq.f32.partialorder %v1364, %v1403
      %vm1461 = vcmp.eq.f32.partialorder %v1365, %v1405
      %vm1462 = vcmp.eq.f32.partialorder %v1366, %v1407
      %vm1463 = vcmp.eq.f32.partialorder %v1367, %v1409
      %vm1464 = vcmp.eq.f32.partialorder %v1368, %v1411
      %vm1465 = vcmp.eq.f32.partialorder %v1369, %v1413
      %vm1466 = vcmp.eq.f32.partialorder %v1370, %v1415
      %vm1467 = vcmp.eq.f32.partialorder %v1371, %v1417
      %vm1468 = vcmp.eq.f32.partialorder %v1372, %v1419
      %vm1469 = vcmp.eq.f32.partialorder %v1373, %v1421
      %vm1470 = vcmp.eq.f32.partialorder %v1374, %v1423
      %vm1471 = vcmp.eq.f32.partialorder %v1375, %v1425
      %vm1472 = vcmp.eq.f32.partialorder %v1376, %v1427
      %vm1473 = vcmp.eq.f32.partialorder %v1377, %v1429
      %vm1474 = vcmp.eq.f32.partialorder %v1378, %v1431
      %vm1475 = vcmp.eq.f32.partialorder %v1379, %v1433
      %vm1476 = vcmp.eq.f32.partialorder %v1380, %v1435
      %vm1477 = vcmp.eq.f32.partialorder %v1381, %v1437
      %vm1478 = vcmp.eq.f32.partialorder %v1382, %v1439
      %vm1479 = vcmp.eq.f32.partialorder %v1383, %v1441
      %vm1480 = vcmp.eq.f32.partialorder %v1384, %v1443
      %vm1481 = vcmp.eq.f32.partialorder %v1385, %v1445
      %vm1482 = vcmp.eq.f32.partialorder %v1386, %v1447
      %vm1483 = vcmp.eq.f32.partialorder %v1387, %v1449
      %vm1484 = vcmp.eq.f32.partialorder %v1388, %v1451
      %vm1485 = vcmp.eq.f32.partialorder %v1389, %v1453
      %v1486 = vsel %vm1454, %v1077, 128
      %v1487 = vsel %vm1455, %v1077, 128
      %v1488 = vsel %vm1456, %v1077, 128
      %v1489 = vsel %vm1457, %v1077, 128
      %v1490 = vsel %vm1458, %v1077, 128
      %v1491 = vsel %vm1459, %v1077, 128
      %v1492 = vsel %vm1460, %v1077, 128
      %v1493 = vsel %vm1461, %v1077, 128
      %v1494 = vsel %vm1462, %v1077, 128
      %v1495 = vsel %vm1463, %v1077, 128
      %v1496 = vsel %vm1464, %v1077, 128
      %v1497 = vsel %vm1465, %v1077, 128
      %v1498 = vsel %vm1466, %v1077, 128
      %v1499 = vsel %vm1467, %v1077, 128
      %v1500 = vsel %vm1468, %v1077, 128
      %v1501 = vsel %vm1469, %v1077, 128
      %v1502 = vsel %vm1470, %v1077, 128
      %v1503 = vsel %vm1471, %v1077, 128
      %v1504 = vsel %vm1472, %v1077, 128
      %v1505 = vsel %vm1473, %v1077, 128
      %v1506 = vsel %vm1474, %v1077, 128
      %v1507 = vsel %vm1475, %v1077, 128
      %v1508 = vsel %vm1476, %v1077, 128
      %v1509 = vsel %vm1477, %v1077, 128
      %v1510 = vsel %vm1478, %v1077, 128
      %v1511 = vsel %vm1479, %v1077, 128
      %v1512 = vsel %vm1480, %v1077, 128
      %v1513 = vsel %vm1481, %v1077, 128
      %v1514 = vsel %vm1482, %v1077, 128
      %v1515 = vsel %vm1483, %v1077, 128
      %v1516 = vsel %vm1484, %v1077, 128
      %v1517 = vsel %vm1485, %v1077, 128
      %v1518 = vand.u32 %v1486, 65535
      %v1519 = vshra.s32 %v1486, 16
      %v1520 = vcvt.s32.f32 %v1518
      %v1521 = vcvt.s32.f32 %v1519
      %1522 = vmin.xlane.f32.xlu0 %v1521
      %v1523 = vpop.xlane.xlu0 %1522
      %vm1524 = vcmp.eq.f32.partialorder %v1521, %v1523
      %v1525 = vsel %vm1524, %v1520, inf
      %1526 = vmin.xlane.f32.xlu0 %v1525
      %v1527 = vpop.xlane.xlu0 %1526
      %v1528 = vcvt.f32.s32 %v1527
      %v1529 = vcvt.f32.s32 %v1523
      %v1530 = vshll.u32 %v1529, 16
      %v1531 = vadd.s32 %v1530, %v1528
      %v1532 = vand.u32 %v1487, 65535
      %v1533 = vshra.s32 %v1487, 16
      %v1534 = vcvt.s32.f32 %v1532
      %v1535 = vcvt.s32.f32 %v1533
      %1536 = vmin.xlane.f32.xlu0 %v1535
      %v1537 = vpop.xlane.xlu0 %1536
      %vm1538 = vcmp.eq.f32.partialorder %v1535, %v1537
      %v1539 = vsel %vm1538, %v1534, inf
      %1540 = vmin.xlane.f32.xlu0 %v1539
      %v1541 = vpop.xlane.xlu0 %1540
      %v1542 = vcvt.f32.s32 %v1541
      %v1543 = vcvt.f32.s32 %v1537
      %v1544 = vshll.u32 %v1543, 16
      %v1545 = vadd.s32 %v1544, %v1542
      %v1546 = vand.u32 %v1488, 65535
      %v1547 = vshra.s32 %v1488, 16
      %v1548 = vcvt.s32.f32 %v1546
      %v1549 = vcvt.s32.f32 %v1547
      %1550 = vmin.xlane.f32.xlu0 %v1549
      %v1551 = vpop.xlane.xlu0 %1550
      %vm1552 = vcmp.eq.f32.partialorder %v1549, %v1551
      %v1553 = vsel %vm1552, %v1548, inf
      %1554 = vmin.xlane.f32.xlu0 %v1553
      %v1555 = vpop.xlane.xlu0 %1554
      %v1556 = vcvt.f32.s32 %v1555
      %v1557 = vcvt.f32.s32 %v1551
      %v1558 = vshll.u32 %v1557, 16
      %v1559 = vadd.s32 %v1558, %v1556
      %v1560 = vand.u32 %v1489, 65535
      %v1561 = vshra.s32 %v1489, 16
      %v1562 = vcvt.s32.f32 %v1560
      %v1563 = vcvt.s32.f32 %v1561
      %1564 = vmin.xlane.f32.xlu0 %v1563
      %v1565 = vpop.xlane.xlu0 %1564
      %vm1566 = vcmp.eq.f32.partialorder %v1563, %v1565
      %v1567 = vsel %vm1566, %v1562, inf
      %1568 = vmin.xlane.f32.xlu0 %v1567
      %v1569 = vpop.xlane.xlu0 %1568
      %v1570 = vcvt.f32.s32 %v1569
      %v1571 = vcvt.f32.s32 %v1565
      %v1572 = vshll.u32 %v1571, 16
      %v1573 = vadd.s32 %v1572, %v1570
      %v1574 = vand.u32 %v1490, 65535
      %v1575 = vshra.s32 %v1490, 16
      %v1576 = vcvt.s32.f32 %v1574
      %v1577 = vcvt.s32.f32 %v1575
      %1578 = vmin.xlane.f32.xlu0 %v1577
      %v1579 = vpop.xlane.xlu0 %1578
      %vm1580 = vcmp.eq.f32.partialorder %v1577, %v1579
      %v1581 = vsel %vm1580, %v1576, inf
      %1582 = vmin.xlane.f32.xlu0 %v1581
      %v1583 = vpop.xlane.xlu0 %1582
      %v1584 = vcvt.f32.s32 %v1583
      %v1585 = vcvt.f32.s32 %v1579
      %v1586 = vshll.u32 %v1585, 16
      %v1587 = vadd.s32 %v1586, %v1584
      %v1588 = vand.u32 %v1491, 65535
      %v1589 = vshra.s32 %v1491, 16
      %v1590 = vcvt.s32.f32 %v1588
      %v1591 = vcvt.s32.f32 %v1589
      %1592 = vmin.xlane.f32.xlu0 %v1591
      %v1593 = vpop.xlane.xlu0 %1592
      %vm1594 = vcmp.eq.f32.partialorder %v1591, %v1593
      %v1595 = vsel %vm1594, %v1590, inf
      %1596 = vmin.xlane.f32.xlu0 %v1595
      %v1597 = vpop.xlane.xlu0 %1596
      %v1598 = vcvt.f32.s32 %v1597
      %v1599 = vcvt.f32.s32 %v1593
      %v1600 = vshll.u32 %v1599, 16
      %v1601 = vadd.s32 %v1600, %v1598
      %v1602 = vand.u32 %v1492, 65535
      %v1603 = vshra.s32 %v1492, 16
      %v1604 = vcvt.s32.f32 %v1602
      %v1605 = vcvt.s32.f32 %v1603
      %1606 = vmin.xlane.f32.xlu0 %v1605
      %v1607 = vpop.xlane.xlu0 %1606
      %vm1608 = vcmp.eq.f32.partialorder %v1605, %v1607
      %v1609 = vsel %vm1608, %v1604, inf
      %1610 = vmin.xlane.f32.xlu0 %v1609
      %v1611 = vpop.xlane.xlu0 %1610
      %v1612 = vcvt.f32.s32 %v1611
      %v1613 = vcvt.f32.s32 %v1607
      %v1614 = vshll.u32 %v1613, 16
      %v1615 = vadd.s32 %v1614, %v1612
      %v1616 = vand.u32 %v1493, 65535
      %v1617 = vshra.s32 %v1493, 16
      %v1618 = vcvt.s32.f32 %v1616
      %v1619 = vcvt.s32.f32 %v1617
      %1620 = vmin.xlane.f32.xlu0 %v1619
      %v1621 = vpop.xlane.xlu0 %1620
      %vm1622 = vcmp.eq.f32.partialorder %v1619, %v1621
      %v1623 = vsel %vm1622, %v1618, inf
      %1624 = vmin.xlane.f32.xlu0 %v1623
      %v1625 = vpop.xlane.xlu0 %1624
      %v1626 = vcvt.f32.s32 %v1625
      %v1627 = vcvt.f32.s32 %v1621
      %v1628 = vshll.u32 %v1627, 16
      %v1629 = vadd.s32 %v1628, %v1626
      %v1630 = vand.u32 %v1494, 65535
      %v1631 = vshra.s32 %v1494, 16
      %v1632 = vcvt.s32.f32 %v1630
      %v1633 = vcvt.s32.f32 %v1631
      %1634 = vmin.xlane.f32.xlu0 %v1633
      %v1635 = vpop.xlane.xlu0 %1634
      %vm1636 = vcmp.eq.f32.partialorder %v1633, %v1635
      %v1637 = vsel %vm1636, %v1632, inf
      %1638 = vmin.xlane.f32.xlu0 %v1637
      %v1639 = vpop.xlane.xlu0 %1638
      %v1640 = vcvt.f32.s32 %v1639
      %v1641 = vcvt.f32.s32 %v1635
      %v1642 = vshll.u32 %v1641, 16
      %v1643 = vadd.s32 %v1642, %v1640
      %v1644 = vand.u32 %v1495, 65535
      %v1645 = vshra.s32 %v1495, 16
      %v1646 = vcvt.s32.f32 %v1644
      %v1647 = vcvt.s32.f32 %v1645
      %1648 = vmin.xlane.f32.xlu0 %v1647
      %v1649 = vpop.xlane.xlu0 %1648
      %vm1650 = vcmp.eq.f32.partialorder %v1647, %v1649
      %v1651 = vsel %vm1650, %v1646, inf
      %1652 = vmin.xlane.f32.xlu0 %v1651
      %v1653 = vpop.xlane.xlu0 %1652
      %v1654 = vcvt.f32.s32 %v1653
      %v1655 = vcvt.f32.s32 %v1649
      %v1656 = vshll.u32 %v1655, 16
      %v1657 = vadd.s32 %v1656, %v1654
      %v1658 = vand.u32 %v1496, 65535
      %v1659 = vshra.s32 %v1496, 16
      %v1660 = vcvt.s32.f32 %v1658
      %v1661 = vcvt.s32.f32 %v1659
      %1662 = vmin.xlane.f32.xlu0 %v1661
      %v1663 = vpop.xlane.xlu0 %1662
      %vm1664 = vcmp.eq.f32.partialorder %v1661, %v1663
      %v1665 = vsel %vm1664, %v1660, inf
      %1666 = vmin.xlane.f32.xlu0 %v1665
      %v1667 = vpop.xlane.xlu0 %1666
      %v1668 = vcvt.f32.s32 %v1667
      %v1669 = vcvt.f32.s32 %v1663
      %v1670 = vshll.u32 %v1669, 16
      %v1671 = vadd.s32 %v1670, %v1668
      %v1672 = vand.u32 %v1497, 65535
      %v1673 = vshra.s32 %v1497, 16
      %v1674 = vcvt.s32.f32 %v1672
      %v1675 = vcvt.s32.f32 %v1673
      %1676 = vmin.xlane.f32.xlu0 %v1675
      %v1677 = vpop.xlane.xlu0 %1676
      %vm1678 = vcmp.eq.f32.partialorder %v1675, %v1677
      %v1679 = vsel %vm1678, %v1674, inf
      %1680 = vmin.xlane.f32.xlu0 %v1679
      %v1681 = vpop.xlane.xlu0 %1680
      %v1682 = vcvt.f32.s32 %v1681
      %v1683 = vcvt.f32.s32 %v1677
      %v1684 = vshll.u32 %v1683, 16
      %v1685 = vadd.s32 %v1684, %v1682
      %v1686 = vand.u32 %v1498, 65535
      %v1687 = vshra.s32 %v1498, 16
      %v1688 = vcvt.s32.f32 %v1686
      %v1689 = vcvt.s32.f32 %v1687
      %1690 = vmin.xlane.f32.xlu0 %v1689
      %v1691 = vpop.xlane.xlu0 %1690
      %vm1692 = vcmp.eq.f32.partialorder %v1689, %v1691
      %v1693 = vsel %vm1692, %v1688, inf
      %1694 = vmin.xlane.f32.xlu0 %v1693
      %v1695 = vpop.xlane.xlu0 %1694
      %v1696 = vcvt.f32.s32 %v1695
      %v1697 = vcvt.f32.s32 %v1691
      %v1698 = vshll.u32 %v1697, 16
      %v1699 = vadd.s32 %v1698, %v1696
      %v1700 = vand.u32 %v1499, 65535
      %v1701 = vshra.s32 %v1499, 16
      %v1702 = vcvt.s32.f32 %v1700
      %v1703 = vcvt.s32.f32 %v1701
      %1704 = vmin.xlane.f32.xlu0 %v1703
      %v1705 = vpop.xlane.xlu0 %1704
      %vm1706 = vcmp.eq.f32.partialorder %v1703, %v1705
      %v1707 = vsel %vm1706, %v1702, inf
      %1708 = vmin.xlane.f32.xlu0 %v1707
      %v1709 = vpop.xlane.xlu0 %1708
      %v1710 = vcvt.f32.s32 %v1709
      %v1711 = vcvt.f32.s32 %v1705
      %v1712 = vshll.u32 %v1711, 16
      %v1713 = vadd.s32 %v1712, %v1710
      %v1714 = vand.u32 %v1500, 65535
      %v1715 = vshra.s32 %v1500, 16
      %v1716 = vcvt.s32.f32 %v1714
      %v1717 = vcvt.s32.f32 %v1715
      %1718 = vmin.xlane.f32.xlu0 %v1717
      %v1719 = vpop.xlane.xlu0 %1718
      %vm1720 = vcmp.eq.f32.partialorder %v1717, %v1719
      %v1721 = vsel %vm1720, %v1716, inf
      %1722 = vmin.xlane.f32.xlu0 %v1721
      %v1723 = vpop.xlane.xlu0 %1722
      %v1724 = vcvt.f32.s32 %v1723
      %v1725 = vcvt.f32.s32 %v1719
      %v1726 = vshll.u32 %v1725, 16
      %v1727 = vadd.s32 %v1726, %v1724
      %v1728 = vand.u32 %v1501, 65535
      %v1729 = vshra.s32 %v1501, 16
      %v1730 = vcvt.s32.f32 %v1728
      %v1731 = vcvt.s32.f32 %v1729
      %1732 = vmin.xlane.f32.xlu0 %v1731
      %v1733 = vpop.xlane.xlu0 %1732
      %vm1734 = vcmp.eq.f32.partialorder %v1731, %v1733
      %v1735 = vsel %vm1734, %v1730, inf
      %1736 = vmin.xlane.f32.xlu0 %v1735
      %v1737 = vpop.xlane.xlu0 %1736
      %v1738 = vcvt.f32.s32 %v1737
      %v1739 = vcvt.f32.s32 %v1733
      %v1740 = vshll.u32 %v1739, 16
      %v1741 = vadd.s32 %v1740, %v1738
      %v1742 = vand.u32 %v1502, 65535
      %v1743 = vshra.s32 %v1502, 16
      %v1744 = vcvt.s32.f32 %v1742
      %v1745 = vcvt.s32.f32 %v1743
      %1746 = vmin.xlane.f32.xlu0 %v1745
      %v1747 = vpop.xlane.xlu0 %1746
      %vm1748 = vcmp.eq.f32.partialorder %v1745, %v1747
      %v1749 = vsel %vm1748, %v1744, inf
      %1750 = vmin.xlane.f32.xlu0 %v1749
      %v1751 = vpop.xlane.xlu0 %1750
      %v1752 = vcvt.f32.s32 %v1751
      %v1753 = vcvt.f32.s32 %v1747
      %v1754 = vshll.u32 %v1753, 16
      %v1755 = vadd.s32 %v1754, %v1752
      %v1756 = vand.u32 %v1503, 65535
      %v1757 = vshra.s32 %v1503, 16
      %v1758 = vcvt.s32.f32 %v1756
      %v1759 = vcvt.s32.f32 %v1757
      %1760 = vmin.xlane.f32.xlu0 %v1759
      %v1761 = vpop.xlane.xlu0 %1760
      %vm1762 = vcmp.eq.f32.partialorder %v1759, %v1761
      %v1763 = vsel %vm1762, %v1758, inf
      %1764 = vmin.xlane.f32.xlu0 %v1763
      %v1765 = vpop.xlane.xlu0 %1764
      %v1766 = vcvt.f32.s32 %v1765
      %v1767 = vcvt.f32.s32 %v1761
      %v1768 = vshll.u32 %v1767, 16
      %v1769 = vadd.s32 %v1768, %v1766
      %v1770 = vand.u32 %v1504, 65535
      %v1771 = vshra.s32 %v1504, 16
      %v1772 = vcvt.s32.f32 %v1770
      %v1773 = vcvt.s32.f32 %v1771
      %1774 = vmin.xlane.f32.xlu0 %v1773
      %v1775 = vpop.xlane.xlu0 %1774
      %vm1776 = vcmp.eq.f32.partialorder %v1773, %v1775
      %v1777 = vsel %vm1776, %v1772, inf
      %1778 = vmin.xlane.f32.xlu0 %v1777
      %v1779 = vpop.xlane.xlu0 %1778
      %v1780 = vcvt.f32.s32 %v1779
      %v1781 = vcvt.f32.s32 %v1775
      %v1782 = vshll.u32 %v1781, 16
      %v1783 = vadd.s32 %v1782, %v1780
      %v1784 = vand.u32 %v1505, 65535
      %v1785 = vshra.s32 %v1505, 16
      %v1786 = vcvt.s32.f32 %v1784
      %v1787 = vcvt.s32.f32 %v1785
      %1788 = vmin.xlane.f32.xlu0 %v1787
      %v1789 = vpop.xlane.xlu0 %1788
      %vm1790 = vcmp.eq.f32.partialorder %v1787, %v1789
      %v1791 = vsel %vm1790, %v1786, inf
      %1792 = vmin.xlane.f32.xlu0 %v1791
      %v1793 = vpop.xlane.xlu0 %1792
      %v1794 = vcvt.f32.s32 %v1793
      %v1795 = vcvt.f32.s32 %v1789
      %v1796 = vshll.u32 %v1795, 16
      %v1797 = vadd.s32 %v1796, %v1794
      %v1798 = vand.u32 %v1506, 65535
      %v1799 = vshra.s32 %v1506, 16
      %v1800 = vcvt.s32.f32 %v1798
      %v1801 = vcvt.s32.f32 %v1799
      %1802 = vmin.xlane.f32.xlu0 %v1801
      %v1803 = vpop.xlane.xlu0 %1802
      %vm1804 = vcmp.eq.f32.partialorder %v1801, %v1803
      %v1805 = vsel %vm1804, %v1800, inf
      %1806 = vmin.xlane.f32.xlu0 %v1805
      %v1807 = vpop.xlane.xlu0 %1806
      %v1808 = vcvt.f32.s32 %v1807
      %v1809 = vcvt.f32.s32 %v1803
      %v1810 = vshll.u32 %v1809, 16
      %v1811 = vadd.s32 %v1810, %v1808
      %v1812 = vand.u32 %v1507, 65535
      %v1813 = vshra.s32 %v1507, 16
      %v1814 = vcvt.s32.f32 %v1812
      %v1815 = vcvt.s32.f32 %v1813
      %1816 = vmin.xlane.f32.xlu0 %v1815
      %v1817 = vpop.xlane.xlu0 %1816
      %vm1818 = vcmp.eq.f32.partialorder %v1815, %v1817
      %v1819 = vsel %vm1818, %v1814, inf
      %1820 = vmin.xlane.f32.xlu0 %v1819
      %v1821 = vpop.xlane.xlu0 %1820
      %v1822 = vcvt.f32.s32 %v1821
      %v1823 = vcvt.f32.s32 %v1817
      %v1824 = vshll.u32 %v1823, 16
      %v1825 = vadd.s32 %v1824, %v1822
      %v1826 = vand.u32 %v1508, 65535
      %v1827 = vshra.s32 %v1508, 16
      %v1828 = vcvt.s32.f32 %v1826
      %v1829 = vcvt.s32.f32 %v1827
      %1830 = vmin.xlane.f32.xlu0 %v1829
      %v1831 = vpop.xlane.xlu0 %1830
      %vm1832 = vcmp.eq.f32.partialorder %v1829, %v1831
      %v1833 = vsel %vm1832, %v1828, inf
      %1834 = vmin.xlane.f32.xlu0 %v1833
      %v1835 = vpop.xlane.xlu0 %1834
      %v1836 = vcvt.f32.s32 %v1835
      %v1837 = vcvt.f32.s32 %v1831
      %v1838 = vshll.u32 %v1837, 16
      %v1839 = vadd.s32 %v1838, %v1836
      %v1840 = vand.u32 %v1509, 65535
      %v1841 = vshra.s32 %v1509, 16
      %v1842 = vcvt.s32.f32 %v1840
      %v1843 = vcvt.s32.f32 %v1841
      %1844 = vmin.xlane.f32.xlu0 %v1843
      %v1845 = vpop.xlane.xlu0 %1844
      %vm1846 = vcmp.eq.f32.partialorder %v1843, %v1845
      %v1847 = vsel %vm1846, %v1842, inf
      %1848 = vmin.xlane.f32.xlu0 %v1847
      %v1849 = vpop.xlane.xlu0 %1848
      %v1850 = vcvt.f32.s32 %v1849
      %v1851 = vcvt.f32.s32 %v1845
      %v1852 = vshll.u32 %v1851, 16
      %v1853 = vadd.s32 %v1852, %v1850
      %v1854 = vand.u32 %v1510, 65535
      %v1855 = vshra.s32 %v1510, 16
      %v1856 = vcvt.s32.f32 %v1854
      %v1857 = vcvt.s32.f32 %v1855
      %1858 = vmin.xlane.f32.xlu0 %v1857
      %v1859 = vpop.xlane.xlu0 %1858
      %vm1860 = vcmp.eq.f32.partialorder %v1857, %v1859
      %v1861 = vsel %vm1860, %v1856, inf
      %1862 = vmin.xlane.f32.xlu0 %v1861
      %v1863 = vpop.xlane.xlu0 %1862
      %v1864 = vcvt.f32.s32 %v1863
      %v1865 = vcvt.f32.s32 %v1859
      %v1866 = vshll.u32 %v1865, 16
      %v1867 = vadd.s32 %v1866, %v1864
      %v1868 = vand.u32 %v1511, 65535
      %v1869 = vshra.s32 %v1511, 16
      %v1870 = vcvt.s32.f32 %v1868
      %v1871 = vcvt.s32.f32 %v1869
      %1872 = vmin.xlane.f32.xlu0 %v1871
      %v1873 = vpop.xlane.xlu0 %1872
      %vm1874 = vcmp.eq.f32.partialorder %v1871, %v1873
      %v1875 = vsel %vm1874, %v1870, inf
      %1876 = vmin.xlane.f32.xlu0 %v1875
      %v1877 = vpop.xlane.xlu0 %1876
      %v1878 = vcvt.f32.s32 %v1877
      %v1879 = vcvt.f32.s32 %v1873
      %v1880 = vshll.u32 %v1879, 16
      %v1881 = vadd.s32 %v1880, %v1878
      %v1882 = vand.u32 %v1512, 65535
      %v1883 = vshra.s32 %v1512, 16
      %v1884 = vcvt.s32.f32 %v1882
      %v1885 = vcvt.s32.f32 %v1883
      %1886 = vmin.xlane.f32.xlu0 %v1885
      %v1887 = vpop.xlane.xlu0 %1886
      %vm1888 = vcmp.eq.f32.partialorder %v1885, %v1887
      %v1889 = vsel %vm1888, %v1884, inf
      %1890 = vmin.xlane.f32.xlu0 %v1889
      %v1891 = vpop.xlane.xlu0 %1890
      %v1892 = vcvt.f32.s32 %v1891
      %v1893 = vcvt.f32.s32 %v1887
      %v1894 = vshll.u32 %v1893, 16
      %v1895 = vadd.s32 %v1894, %v1892
      %v1896 = vand.u32 %v1513, 65535
      %v1897 = vshra.s32 %v1513, 16
      %v1898 = vcvt.s32.f32 %v1896
      %v1899 = vcvt.s32.f32 %v1897
      %1900 = vmin.xlane.f32.xlu0 %v1899
      %v1901 = vpop.xlane.xlu0 %1900
      %vm1902 = vcmp.eq.f32.partialorder %v1899, %v1901
      %v1903 = vsel %vm1902, %v1898, inf
      %1904 = vmin.xlane.f32.xlu0 %v1903
      %v1905 = vpop.xlane.xlu0 %1904
      %v1906 = vcvt.f32.s32 %v1905
      %v1907 = vcvt.f32.s32 %v1901
      %v1908 = vshll.u32 %v1907, 16
      %v1909 = vadd.s32 %v1908, %v1906
      %v1910 = vand.u32 %v1514, 65535
      %v1911 = vshra.s32 %v1514, 16
      %v1912 = vcvt.s32.f32 %v1910
      %v1913 = vcvt.s32.f32 %v1911
      %1914 = vmin.xlane.f32.xlu0 %v1913
      %v1915 = vpop.xlane.xlu0 %1914
      %vm1916 = vcmp.eq.f32.partialorder %v1913, %v1915
      %v1917 = vsel %vm1916, %v1912, inf
      %1918 = vmin.xlane.f32.xlu0 %v1917
      %v1919 = vpop.xlane.xlu0 %1918
      %v1920 = vcvt.f32.s32 %v1919
      %v1921 = vcvt.f32.s32 %v1915
      %v1922 = vshll.u32 %v1921, 16
      %v1923 = vadd.s32 %v1922, %v1920
      %v1924 = vand.u32 %v1515, 65535
      %v1925 = vshra.s32 %v1515, 16
      %v1926 = vcvt.s32.f32 %v1924
      %v1927 = vcvt.s32.f32 %v1925
      %1928 = vmin.xlane.f32.xlu0 %v1927
      %v1929 = vpop.xlane.xlu0 %1928
      %vm1930 = vcmp.eq.f32.partialorder %v1927, %v1929
      %v1931 = vsel %vm1930, %v1926, inf
      %1932 = vmin.xlane.f32.xlu0 %v1931
      %v1933 = vpop.xlane.xlu0 %1932
      %v1934 = vcvt.f32.s32 %v1933
      %v1935 = vcvt.f32.s32 %v1929
      %v1936 = vshll.u32 %v1935, 16
      %v1937 = vadd.s32 %v1936, %v1934
      %v1938 = vand.u32 %v1516, 65535
      %v1939 = vshra.s32 %v1516, 16
      %v1940 = vcvt.s32.f32 %v1938
      %v1941 = vcvt.s32.f32 %v1939
      %1942 = vmin.xlane.f32.xlu0 %v1941
      %v1943 = vpop.xlane.xlu0 %1942
      %vm1944 = vcmp.eq.f32.partialorder %v1941, %v1943
      %v1945 = vsel %vm1944, %v1940, inf
      %1946 = vmin.xlane.f32.xlu0 %v1945
      %v1947 = vpop.xlane.xlu0 %1946
      %v1948 = vcvt.f32.s32 %v1947
      %v1949 = vcvt.f32.s32 %v1943
      %v1950 = vshll.u32 %v1949, 16
      %v1951 = vadd.s32 %v1950, %v1948
      %v1952 = vand.u32 %v1517, 65535
      %v1953 = vshra.s32 %v1517, 16
      %v1954 = vcvt.s32.f32 %v1952
      %v1955 = vcvt.s32.f32 %v1953
      %1956 = vmin.xlane.f32.xlu0 %v1955
      %v1957 = vpop.xlane.xlu0 %1956
      %vm1958 = vcmp.eq.f32.partialorder %v1955, %v1957
      %v1959 = vsel %vm1958, %v1954, inf
      %1960 = vmin.xlane.f32.xlu0 %v1959
      %v1961 = vpop.xlane.xlu0 %1960
      %v1962 = vcvt.f32.s32 %v1961
      %v1963 = vcvt.f32.s32 %v1957
      %v1964 = vshll.u32 %v1963, 16
      %v1965 = vadd.s32 %v1964, %v1962
      %vm1966 = vcmp.eq.s32.totalorder %v1077, %v1531
      %vm1967 = vcmp.eq.s32.totalorder %v1077, %v1545
      %vm1968 = vcmp.eq.s32.totalorder %v1077, %v1559
      %vm1969 = vcmp.eq.s32.totalorder %v1077, %v1573
      %vm1970 = vcmp.eq.s32.totalorder %v1077, %v1587
      %vm1971 = vcmp.eq.s32.totalorder %v1077, %v1601
      %vm1972 = vcmp.eq.s32.totalorder %v1077, %v1615
      %vm1973 = vcmp.eq.s32.totalorder %v1077, %v1629
      %vm1974 = vcmp.eq.s32.totalorder %v1077, %v1643
      %vm1975 = vcmp.eq.s32.totalorder %v1077, %v1657
      %vm1976 = vcmp.eq.s32.totalorder %v1077, %v1671
      %vm1977 = vcmp.eq.s32.totalorder %v1077, %v1685
      %vm1978 = vcmp.eq.s32.totalorder %v1077, %v1699
      %vm1979 = vcmp.eq.s32.totalorder %v1077, %v1713
      %vm1980 = vcmp.eq.s32.totalorder %v1077, %v1727
      %vm1981 = vcmp.eq.s32.totalorder %v1077, %v1741
      %vm1982 = vcmp.eq.s32.totalorder %v1077, %v1755
      %vm1983 = vcmp.eq.s32.totalorder %v1077, %v1769
      %vm1984 = vcmp.eq.s32.totalorder %v1077, %v1783
      %vm1985 = vcmp.eq.s32.totalorder %v1077, %v1797
      %vm1986 = vcmp.eq.s32.totalorder %v1077, %v1811
      %vm1987 = vcmp.eq.s32.totalorder %v1077, %v1825
      %vm1988 = vcmp.eq.s32.totalorder %v1077, %v1839
      %vm1989 = vcmp.eq.s32.totalorder %v1077, %v1853
      %vm1990 = vcmp.eq.s32.totalorder %v1077, %v1867
      %vm1991 = vcmp.eq.s32.totalorder %v1077, %v1881
      %vm1992 = vcmp.eq.s32.totalorder %v1077, %v1895
      %vm1993 = vcmp.eq.s32.totalorder %v1077, %v1909
      %vm1994 = vcmp.eq.s32.totalorder %v1077, %v1923
      %vm1995 = vcmp.eq.s32.totalorder %v1077, %v1937
      %vm1996 = vcmp.eq.s32.totalorder %v1077, %v1951
      %vm1997 = vcmp.eq.s32.totalorder %v1077, %v1965
      %v1998 = vsel %vm1966, 1, 0
      %v1999 = vsel %vm1967, 1, 0
      %v2000 = vsel %vm1968, 1, 0
      %v2001 = vsel %vm1969, 1, 0
      %v2002 = vsel %vm1970, 1, 0
      %v2003 = vsel %vm1971, 1, 0
      %v2004 = vsel %vm1972, 1, 0
      %v2005 = vsel %vm1973, 1, 0
      %v2006 = vsel %vm1974, 1, 0
      %v2007 = vsel %vm1975, 1, 0
      %v2008 = vsel %vm1976, 1, 0
      %v2009 = vsel %vm1977, 1, 0
      %v2010 = vsel %vm1978, 1, 0
      %v2011 = vsel %vm1979, 1, 0
      %v2012 = vsel %vm1980, 1, 0
      %v2013 = vsel %vm1981, 1, 0
      %v2014 = vsel %vm1982, 1, 0
      %v2015 = vsel %vm1983, 1, 0
      %v2016 = vsel %vm1984, 1, 0
      %v2017 = vsel %vm1985, 1, 0
      %v2018 = vsel %vm1986, 1, 0
      %v2019 = vsel %vm1987, 1, 0
      %v2020 = vsel %vm1988, 1, 0
      %v2021 = vsel %vm1989, 1, 0
      %v2022 = vsel %vm1990, 1, 0
      %v2023 = vsel %vm1991, 1, 0
      %v2024 = vsel %vm1992, 1, 0
      %v2025 = vsel %vm1993, 1, 0
      %v2026 = vsel %vm1994, 1, 0
      %v2027 = vsel %vm1995, 1, 0
      %v2028 = vsel %vm1996, 1, 0
      %v2029 = vsel %vm1997, 1, 0
      %v2030 = vcvt.s32.f32 %v1998
      %v2031 = vcvt.s32.f32 %v1999
      %v2032 = vcvt.s32.f32 %v2000
      %v2033 = vcvt.s32.f32 %v2001
      %v2034 = vcvt.s32.f32 %v2002
      %v2035 = vcvt.s32.f32 %v2003
      %v2036 = vcvt.s32.f32 %v2004
      %v2037 = vcvt.s32.f32 %v2005
      %v2038 = vcvt.s32.f32 %v2006
      %v2039 = vcvt.s32.f32 %v2007
      %v2040 = vcvt.s32.f32 %v2008
      %v2041 = vcvt.s32.f32 %v2009
      %v2042 = vcvt.s32.f32 %v2010
      %v2043 = vcvt.s32.f32 %v2011
      %v2044 = vcvt.s32.f32 %v2012
      %v2045 = vcvt.s32.f32 %v2013
      %v2046 = vcvt.s32.f32 %v2014
      %v2047 = vcvt.s32.f32 %v2015
      %v2048 = vcvt.s32.f32 %v2016
      %v2049 = vcvt.s32.f32 %v2017
      %v2050 = vcvt.s32.f32 %v2018
      %v2051 = vcvt.s32.f32 %v2019
      %v2052 = vcvt.s32.f32 %v2020
      %v2053 = vcvt.s32.f32 %v2021
      %v2054 = vcvt.s32.f32 %v2022
      %v2055 = vcvt.s32.f32 %v2023
      %v2056 = vcvt.s32.f32 %v2024
      %v2057 = vcvt.s32.f32 %v2025
      %v2058 = vcvt.s32.f32 %v2026
      %v2059 = vcvt.s32.f32 %v2027
      %v2060 = vcvt.s32.f32 %v2028
      %v2061 = vcvt.s32.f32 %v2029
      %2062 = vmatprep.subr.mxu0 0.0
      %2063 = vmatpush1.xpose.msra.mxu0 %v1093
      %2064 = vmatprep.subr.mxu0 0.0
      %2065 = vmatpush1.xpose.msra.mxu0 %v1092
      %2066 = vmatprep.subr.mxu0 0.0
      %2067 = vmatpush1.xpose.msra.mxu0 %v1091
      %2068 = vmatprep.subr.mxu0 0.0
      %2069 = vmatpush1.xpose.msra.mxu0 %v1090
      %2070 = vmatprep.subr.mxu0 0.0
      %2071 = vmatpush1.xpose.msra.mxu0 %v1089
      %2072 = vmatprep.subr.mxu0 0.0
      %2073 = vmatpush1.xpose.msra.mxu0 %v1088
      %2074 = vmatprep.subr.mxu0 0.0
      %2075 = vmatpush1.xpose.msra.mxu0 %v1087
      %2076 = vmatprep.subr.mxu0 0.0
      %2077 = vmatpush1.xpose.msra.mxu0 %v1086
      %2078 = vmatprep.subr.mxu0 0.0
      %2079 = vmatpush1.xpose.msra.mxu0 %v1085
      %2080 = vmatprep.subr.mxu0 0.0
      %2081 = vmatpush1.xpose.msra.mxu0 %v1084
      %2082 = vmatprep.subr.mxu0 0.0
      %2083 = vmatpush1.xpose.msra.mxu0 %v1083
      %2084 = vmatprep.subr.mxu0 0.0
      %2085 = vmatpush1.xpose.msra.mxu0 %v1082
      %2086 = vmatprep.subr.mxu0 0.0
      %2087 = vmatpush1.xpose.msra.mxu0 %v1081
      %2088 = vmatprep.subr.mxu0 0.0
      %2089 = vmatpush1.xpose.msra.mxu0 %v1080
      %2090 = vmatprep.subr.mxu0 0.0
      %2091 = vmatpush1.xpose.msra.mxu0 %v1079
      %2092 = vmatprep.subr.mxu0 0.0
      %2093 = vmatpush1.xpose.msra.mxu0 %v1078
      %2094 = vmatprep.subr.mxu0 0.0
      %2095 = vmatpush2.xpose.msra.mxu0 0.0
      %2096 = vmatprep.subr.mxu0 0.0
      %2097 = vmatpush2.xpose.msra.mxu0 0.0
      %2098 = vmatprep.subr.mxu0 0.0
      %2099 = vmatpush2.xpose.msra.mxu0 0.0
      %2100 = vmatprep.subr.mxu0 0.0
      %2101 = vmatpush2.xpose.msra.mxu0 0.0
      %2102 = vmatprep.subr.mxu0 0.0
      %2103 = vmatpush2.xpose.msra.mxu0 0.0
      %2104 = vmatprep.subr.mxu0 0.0
      %2105 = vmatpush2.xpose.msra.mxu0 0.0
      %2106 = vmatprep.subr.mxu0 0.0
      %2107 = vmatpush2.xpose.msra.mxu0 0.0
      %2108 = vmatprep.subr.mxu0 0.0
      %2109 = vmatpush2.xpose.msra.mxu0 0.0
      %2110 = vmatprep.subr.mxu0 0.0
      %2111 = vmatpush2.xpose.msra.mxu0 0.0
      %2112 = vmatprep.subr.mxu0 0.0
      %2113 = vmatpush2.xpose.msra.mxu0 0.0
      %2114 = vmatprep.subr.mxu0 0.0
      %2115 = vmatpush2.xpose.msra.mxu0 0.0
      %2116 = vmatprep.subr.mxu0 0.0
      %2117 = vmatpush2.xpose.msra.mxu0 0.0
      %2118 = vmatprep.subr.mxu0 0.0
      %2119 = vmatpush2.xpose.msra.mxu0 0.0
      %2120 = vmatprep.subr.mxu0 0.0
      %2121 = vmatpush2.xpose.msra.mxu0 0.0
      %2122 = vmatprep.subr.mxu0 0.0
      %2123 = vmatpush2.xpose.msra.mxu0 0.0
      %2124 = vmatprep.subr.mxu0 0.0
      %2125 = vmatpush2.xpose.msra.mxu0 0.0
      %2126 = vmatprep.mubr.f32.mxu0 0.0
      %2127 = vmatmul.mubr.f32.gmra.mxu0 %v2030
      %v2128 = vpop.f32.mrf.mxu0
      %v2129 = vadd.f32 0.0, %v2128
      %v2130 = vpop.f32.mrf.mxu0
      %2131 = vmatprep.mubr.f32.mxu0 0.0
      %2132 = vmatmul.mubr.f32.gmra.mxu0 %v2031
      %v2133 = vpop.f32.mrf.mxu0
      %v2134 = vadd.f32 0.0, %v2133
      %v2135 = vpop.f32.mrf.mxu0
      %2136 = vmatprep.mubr.f32.mxu0 0.0
      %2137 = vmatmul.mubr.f32.gmra.mxu0 %v2032
      %v2138 = vpop.f32.mrf.mxu0
      %v2139 = vadd.f32 0.0, %v2138
      %v2140 = vpop.f32.mrf.mxu0
      %2141 = vmatprep.mubr.f32.mxu0 0.0
      %2142 = vmatmul.mubr.f32.gmra.mxu0 %v2033
      %v2143 = vpop.f32.mrf.mxu0
      %v2144 = vadd.f32 0.0, %v2143
      %v2145 = vpop.f32.mrf.mxu0
      %2146 = vmatprep.mubr.f32.mxu0 0.0
      %2147 = vmatmul.mubr.f32.gmra.mxu0 %v2034
      %v2148 = vpop.f32.mrf.mxu0
      %v2149 = vadd.f32 0.0, %v2148
      %v2150 = vpop.f32.mrf.mxu0
      %2151 = vmatprep.mubr.f32.mxu0 0.0
      %2152 = vmatmul.mubr.f32.gmra.mxu0 %v2035
      %v2153 = vpop.f32.mrf.mxu0
      %v2154 = vadd.f32 0.0, %v2153
      %v2155 = vpop.f32.mrf.mxu0
      %2156 = vmatprep.mubr.f32.mxu0 0.0
      %2157 = vmatmul.mubr.f32.gmra.mxu0 %v2036
      %v2158 = vpop.f32.mrf.mxu0
      %v2159 = vadd.f32 0.0, %v2158
      %v2160 = vpop.f32.mrf.mxu0
      %2161 = vmatprep.mubr.f32.mxu0 0.0
      %2162 = vmatmul.mubr.f32.gmra.mxu0 %v2037
      %v2163 = vpop.f32.mrf.mxu0
      %v2164 = vadd.f32 0.0, %v2163
      %v2165 = vpop.f32.mrf.mxu0
      %2166 = vmatprep.mubr.f32.mxu0 0.0
      %2167 = vmatmul.mubr.f32.gmra.mxu0 %v2038
      %v2168 = vpop.f32.mrf.mxu0
      %v2169 = vadd.f32 0.0, %v2168
      %v2170 = vpop.f32.mrf.mxu0
      %2171 = vmatprep.mubr.f32.mxu0 0.0
      %2172 = vmatmul.mubr.f32.gmra.mxu0 %v2039
      %v2173 = vpop.f32.mrf.mxu0
      %v2174 = vadd.f32 0.0, %v2173
      %v2175 = vpop.f32.mrf.mxu0
      %2176 = vmatprep.mubr.f32.mxu0 0.0
      %2177 = vmatmul.mubr.f32.gmra.mxu0 %v2040
      %v2178 = vpop.f32.mrf.mxu0
      %v2179 = vadd.f32 0.0, %v2178
      %v2180 = vpop.f32.mrf.mxu0
      %2181 = vmatprep.mubr.f32.mxu0 0.0
      %2182 = vmatmul.mubr.f32.gmra.mxu0 %v2041
      %v2183 = vpop.f32.mrf.mxu0
      %v2184 = vadd.f32 0.0, %v2183
      %v2185 = vpop.f32.mrf.mxu0
      %2186 = vmatprep.mubr.f32.mxu0 0.0
      %2187 = vmatmul.mubr.f32.gmra.mxu0 %v2042
      %v2188 = vpop.f32.mrf.mxu0
      %v2189 = vadd.f32 0.0, %v2188
      %v2190 = vpop.f32.mrf.mxu0
      %2191 = vmatprep.mubr.f32.mxu0 0.0
      %2192 = vmatmul.mubr.f32.gmra.mxu0 %v2043
      %v2193 = vpop.f32.mrf.mxu0
      %v2194 = vadd.f32 0.0, %v2193
      %v2195 = vpop.f32.mrf.mxu0
      %2196 = vmatprep.mubr.f32.mxu0 0.0
      %2197 = vmatmul.mubr.f32.gmra.mxu0 %v2044
      %v2198 = vpop.f32.mrf.mxu0
      %v2199 = vadd.f32 0.0, %v2198
      %v2200 = vpop.f32.mrf.mxu0
      %2201 = vmatprep.mubr.f32.mxu0 0.0
      %2202 = vmatmul.mubr.f32.gmra.mxu0 %v2045
      %v2203 = vpop.f32.mrf.mxu0
      %v2204 = vadd.f32 0.0, %v2203
      %v2205 = vpop.f32.mrf.mxu0
      %2206 = vmatprep.mubr.f32.mxu0 0.0
      %2207 = vmatmul.mubr.f32.gmra.mxu0 %v2046
      %v2208 = vpop.f32.mrf.mxu0
      %v2209 = vadd.f32 0.0, %v2208
      %v2210 = vpop.f32.mrf.mxu0
      %2211 = vmatprep.mubr.f32.mxu0 0.0
      %2212 = vmatmul.mubr.f32.gmra.mxu0 %v2047
      %v2213 = vpop.f32.mrf.mxu0
      %v2214 = vadd.f32 0.0, %v2213
      %v2215 = vpop.f32.mrf.mxu0
      %2216 = vmatprep.mubr.f32.mxu0 0.0
      %2217 = vmatmul.mubr.f32.gmra.mxu0 %v2048
      %v2218 = vpop.f32.mrf.mxu0
      %v2219 = vadd.f32 0.0, %v2218
      %v2220 = vpop.f32.mrf.mxu0
      %2221 = vmatprep.mubr.f32.mxu0 0.0
      %2222 = vmatmul.mubr.f32.gmra.mxu0 %v2049
      %v2223 = vpop.f32.mrf.mxu0
      %v2224 = vadd.f32 0.0, %v2223
      %v2225 = vpop.f32.mrf.mxu0
      %2226 = vmatprep.mubr.f32.mxu0 0.0
      %2227 = vmatmul.mubr.f32.gmra.mxu0 %v2050
      %v2228 = vpop.f32.mrf.mxu0
      %v2229 = vadd.f32 0.0, %v2228
      %v2230 = vpop.f32.mrf.mxu0
      %2231 = vmatprep.mubr.f32.mxu0 0.0
      %2232 = vmatmul.mubr.f32.gmra.mxu0 %v2051
      %v2233 = vpop.f32.mrf.mxu0
      %v2234 = vadd.f32 0.0, %v2233
      %v2235 = vpop.f32.mrf.mxu0
      %2236 = vmatprep.mubr.f32.mxu0 0.0
      %2237 = vmatmul.mubr.f32.gmra.mxu0 %v2052
      %v2238 = vpop.f32.mrf.mxu0
      %v2239 = vadd.f32 0.0, %v2238
      %v2240 = vpop.f32.mrf.mxu0
      %2241 = vmatprep.mubr.f32.mxu0 0.0
      %2242 = vmatmul.mubr.f32.gmra.mxu0 %v2053
      %v2243 = vpop.f32.mrf.mxu0
      %v2244 = vadd.f32 0.0, %v2243
      %v2245 = vpop.f32.mrf.mxu0
      %2246 = vmatprep.mubr.f32.mxu0 0.0
      %2247 = vmatmul.mubr.f32.gmra.mxu0 %v2054
      %v2248 = vpop.f32.mrf.mxu0
      %v2249 = vadd.f32 0.0, %v2248
      %v2250 = vpop.f32.mrf.mxu0
      %2251 = vmatprep.mubr.f32.mxu0 0.0
      %2252 = vmatmul.mubr.f32.gmra.mxu0 %v2055
      %v2253 = vpop.f32.mrf.mxu0
      %v2254 = vadd.f32 0.0, %v2253
      %v2255 = vpop.f32.mrf.mxu0
      %2256 = vmatprep.mubr.f32.mxu0 0.0
      %2257 = vmatmul.mubr.f32.gmra.mxu0 %v2056
      %v2258 = vpop.f32.mrf.mxu0
      %v2259 = vadd.f32 0.0, %v2258
      %v2260 = vpop.f32.mrf.mxu0
      %2261 = vmatprep.mubr.f32.mxu0 0.0
      %2262 = vmatmul.mubr.f32.gmra.mxu0 %v2057
      %v2263 = vpop.f32.mrf.mxu0
      %v2264 = vadd.f32 0.0, %v2263
      %v2265 = vpop.f32.mrf.mxu0
      %2266 = vmatprep.mubr.f32.mxu0 0.0
      %2267 = vmatmul.mubr.f32.gmra.mxu0 %v2058
      %v2268 = vpop.f32.mrf.mxu0
      %v2269 = vadd.f32 0.0, %v2268
      %v2270 = vpop.f32.mrf.mxu0
      %2271 = vmatprep.mubr.f32.mxu0 0.0
      %2272 = vmatmul.mubr.f32.gmra.mxu0 %v2059
      %v2273 = vpop.f32.mrf.mxu0
      %v2274 = vadd.f32 0.0, %v2273
      %v2275 = vpop.f32.mrf.mxu0
      %2276 = vmatprep.mubr.f32.mxu0 0.0
      %2277 = vmatmul.mubr.f32.gmra.mxu0 %v2060
      %v2278 = vpop.f32.mrf.mxu0
      %v2279 = vadd.f32 0.0, %v2278
      %v2280 = vpop.f32.mrf.mxu0
      %2281 = vmatprep.mubr.f32.mxu0 0.0
      %2282 = vmatmul.mubr.f32.gmra.mxu0 %v2061
      %v2283 = vpop.f32.mrf.mxu0
      %v2284 = vadd.f32 0.0, %v2283
      %v2285 = vpop.f32.mrf.mxu0
      %2286 = vdwg.mxu0
      %v2287 = vsub.f32 %v2129, %v918
      %v2288 = vsub.f32 %v2134, %v923
      %v2289 = vsub.f32 %v2139, %v928
      %v2290 = vsub.f32 %v2144, %v933
      %v2291 = vsub.f32 %v2149, %v938
      %v2292 = vsub.f32 %v2154, %v943
      %v2293 = vsub.f32 %v2159, %v948
      %v2294 = vsub.f32 %v2164, %v953
      %v2295 = vsub.f32 %v2169, %v958
      %v2296 = vsub.f32 %v2174, %v963
      %v2297 = vsub.f32 %v2179, %v968
      %v2298 = vsub.f32 %v2184, %v973
      %v2299 = vsub.f32 %v2189, %v978
      %v2300 = vsub.f32 %v2194, %v983
      %v2301 = vsub.f32 %v2199, %v988
      %v2302 = vsub.f32 %v2204, %v993
      %v2303 = vsub.f32 %v2209, %v998
      %v2304 = vsub.f32 %v2214, %v1003
      %v2305 = vsub.f32 %v2219, %v1008
      %v2306 = vsub.f32 %v2224, %v1013
      %v2307 = vsub.f32 %v2229, %v1018
      %v2308 = vsub.f32 %v2234, %v1023
      %v2309 = vsub.f32 %v2239, %v1028
      %v2310 = vsub.f32 %v2244, %v1033
      %v2311 = vsub.f32 %v2249, %v1038
      %v2312 = vsub.f32 %v2254, %v1043
      %v2313 = vsub.f32 %v2259, %v1048
      %v2314 = vsub.f32 %v2264, %v1053
      %v2315 = vsub.f32 %v2269, %v1058
      %v2316 = vsub.f32 %v2274, %v1063
      %v2317 = vsub.f32 %v2279, %v1068
      %v2318 = vsub.f32 %v2284, %v1073
      %v2319 = vmul.f32 %v2287, %v2287
      %v2320 = vmul.f32 %v2288, %v2288
      %v2321 = vmul.f32 %v2289, %v2289
      %v2322 = vmul.f32 %v2290, %v2290
      %v2323 = vmul.f32 %v2291, %v2291
      %v2324 = vmul.f32 %v2292, %v2292
      %v2325 = vmul.f32 %v2293, %v2293
      %v2326 = vmul.f32 %v2294, %v2294
      %v2327 = vmul.f32 %v2295, %v2295
      %v2328 = vmul.f32 %v2296, %v2296
      %v2329 = vmul.f32 %v2297, %v2297
      %v2330 = vmul.f32 %v2298, %v2298
      %v2331 = vmul.f32 %v2299, %v2299
      %v2332 = vmul.f32 %v2300, %v2300
      %v2333 = vmul.f32 %v2301, %v2301
      %v2334 = vmul.f32 %v2302, %v2302
      %v2335 = vmul.f32 %v2303, %v2303
      %v2336 = vmul.f32 %v2304, %v2304
      %v2337 = vmul.f32 %v2305, %v2305
      %v2338 = vmul.f32 %v2306, %v2306
      %v2339 = vmul.f32 %v2307, %v2307
      %v2340 = vmul.f32 %v2308, %v2308
      %v2341 = vmul.f32 %v2309, %v2309
      %v2342 = vmul.f32 %v2310, %v2310
      %v2343 = vmul.f32 %v2311, %v2311
      %v2344 = vmul.f32 %v2312, %v2312
      %v2345 = vmul.f32 %v2313, %v2313
      %v2346 = vmul.f32 %v2314, %v2314
      %v2347 = vmul.f32 %v2315, %v2315
      %v2348 = vmul.f32 %v2316, %v2316
      %v2349 = vmul.f32 %v2317, %v2317
      %v2350 = vmul.f32 %v2318, %v2318
      %v2351 = vadd.f32 %v2319, 0.0
      %v2352 = vadd.f32 %v2320, 0.0
      %v2353 = vadd.f32 %v2321, 0.0
      %v2354 = vadd.f32 %v2322, 0.0
      %v2355 = vadd.f32 %v2323, 0.0
      %v2356 = vadd.f32 %v2324, 0.0
      %v2357 = vadd.f32 %v2325, 0.0
      %v2358 = vadd.f32 %v2326, 0.0
      %v2359 = vadd.f32 %v2327, 0.0
      %v2360 = vadd.f32 %v2328, 0.0
      %v2361 = vadd.f32 %v2329, 0.0
      %v2362 = vadd.f32 %v2330, 0.0
      %v2363 = vadd.f32 %v2331, 0.0
      %v2364 = vadd.f32 %v2332, 0.0
      %v2365 = vadd.f32 %v2333, 0.0
      %v2366 = vadd.f32 %v2334, 0.0
      %v2367 = vadd.f32 %v2335, 0.0
      %v2368 = vadd.f32 %v2336, 0.0
      %v2369 = vadd.f32 %v2337, 0.0
      %v2370 = vadd.f32 %v2338, 0.0
      %v2371 = vadd.f32 %v2339, 0.0
      %v2372 = vadd.f32 %v2340, 0.0
      %v2373 = vadd.f32 %v2341, 0.0
      %v2374 = vadd.f32 %v2342, 0.0
      %v2375 = vadd.f32 %v2343, 0.0
      %v2376 = vadd.f32 %v2344, 0.0
      %v2377 = vadd.f32 %v2345, 0.0
      %v2378 = vadd.f32 %v2346, 0.0
      %v2379 = vadd.f32 %v2347, 0.0
      %v2380 = vadd.f32 %v2348, 0.0
      %v2381 = vadd.f32 %v2349, 0.0
      %v2382 = vadd.f32 %v2350, 0.0
      %v2383 = vadd.f32 %v2129, 0.0
      %v2384 = vadd.f32 %v2134, 0.0
      %v2385 = vadd.f32 %v2139, 0.0
      %v2386 = vadd.f32 %v2144, 0.0
      %v2387 = vadd.f32 %v2149, 0.0
      %v2388 = vadd.f32 %v2154, 0.0
      %v2389 = vadd.f32 %v2159, 0.0
      %v2390 = vadd.f32 %v2164, 0.0
      %v2391 = vadd.f32 %v2169, 0.0
      %v2392 = vadd.f32 %v2174, 0.0
      %v2393 = vadd.f32 %v2179, 0.0
      %v2394 = vadd.f32 %v2184, 0.0
      %v2395 = vadd.f32 %v2189, 0.0
      %v2396 = vadd.f32 %v2194, 0.0
      %v2397 = vadd.f32 %v2199, 0.0
      %v2398 = vadd.f32 %v2204, 0.0
      %v2399 = vadd.f32 %v2209, 0.0
      %v2400 = vadd.f32 %v2214, 0.0
      %v2401 = vadd.f32 %v2219, 0.0
      %v2402 = vadd.f32 %v2224, 0.0
      %v2403 = vadd.f32 %v2229, 0.0
      %v2404 = vadd.f32 %v2234, 0.0
      %v2405 = vadd.f32 %v2239, 0.0
      %v2406 = vadd.f32 %v2244, 0.0
      %v2407 = vadd.f32 %v2249, 0.0
      %v2408 = vadd.f32 %v2254, 0.0
      %v2409 = vadd.f32 %v2259, 0.0
      %v2410 = vadd.f32 %v2264, 0.0
      %v2411 = vadd.f32 %v2269, 0.0
      %v2412 = vadd.f32 %v2274, 0.0
      %v2413 = vadd.f32 %v2279, 0.0
      %v2414 = vadd.f32 %v2284, 0.0
      %v2415 = vsub.f32 %v918, %v2129
      %v2416 = vsub.f32 %v923, %v2134
      %v2417 = vsub.f32 %v928, %v2139
      %v2418 = vsub.f32 %v933, %v2144
      %v2419 = vsub.f32 %v938, %v2149
      %v2420 = vsub.f32 %v943, %v2154
      %v2421 = vsub.f32 %v948, %v2159
      %v2422 = vsub.f32 %v953, %v2164
      %v2423 = vsub.f32 %v958, %v2169
      %v2424 = vsub.f32 %v963, %v2174
      %v2425 = vsub.f32 %v968, %v2179
      %v2426 = vsub.f32 %v973, %v2184
      %v2427 = vsub.f32 %v978, %v2189
      %v2428 = vsub.f32 %v983, %v2194
      %v2429 = vsub.f32 %v988, %v2199
      %v2430 = vsub.f32 %v993, %v2204
      %v2431 = vsub.f32 %v998, %v2209
      %v2432 = vsub.f32 %v1003, %v2214
      %v2433 = vsub.f32 %v1008, %v2219
      %v2434 = vsub.f32 %v1013, %v2224
      %v2435 = vsub.f32 %v1018, %v2229
      %v2436 = vsub.f32 %v1023, %v2234
      %v2437 = vsub.f32 %v1028, %v2239
      %v2438 = vsub.f32 %v1033, %v2244
      %v2439 = vsub.f32 %v1038, %v2249
      %v2440 = vsub.f32 %v1043, %v2254
      %v2441 = vsub.f32 %v1048, %v2259
      %v2442 = vsub.f32 %v1053, %v2264
      %v2443 = vsub.f32 %v1058, %v2269
      %v2444 = vsub.f32 %v1063, %v2274
      %v2445 = vsub.f32 %v1068, %v2279
      %v2446 = vsub.f32 %v1073, %v2284
      %s2447 = scalar_lea.vmem %s5, 128
      %v2448 = vld [vmem:[%s2447] sm:$0xff]
      %v2449 = vld [vmem:[%s2447 + $0x8] sm:$0xff]
      %v2450 = vld [vmem:[%s2447 + $0x10] sm:$0xff]
      %v2451 = vld [vmem:[%s2447 + $0x18] sm:$0xff]
      %v2452 = vld [vmem:[%s2447 + $0x20] sm:$0xff]
      %v2453 = vld [vmem:[%s2447 + $0x28] sm:$0xff]
      %v2454 = vld [vmem:[%s2447 + $0x30] sm:$0xff]
      %v2455 = vld [vmem:[%s2447 + $0x38] sm:$0xff]
      %v2456 = vld [vmem:[%s2447 + $0x40] sm:$0xff]
      %v2457 = vld [vmem:[%s2447 + $0x48] sm:$0xff]
      %v2458 = vld [vmem:[%s2447 + $0x50] sm:$0xff]
      %v2459 = vld [vmem:[%s2447 + $0x58] sm:$0xff]
      %v2460 = vld [vmem:[%s2447 + $0x60] sm:$0xff]
      %v2461 = vld [vmem:[%s2447 + $0x68] sm:$0xff]
      %v2462 = vld [vmem:[%s2447 + $0x70] sm:$0xff]
      %v2463 = vld [vmem:[%s2447 + $0x78] sm:$0xff]
      %s2464 = scalar_lea.vmem %s6, 1
      %v2465 = vld [vmem:[%s2464] sm:$0x1]
      %2466 = vmatprep.subr.mxu0 0.0
      %2467 = vmatpush1.msra.mxu0 %v2463
      %2468 = vmatprep.subr.mxu0 0.0
      %2469 = vmatpush1.msra.mxu0 %v2462
      %2470 = vmatprep.subr.mxu0 0.0
      %2471 = vmatpush1.msra.mxu0 %v2461
      %2472 = vmatprep.subr.mxu0 0.0
      %2473 = vmatpush1.msra.mxu0 %v2460
      %2474 = vmatprep.subr.mxu0 0.0
      %2475 = vmatpush1.msra.mxu0 %v2459
      %2476 = vmatprep.subr.mxu0 0.0
      %2477 = vmatpush1.msra.mxu0 %v2458
      %2478 = vmatprep.subr.mxu0 0.0
      %2479 = vmatpush1.msra.mxu0 %v2457
      %2480 = vmatprep.subr.mxu0 0.0
      %2481 = vmatpush1.msra.mxu0 %v2456
      %2482 = vmatprep.subr.mxu0 0.0
      %2483 = vmatpush1.msra.mxu0 %v2455
      %2484 = vmatprep.subr.mxu0 0.0
      %2485 = vmatpush1.msra.mxu0 %v2454
      %2486 = vmatprep.subr.mxu0 0.0
      %2487 = vmatpush1.msra.mxu0 %v2453
      %2488 = vmatprep.subr.mxu0 0.0
      %2489 = vmatpush1.msra.mxu0 %v2452
      %2490 = vmatprep.subr.mxu0 0.0
      %2491 = vmatpush1.msra.mxu0 %v2451
      %2492 = vmatprep.subr.mxu0 0.0
      %2493 = vmatpush1.msra.mxu0 %v2450
      %2494 = vmatprep.subr.mxu0 0.0
      %2495 = vmatpush1.msra.mxu0 %v2449
      %2496 = vmatprep.subr.mxu0 0.0
      %2497 = vmatpush1.msra.mxu0 %v2448
      %2498 = vmatprep.subr.mxu0 0.0
      %2499 = vmatpush2.msra.mxu0 0.0
      %2500 = vmatprep.subr.mxu0 0.0
      %2501 = vmatpush2.msra.mxu0 0.0
      %2502 = vmatprep.subr.mxu0 0.0
      %2503 = vmatpush2.msra.mxu0 0.0
      %2504 = vmatprep.subr.mxu0 0.0
      %2505 = vmatpush2.msra.mxu0 0.0
      %2506 = vmatprep.subr.mxu0 0.0
      %2507 = vmatpush2.msra.mxu0 0.0
      %2508 = vmatprep.subr.mxu0 0.0
      %2509 = vmatpush2.msra.mxu0 0.0
      %2510 = vmatprep.subr.mxu0 0.0
      %2511 = vmatpush2.msra.mxu0 0.0
      %2512 = vmatprep.subr.mxu0 0.0
      %2513 = vmatpush2.msra.mxu0 0.0
      %2514 = vmatprep.subr.mxu0 0.0
      %2515 = vmatpush2.msra.mxu0 0.0
      %2516 = vmatprep.subr.mxu0 0.0
      %2517 = vmatpush2.msra.mxu0 0.0
      %2518 = vmatprep.subr.mxu0 0.0
      %2519 = vmatpush2.msra.mxu0 0.0
      %2520 = vmatprep.subr.mxu0 0.0
      %2521 = vmatpush2.msra.mxu0 0.0
      %2522 = vmatprep.subr.mxu0 0.0
      %2523 = vmatpush2.msra.mxu0 0.0
      %2524 = vmatprep.subr.mxu0 0.0
      %2525 = vmatpush2.msra.mxu0 0.0
      %2526 = vmatprep.subr.mxu0 0.0
      %2527 = vmatpush2.msra.mxu0 0.0
      %2528 = vmatprep.subr.mxu0 0.0
      %2529 = vmatpush2.msra.mxu0 0.0
      %2530 = vmatprep.mubr.f32.mxu0 0.0
      %2531 = vmatmul.mubr.f32.gmra.mxu0 %v2415
      %v2532 = vpop.f32.mrf.mxu0
      %v2533 = vadd.f32 0.0, %v2532
      %v2534 = vpop.f32.mrf.mxu0
      %2535 = vmatprep.mubr.f32.mxu0 0.0
      %2536 = vmatmul.mubr.f32.gmra.mxu0 %v2416
      %v2537 = vpop.f32.mrf.mxu0
      %v2538 = vadd.f32 0.0, %v2537
      %v2539 = vpop.f32.mrf.mxu0
      %2540 = vmatprep.mubr.f32.mxu0 0.0
      %2541 = vmatmul.mubr.f32.gmra.mxu0 %v2417
      %v2542 = vpop.f32.mrf.mxu0
      %v2543 = vadd.f32 0.0, %v2542
      %v2544 = vpop.f32.mrf.mxu0
      %2545 = vmatprep.mubr.f32.mxu0 0.0
      %2546 = vmatmul.mubr.f32.gmra.mxu0 %v2418
      %v2547 = vpop.f32.mrf.mxu0
      %v2548 = vadd.f32 0.0, %v2547
      %v2549 = vpop.f32.mrf.mxu0
      %2550 = vmatprep.mubr.f32.mxu0 0.0
      %2551 = vmatmul.mubr.f32.gmra.mxu0 %v2419
      %v2552 = vpop.f32.mrf.mxu0
      %v2553 = vadd.f32 0.0, %v2552
      %v2554 = vpop.f32.mrf.mxu0
      %2555 = vmatprep.mubr.f32.mxu0 0.0
      %2556 = vmatmul.mubr.f32.gmra.mxu0 %v2420
      %v2557 = vpop.f32.mrf.mxu0
      %v2558 = vadd.f32 0.0, %v2557
      %v2559 = vpop.f32.mrf.mxu0
      %2560 = vmatprep.mubr.f32.mxu0 0.0
      %2561 = vmatmul.mubr.f32.gmra.mxu0 %v2421
      %v2562 = vpop.f32.mrf.mxu0
      %v2563 = vadd.f32 0.0, %v2562
      %v2564 = vpop.f32.mrf.mxu0
      %2565 = vmatprep.mubr.f32.mxu0 0.0
      %2566 = vmatmul.mubr.f32.gmra.mxu0 %v2422
      %v2567 = vpop.f32.mrf.mxu0
      %v2568 = vadd.f32 0.0, %v2567
      %v2569 = vpop.f32.mrf.mxu0
      %2570 = vmatprep.mubr.f32.mxu0 0.0
      %2571 = vmatmul.mubr.f32.gmra.mxu0 %v2423
      %v2572 = vpop.f32.mrf.mxu0
      %v2573 = vadd.f32 0.0, %v2572
      %v2574 = vpop.f32.mrf.mxu0
      %2575 = vmatprep.mubr.f32.mxu0 0.0
      %2576 = vmatmul.mubr.f32.gmra.mxu0 %v2424
      %v2577 = vpop.f32.mrf.mxu0
      %v2578 = vadd.f32 0.0, %v2577
      %v2579 = vpop.f32.mrf.mxu0
      %2580 = vmatprep.mubr.f32.mxu0 0.0
      %2581 = vmatmul.mubr.f32.gmra.mxu0 %v2425
      %v2582 = vpop.f32.mrf.mxu0
      %v2583 = vadd.f32 0.0, %v2582
      %v2584 = vpop.f32.mrf.mxu0
      %2585 = vmatprep.mubr.f32.mxu0 0.0
      %2586 = vmatmul.mubr.f32.gmra.mxu0 %v2426
      %v2587 = vpop.f32.mrf.mxu0
      %v2588 = vadd.f32 0.0, %v2587
      %v2589 = vpop.f32.mrf.mxu0
      %2590 = vmatprep.mubr.f32.mxu0 0.0
      %2591 = vmatmul.mubr.f32.gmra.mxu0 %v2427
      %v2592 = vpop.f32.mrf.mxu0
      %v2593 = vadd.f32 0.0, %v2592
      %v2594 = vpop.f32.mrf.mxu0
      %2595 = vmatprep.mubr.f32.mxu0 0.0
      %2596 = vmatmul.mubr.f32.gmra.mxu0 %v2428
      %v2597 = vpop.f32.mrf.mxu0
      %v2598 = vadd.f32 0.0, %v2597
      %v2599 = vpop.f32.mrf.mxu0
      %2600 = vmatprep.mubr.f32.mxu0 0.0
      %2601 = vmatmul.mubr.f32.gmra.mxu0 %v2429
      %v2602 = vpop.f32.mrf.mxu0
      %v2603 = vadd.f32 0.0, %v2602
      %v2604 = vpop.f32.mrf.mxu0
      %2605 = vmatprep.mubr.f32.mxu0 0.0
      %2606 = vmatmul.mubr.f32.gmra.mxu0 %v2430
      %v2607 = vpop.f32.mrf.mxu0
      %v2608 = vadd.f32 0.0, %v2607
      %v2609 = vpop.f32.mrf.mxu0
      %2610 = vmatprep.mubr.f32.mxu0 0.0
      %2611 = vmatmul.mubr.f32.gmra.mxu0 %v2431
      %v2612 = vpop.f32.mrf.mxu0
      %v2613 = vadd.f32 0.0, %v2612
      %v2614 = vpop.f32.mrf.mxu0
      %2615 = vmatprep.mubr.f32.mxu0 0.0
      %2616 = vmatmul.mubr.f32.gmra.mxu0 %v2432
      %v2617 = vpop.f32.mrf.mxu0
      %v2618 = vadd.f32 0.0, %v2617
      %v2619 = vpop.f32.mrf.mxu0
      %2620 = vmatprep.mubr.f32.mxu0 0.0
      %2621 = vmatmul.mubr.f32.gmra.mxu0 %v2433
      %v2622 = vpop.f32.mrf.mxu0
      %v2623 = vadd.f32 0.0, %v2622
      %v2624 = vpop.f32.mrf.mxu0
      %2625 = vmatprep.mubr.f32.mxu0 0.0
      %2626 = vmatmul.mubr.f32.gmra.mxu0 %v2434
      %v2627 = vpop.f32.mrf.mxu0
      %v2628 = vadd.f32 0.0, %v2627
      %v2629 = vpop.f32.mrf.mxu0
      %2630 = vmatprep.mubr.f32.mxu0 0.0
      %2631 = vmatmul.mubr.f32.gmra.mxu0 %v2435
      %v2632 = vpop.f32.mrf.mxu0
      %v2633 = vadd.f32 0.0, %v2632
      %v2634 = vpop.f32.mrf.mxu0
      %2635 = vmatprep.mubr.f32.mxu0 0.0
      %2636 = vmatmul.mubr.f32.gmra.mxu0 %v2436
      %v2637 = vpop.f32.mrf.mxu0
      %v2638 = vadd.f32 0.0, %v2637
      %v2639 = vpop.f32.mrf.mxu0
      %2640 = vmatprep.mubr.f32.mxu0 0.0
      %2641 = vmatmul.mubr.f32.gmra.mxu0 %v2437
      %v2642 = vpop.f32.mrf.mxu0
      %v2643 = vadd.f32 0.0, %v2642
      %v2644 = vpop.f32.mrf.mxu0
      %2645 = vmatprep.mubr.f32.mxu0 0.0
      %2646 = vmatmul.mubr.f32.gmra.mxu0 %v2438
      %v2647 = vpop.f32.mrf.mxu0
      %v2648 = vadd.f32 0.0, %v2647
      %v2649 = vpop.f32.mrf.mxu0
      %2650 = vmatprep.mubr.f32.mxu0 0.0
      %2651 = vmatmul.mubr.f32.gmra.mxu0 %v2439
      %v2652 = vpop.f32.mrf.mxu0
      %v2653 = vadd.f32 0.0, %v2652
      %v2654 = vpop.f32.mrf.mxu0
      %2655 = vmatprep.mubr.f32.mxu0 0.0
      %2656 = vmatmul.mubr.f32.gmra.mxu0 %v2440
      %v2657 = vpop.f32.mrf.mxu0
      %v2658 = vadd.f32 0.0, %v2657
      %v2659 = vpop.f32.mrf.mxu0
      %2660 = vmatprep.mubr.f32.mxu0 0.0
      %2661 = vmatmul.mubr.f32.gmra.mxu0 %v2441
      %v2662 = vpop.f32.mrf.mxu0
      %v2663 = vadd.f32 0.0, %v2662
      %v2664 = vpop.f32.mrf.mxu0
      %2665 = vmatprep.mubr.f32.mxu0 0.0
      %2666 = vmatmul.mubr.f32.gmra.mxu0 %v2442
      %v2667 = vpop.f32.mrf.mxu0
      %v2668 = vadd.f32 0.0, %v2667
      %v2669 = vpop.f32.mrf.mxu0
      %2670 = vmatprep.mubr.f32.mxu0 0.0
      %2671 = vmatmul.mubr.f32.gmra.mxu0 %v2443
      %v2672 = vpop.f32.mrf.mxu0
      %v2673 = vadd.f32 0.0, %v2672
      %v2674 = vpop.f32.mrf.mxu0
      %2675 = vmatprep.mubr.f32.mxu0 0.0
      %2676 = vmatmul.mubr.f32.gmra.mxu0 %v2444
      %v2677 = vpop.f32.mrf.mxu0
      %v2678 = vadd.f32 0.0, %v2677
      %v2679 = vpop.f32.mrf.mxu0
      %2680 = vmatprep.mubr.f32.mxu0 0.0
      %2681 = vmatmul.mubr.f32.gmra.mxu0 %v2445
      %v2682 = vpop.f32.mrf.mxu0
      %v2683 = vadd.f32 0.0, %v2682
      %v2684 = vpop.f32.mrf.mxu0
      %2685 = vmatprep.mubr.f32.mxu0 0.0
      %2686 = vmatmul.mubr.f32.gmra.mxu0 %v2446
      %v2687 = vpop.f32.mrf.mxu0
      %v2688 = vadd.f32 0.0, %v2687
      %v2689 = vpop.f32.mrf.mxu0
      %2690 = vdwg.mxu0
      %v2691 = vmul.f32 %v2533, 2.0
      %v2692 = vmul.f32 %v2538, 2.0
      %v2693 = vmul.f32 %v2543, 2.0
      %v2694 = vmul.f32 %v2548, 2.0
      %v2695 = vmul.f32 %v2553, 2.0
      %v2696 = vmul.f32 %v2558, 2.0
      %v2697 = vmul.f32 %v2563, 2.0
      %v2698 = vmul.f32 %v2568, 2.0
      %v2699 = vmul.f32 %v2573, 2.0
      %v2700 = vmul.f32 %v2578, 2.0
      %v2701 = vmul.f32 %v2583, 2.0
      %v2702 = vmul.f32 %v2588, 2.0
      %v2703 = vmul.f32 %v2593, 2.0
      %v2704 = vmul.f32 %v2598, 2.0
      %v2705 = vmul.f32 %v2603, 2.0
      %v2706 = vmul.f32 %v2608, 2.0
      %v2707 = vmul.f32 %v2613, 2.0
      %v2708 = vmul.f32 %v2618, 2.0
      %v2709 = vmul.f32 %v2623, 2.0
      %v2710 = vmul.f32 %v2628, 2.0
      %v2711 = vmul.f32 %v2633, 2.0
      %v2712 = vmul.f32 %v2638, 2.0
      %v2713 = vmul.f32 %v2643, 2.0
      %v2714 = vmul.f32 %v2648, 2.0
      %v2715 = vmul.f32 %v2653, 2.0
      %v2716 = vmul.f32 %v2658, 2.0
      %v2717 = vmul.f32 %v2663, 2.0
      %v2718 = vmul.f32 %v2668, 2.0
      %v2719 = vmul.f32 %v2673, 2.0
      %v2720 = vmul.f32 %v2678, 2.0
      %v2721 = vmul.f32 %v2683, 2.0
      %v2722 = vmul.f32 %v2688, 2.0
      %v2724 = vlaneseq
      %v2725 = vshrl.u32 %v2724, 7
      %v2726 = vsub.s32 0, %v2725
      %v2727 = vrot.slane %v2465, %v2726
      %v2729 = vsub.f32 %v2727, %v2691
      %v2730 = vsub.f32 %v2727, %v2692
      %v2731 = vsub.f32 %v2727, %v2693
      %v2732 = vsub.f32 %v2727, %v2694
      %v2733 = vsub.f32 %v2727, %v2695
      %v2734 = vsub.f32 %v2727, %v2696
      %v2735 = vsub.f32 %v2727, %v2697
      %v2736 = vsub.f32 %v2727, %v2698
      %v2737 = vsub.f32 %v2727, %v2699
      %v2738 = vsub.f32 %v2727, %v2700
      %v2739 = vsub.f32 %v2727, %v2701
      %v2740 = vsub.f32 %v2727, %v2702
      %v2741 = vsub.f32 %v2727, %v2703
      %v2742 = vsub.f32 %v2727, %v2704
      %v2743 = vsub.f32 %v2727, %v2705
      %v2744 = vsub.f32 %v2727, %v2706
      %v2745 = vsub.f32 %v2727, %v2707
      %v2746 = vsub.f32 %v2727, %v2708
      %v2747 = vsub.f32 %v2727, %v2709
      %v2748 = vsub.f32 %v2727, %v2710
      %v2749 = vsub.f32 %v2727, %v2711
      %v2750 = vsub.f32 %v2727, %v2712
      %v2751 = vsub.f32 %v2727, %v2713
      %v2752 = vsub.f32 %v2727, %v2714
      %v2753 = vsub.f32 %v2727, %v2715
      %v2754 = vsub.f32 %v2727, %v2716
      %v2755 = vsub.f32 %v2727, %v2717
      %v2756 = vsub.f32 %v2727, %v2718
      %v2757 = vsub.f32 %v2727, %v2719
      %v2758 = vsub.f32 %v2727, %v2720
      %v2759 = vsub.f32 %v2727, %v2721
      %v2760 = vsub.f32 %v2727, %v2722
      %2761 = vmin.xlane.f32.xlu0 %v2729
      %v2762 = vpop.xlane.xlu0 %2761
      %2763 = vmin.xlane.f32.xlu0 %v2730
      %v2764 = vpop.xlane.xlu0 %2763
      %2765 = vmin.xlane.f32.xlu0 %v2731
      %v2766 = vpop.xlane.xlu0 %2765
      %2767 = vmin.xlane.f32.xlu0 %v2732
      %v2768 = vpop.xlane.xlu0 %2767
      %2769 = vmin.xlane.f32.xlu0 %v2733
      %v2770 = vpop.xlane.xlu0 %2769
      %2771 = vmin.xlane.f32.xlu0 %v2734
      %v2772 = vpop.xlane.xlu0 %2771
      %2773 = vmin.xlane.f32.xlu0 %v2735
      %v2774 = vpop.xlane.xlu0 %2773
      %2775 = vmin.xlane.f32.xlu0 %v2736
      %v2776 = vpop.xlane.xlu0 %2775
      %2777 = vmin.xlane.f32.xlu0 %v2737
      %v2778 = vpop.xlane.xlu0 %2777
      %2779 = vmin.xlane.f32.xlu0 %v2738
      %v2780 = vpop.xlane.xlu0 %2779
      %2781 = vmin.xlane.f32.xlu0 %v2739
      %v2782 = vpop.xlane.xlu0 %2781
      %2783 = vmin.xlane.f32.xlu0 %v2740
      %v2784 = vpop.xlane.xlu0 %2783
      %2785 = vmin.xlane.f32.xlu0 %v2741
      %v2786 = vpop.xlane.xlu0 %2785
      %2787 = vmin.xlane.f32.xlu0 %v2742
      %v2788 = vpop.xlane.xlu0 %2787
      %2789 = vmin.xlane.f32.xlu0 %v2743
      %v2790 = vpop.xlane.xlu0 %2789
      %2791 = vmin.xlane.f32.xlu0 %v2744
      %v2792 = vpop.xlane.xlu0 %2791
      %2793 = vmin.xlane.f32.xlu0 %v2745
      %v2794 = vpop.xlane.xlu0 %2793
      %2795 = vmin.xlane.f32.xlu0 %v2746
      %v2796 = vpop.xlane.xlu0 %2795
      %2797 = vmin.xlane.f32.xlu0 %v2747
      %v2798 = vpop.xlane.xlu0 %2797
      %2799 = vmin.xlane.f32.xlu0 %v2748
      %v2800 = vpop.xlane.xlu0 %2799
      %2801 = vmin.xlane.f32.xlu0 %v2749
      %v2802 = vpop.xlane.xlu0 %2801
      %2803 = vmin.xlane.f32.xlu0 %v2750
      %v2804 = vpop.xlane.xlu0 %2803
      %2805 = vmin.xlane.f32.xlu0 %v2751
      %v2806 = vpop.xlane.xlu0 %2805
      %2807 = vmin.xlane.f32.xlu0 %v2752
      %v2808 = vpop.xlane.xlu0 %2807
      %2809 = vmin.xlane.f32.xlu0 %v2753
      %v2810 = vpop.xlane.xlu0 %2809
      %2811 = vmin.xlane.f32.xlu0 %v2754
      %v2812 = vpop.xlane.xlu0 %2811
      %2813 = vmin.xlane.f32.xlu0 %v2755
      %v2814 = vpop.xlane.xlu0 %2813
      %2815 = vmin.xlane.f32.xlu0 %v2756
      %v2816 = vpop.xlane.xlu0 %2815
      %2817 = vmin.xlane.f32.xlu0 %v2757
      %v2818 = vpop.xlane.xlu0 %2817
      %2819 = vmin.xlane.f32.xlu0 %v2758
      %v2820 = vpop.xlane.xlu0 %2819
      %2821 = vmin.xlane.f32.xlu0 %v2759
      %v2822 = vpop.xlane.xlu0 %2821
      %2823 = vmin.xlane.f32.xlu0 %v2760
      %v2824 = vpop.xlane.xlu0 %2823
      %vm2825 = vcmp.eq.f32.partialorder %v2729, %v2762
      %vm2826 = vcmp.eq.f32.partialorder %v2730, %v2764
      %vm2827 = vcmp.eq.f32.partialorder %v2731, %v2766
      %vm2828 = vcmp.eq.f32.partialorder %v2732, %v2768
      %vm2829 = vcmp.eq.f32.partialorder %v2733, %v2770
      %vm2830 = vcmp.eq.f32.partialorder %v2734, %v2772
      %vm2831 = vcmp.eq.f32.partialorder %v2735, %v2774
      %vm2832 = vcmp.eq.f32.partialorder %v2736, %v2776
      %vm2833 = vcmp.eq.f32.partialorder %v2737, %v2778
      %vm2834 = vcmp.eq.f32.partialorder %v2738, %v2780
      %vm2835 = vcmp.eq.f32.partialorder %v2739, %v2782
      %vm2836 = vcmp.eq.f32.partialorder %v2740, %v2784
      %vm2837 = vcmp.eq.f32.partialorder %v2741, %v2786
      %vm2838 = vcmp.eq.f32.partialorder %v2742, %v2788
      %vm2839 = vcmp.eq.f32.partialorder %v2743, %v2790
      %vm2840 = vcmp.eq.f32.partialorder %v2744, %v2792
      %vm2841 = vcmp.eq.f32.partialorder %v2745, %v2794
      %vm2842 = vcmp.eq.f32.partialorder %v2746, %v2796
      %vm2843 = vcmp.eq.f32.partialorder %v2747, %v2798
      %vm2844 = vcmp.eq.f32.partialorder %v2748, %v2800
      %vm2845 = vcmp.eq.f32.partialorder %v2749, %v2802
      %vm2846 = vcmp.eq.f32.partialorder %v2750, %v2804
      %vm2847 = vcmp.eq.f32.partialorder %v2751, %v2806
      %vm2848 = vcmp.eq.f32.partialorder %v2752, %v2808
      %vm2849 = vcmp.eq.f32.partialorder %v2753, %v2810
      %vm2850 = vcmp.eq.f32.partialorder %v2754, %v2812
      %vm2851 = vcmp.eq.f32.partialorder %v2755, %v2814
      %vm2852 = vcmp.eq.f32.partialorder %v2756, %v2816
      %vm2853 = vcmp.eq.f32.partialorder %v2757, %v2818
      %vm2854 = vcmp.eq.f32.partialorder %v2758, %v2820
      %vm2855 = vcmp.eq.f32.partialorder %v2759, %v2822
      %vm2856 = vcmp.eq.f32.partialorder %v2760, %v2824
      %v2857 = vsel %vm2825, %v1077, 128
      %v2858 = vsel %vm2826, %v1077, 128
      %v2859 = vsel %vm2827, %v1077, 128
      %v2860 = vsel %vm2828, %v1077, 128
      %v2861 = vsel %vm2829, %v1077, 128
      %v2862 = vsel %vm2830, %v1077, 128
      %v2863 = vsel %vm2831, %v1077, 128
      %v2864 = vsel %vm2832, %v1077, 128
      %v2865 = vsel %vm2833, %v1077, 128
      %v2866 = vsel %vm2834, %v1077, 128
      %v2867 = vsel %vm2835, %v1077, 128
      %v2868 = vsel %vm2836, %v1077, 128
      %v2869 = vsel %vm2837, %v1077, 128
      %v2870 = vsel %vm2838, %v1077, 128
      %v2871 = vsel %vm2839, %v1077, 128
      %v2872 = vsel %vm2840, %v1077, 128
      %v2873 = vsel %vm2841, %v1077, 128
      %v2874 = vsel %vm2842, %v1077, 128
      %v2875 = vsel %vm2843, %v1077, 128
      %v2876 = vsel %vm2844, %v1077, 128
      %v2877 = vsel %vm2845, %v1077, 128
      %v2878 = vsel %vm2846, %v1077, 128
      %v2879 = vsel %vm2847, %v1077, 128
      %v2880 = vsel %vm2848, %v1077, 128
      %v2881 = vsel %vm2849, %v1077, 128
      %v2882 = vsel %vm2850, %v1077, 128
      %v2883 = vsel %vm2851, %v1077, 128
      %v2884 = vsel %vm2852, %v1077, 128
      %v2885 = vsel %vm2853, %v1077, 128
      %v2886 = vsel %vm2854, %v1077, 128
      %v2887 = vsel %vm2855, %v1077, 128
      %v2888 = vsel %vm2856, %v1077, 128
      %v2889 = vand.u32 %v2857, 65535
      %v2890 = vshra.s32 %v2857, 16
      %v2891 = vcvt.s32.f32 %v2889
      %v2892 = vcvt.s32.f32 %v2890
      %2893 = vmin.xlane.f32.xlu0 %v2892
      %v2894 = vpop.xlane.xlu0 %2893
      %vm2895 = vcmp.eq.f32.partialorder %v2892, %v2894
      %v2896 = vsel %vm2895, %v2891, inf
      %2897 = vmin.xlane.f32.xlu0 %v2896
      %v2898 = vpop.xlane.xlu0 %2897
      %v2899 = vcvt.f32.s32 %v2898
      %v2900 = vcvt.f32.s32 %v2894
      %v2901 = vshll.u32 %v2900, 16
      %v2902 = vadd.s32 %v2901, %v2899
      %v2903 = vand.u32 %v2858, 65535
      %v2904 = vshra.s32 %v2858, 16
      %v2905 = vcvt.s32.f32 %v2903
      %v2906 = vcvt.s32.f32 %v2904
      %2907 = vmin.xlane.f32.xlu0 %v2906
      %v2908 = vpop.xlane.xlu0 %2907
      %vm2909 = vcmp.eq.f32.partialorder %v2906, %v2908
      %v2910 = vsel %vm2909, %v2905, inf
      %2911 = vmin.xlane.f32.xlu0 %v2910
      %v2912 = vpop.xlane.xlu0 %2911
      %v2913 = vcvt.f32.s32 %v2912
      %v2914 = vcvt.f32.s32 %v2908
      %v2915 = vshll.u32 %v2914, 16
      %v2916 = vadd.s32 %v2915, %v2913
      %v2917 = vand.u32 %v2859, 65535
      %v2918 = vshra.s32 %v2859, 16
      %v2919 = vcvt.s32.f32 %v2917
      %v2920 = vcvt.s32.f32 %v2918
      %2921 = vmin.xlane.f32.xlu0 %v2920
      %v2922 = vpop.xlane.xlu0 %2921
      %vm2923 = vcmp.eq.f32.partialorder %v2920, %v2922
      %v2924 = vsel %vm2923, %v2919, inf
      %2925 = vmin.xlane.f32.xlu0 %v2924
      %v2926 = vpop.xlane.xlu0 %2925
      %v2927 = vcvt.f32.s32 %v2926
      %v2928 = vcvt.f32.s32 %v2922
      %v2929 = vshll.u32 %v2928, 16
      %v2930 = vadd.s32 %v2929, %v2927
      %v2931 = vand.u32 %v2860, 65535
      %v2932 = vshra.s32 %v2860, 16
      %v2933 = vcvt.s32.f32 %v2931
      %v2934 = vcvt.s32.f32 %v2932
      %2935 = vmin.xlane.f32.xlu0 %v2934
      %v2936 = vpop.xlane.xlu0 %2935
      %vm2937 = vcmp.eq.f32.partialorder %v2934, %v2936
      %v2938 = vsel %vm2937, %v2933, inf
      %2939 = vmin.xlane.f32.xlu0 %v2938
      %v2940 = vpop.xlane.xlu0 %2939
      %v2941 = vcvt.f32.s32 %v2940
      %v2942 = vcvt.f32.s32 %v2936
      %v2943 = vshll.u32 %v2942, 16
      %v2944 = vadd.s32 %v2943, %v2941
      %v2945 = vand.u32 %v2861, 65535
      %v2946 = vshra.s32 %v2861, 16
      %v2947 = vcvt.s32.f32 %v2945
      %v2948 = vcvt.s32.f32 %v2946
      %2949 = vmin.xlane.f32.xlu0 %v2948
      %v2950 = vpop.xlane.xlu0 %2949
      %vm2951 = vcmp.eq.f32.partialorder %v2948, %v2950
      %v2952 = vsel %vm2951, %v2947, inf
      %2953 = vmin.xlane.f32.xlu0 %v2952
      %v2954 = vpop.xlane.xlu0 %2953
      %v2955 = vcvt.f32.s32 %v2954
      %v2956 = vcvt.f32.s32 %v2950
      %v2957 = vshll.u32 %v2956, 16
      %v2958 = vadd.s32 %v2957, %v2955
      %v2959 = vand.u32 %v2862, 65535
      %v2960 = vshra.s32 %v2862, 16
      %v2961 = vcvt.s32.f32 %v2959
      %v2962 = vcvt.s32.f32 %v2960
      %2963 = vmin.xlane.f32.xlu0 %v2962
      %v2964 = vpop.xlane.xlu0 %2963
      %vm2965 = vcmp.eq.f32.partialorder %v2962, %v2964
      %v2966 = vsel %vm2965, %v2961, inf
      %2967 = vmin.xlane.f32.xlu0 %v2966
      %v2968 = vpop.xlane.xlu0 %2967
      %v2969 = vcvt.f32.s32 %v2968
      %v2970 = vcvt.f32.s32 %v2964
      %v2971 = vshll.u32 %v2970, 16
      %v2972 = vadd.s32 %v2971, %v2969
      %v2973 = vand.u32 %v2863, 65535
      %v2974 = vshra.s32 %v2863, 16
      %v2975 = vcvt.s32.f32 %v2973
      %v2976 = vcvt.s32.f32 %v2974
      %2977 = vmin.xlane.f32.xlu0 %v2976
      %v2978 = vpop.xlane.xlu0 %2977
      %vm2979 = vcmp.eq.f32.partialorder %v2976, %v2978
      %v2980 = vsel %vm2979, %v2975, inf
      %2981 = vmin.xlane.f32.xlu0 %v2980
      %v2982 = vpop.xlane.xlu0 %2981
      %v2983 = vcvt.f32.s32 %v2982
      %v2984 = vcvt.f32.s32 %v2978
      %v2985 = vshll.u32 %v2984, 16
      %v2986 = vadd.s32 %v2985, %v2983
      %v2987 = vand.u32 %v2864, 65535
      %v2988 = vshra.s32 %v2864, 16
      %v2989 = vcvt.s32.f32 %v2987
      %v2990 = vcvt.s32.f32 %v2988
      %2991 = vmin.xlane.f32.xlu0 %v2990
      %v2992 = vpop.xlane.xlu0 %2991
      %vm2993 = vcmp.eq.f32.partialorder %v2990, %v2992
      %v2994 = vsel %vm2993, %v2989, inf
      %2995 = vmin.xlane.f32.xlu0 %v2994
      %v2996 = vpop.xlane.xlu0 %2995
      %v2997 = vcvt.f32.s32 %v2996
      %v2998 = vcvt.f32.s32 %v2992
      %v2999 = vshll.u32 %v2998, 16
      %v3000 = vadd.s32 %v2999, %v2997
      %v3001 = vand.u32 %v2865, 65535
      %v3002 = vshra.s32 %v2865, 16
      %v3003 = vcvt.s32.f32 %v3001
      %v3004 = vcvt.s32.f32 %v3002
      %3005 = vmin.xlane.f32.xlu0 %v3004
      %v3006 = vpop.xlane.xlu0 %3005
      %vm3007 = vcmp.eq.f32.partialorder %v3004, %v3006
      %v3008 = vsel %vm3007, %v3003, inf
      %3009 = vmin.xlane.f32.xlu0 %v3008
      %v3010 = vpop.xlane.xlu0 %3009
      %v3011 = vcvt.f32.s32 %v3010
      %v3012 = vcvt.f32.s32 %v3006
      %v3013 = vshll.u32 %v3012, 16
      %v3014 = vadd.s32 %v3013, %v3011
      %v3015 = vand.u32 %v2866, 65535
      %v3016 = vshra.s32 %v2866, 16
      %v3017 = vcvt.s32.f32 %v3015
      %v3018 = vcvt.s32.f32 %v3016
      %3019 = vmin.xlane.f32.xlu0 %v3018
      %v3020 = vpop.xlane.xlu0 %3019
      %vm3021 = vcmp.eq.f32.partialorder %v3018, %v3020
      %v3022 = vsel %vm3021, %v3017, inf
      %3023 = vmin.xlane.f32.xlu0 %v3022
      %v3024 = vpop.xlane.xlu0 %3023
      %v3025 = vcvt.f32.s32 %v3024
      %v3026 = vcvt.f32.s32 %v3020
      %v3027 = vshll.u32 %v3026, 16
      %v3028 = vadd.s32 %v3027, %v3025
      %v3029 = vand.u32 %v2867, 65535
      %v3030 = vshra.s32 %v2867, 16
      %v3031 = vcvt.s32.f32 %v3029
      %v3032 = vcvt.s32.f32 %v3030
      %3033 = vmin.xlane.f32.xlu0 %v3032
      %v3034 = vpop.xlane.xlu0 %3033
      %vm3035 = vcmp.eq.f32.partialorder %v3032, %v3034
      %v3036 = vsel %vm3035, %v3031, inf
      %3037 = vmin.xlane.f32.xlu0 %v3036
      %v3038 = vpop.xlane.xlu0 %3037
      %v3039 = vcvt.f32.s32 %v3038
      %v3040 = vcvt.f32.s32 %v3034
      %v3041 = vshll.u32 %v3040, 16
      %v3042 = vadd.s32 %v3041, %v3039
      %v3043 = vand.u32 %v2868, 65535
      %v3044 = vshra.s32 %v2868, 16
      %v3045 = vcvt.s32.f32 %v3043
      %v3046 = vcvt.s32.f32 %v3044
      %3047 = vmin.xlane.f32.xlu0 %v3046
      %v3048 = vpop.xlane.xlu0 %3047
      %vm3049 = vcmp.eq.f32.partialorder %v3046, %v3048
      %v3050 = vsel %vm3049, %v3045, inf
      %3051 = vmin.xlane.f32.xlu0 %v3050
      %v3052 = vpop.xlane.xlu0 %3051
      %v3053 = vcvt.f32.s32 %v3052
      %v3054 = vcvt.f32.s32 %v3048
      %v3055 = vshll.u32 %v3054, 16
      %v3056 = vadd.s32 %v3055, %v3053
      %v3057 = vand.u32 %v2869, 65535
      %v3058 = vshra.s32 %v2869, 16
      %v3059 = vcvt.s32.f32 %v3057
      %v3060 = vcvt.s32.f32 %v3058
      %3061 = vmin.xlane.f32.xlu0 %v3060
      %v3062 = vpop.xlane.xlu0 %3061
      %vm3063 = vcmp.eq.f32.partialorder %v3060, %v3062
      %v3064 = vsel %vm3063, %v3059, inf
      %3065 = vmin.xlane.f32.xlu0 %v3064
      %v3066 = vpop.xlane.xlu0 %3065
      %v3067 = vcvt.f32.s32 %v3066
      %v3068 = vcvt.f32.s32 %v3062
      %v3069 = vshll.u32 %v3068, 16
      %v3070 = vadd.s32 %v3069, %v3067
      %v3071 = vand.u32 %v2870, 65535
      %v3072 = vshra.s32 %v2870, 16
      %v3073 = vcvt.s32.f32 %v3071
      %v3074 = vcvt.s32.f32 %v3072
      %3075 = vmin.xlane.f32.xlu0 %v3074
      %v3076 = vpop.xlane.xlu0 %3075
      %vm3077 = vcmp.eq.f32.partialorder %v3074, %v3076
      %v3078 = vsel %vm3077, %v3073, inf
      %3079 = vmin.xlane.f32.xlu0 %v3078
      %v3080 = vpop.xlane.xlu0 %3079
      %v3081 = vcvt.f32.s32 %v3080
      %v3082 = vcvt.f32.s32 %v3076
      %v3083 = vshll.u32 %v3082, 16
      %v3084 = vadd.s32 %v3083, %v3081
      %v3085 = vand.u32 %v2871, 65535
      %v3086 = vshra.s32 %v2871, 16
      %v3087 = vcvt.s32.f32 %v3085
      %v3088 = vcvt.s32.f32 %v3086
      %3089 = vmin.xlane.f32.xlu0 %v3088
      %v3090 = vpop.xlane.xlu0 %3089
      %vm3091 = vcmp.eq.f32.partialorder %v3088, %v3090
      %v3092 = vsel %vm3091, %v3087, inf
      %3093 = vmin.xlane.f32.xlu0 %v3092
      %v3094 = vpop.xlane.xlu0 %3093
      %v3095 = vcvt.f32.s32 %v3094
      %v3096 = vcvt.f32.s32 %v3090
      %v3097 = vshll.u32 %v3096, 16
      %v3098 = vadd.s32 %v3097, %v3095
      %v3099 = vand.u32 %v2872, 65535
      %v3100 = vshra.s32 %v2872, 16
      %v3101 = vcvt.s32.f32 %v3099
      %v3102 = vcvt.s32.f32 %v3100
      %3103 = vmin.xlane.f32.xlu0 %v3102
      %v3104 = vpop.xlane.xlu0 %3103
      %vm3105 = vcmp.eq.f32.partialorder %v3102, %v3104
      %v3106 = vsel %vm3105, %v3101, inf
      %3107 = vmin.xlane.f32.xlu0 %v3106
      %v3108 = vpop.xlane.xlu0 %3107
      %v3109 = vcvt.f32.s32 %v3108
      %v3110 = vcvt.f32.s32 %v3104
      %v3111 = vshll.u32 %v3110, 16
      %v3112 = vadd.s32 %v3111, %v3109
      %v3113 = vand.u32 %v2873, 65535
      %v3114 = vshra.s32 %v2873, 16
      %v3115 = vcvt.s32.f32 %v3113
      %v3116 = vcvt.s32.f32 %v3114
      %3117 = vmin.xlane.f32.xlu0 %v3116
      %v3118 = vpop.xlane.xlu0 %3117
      %vm3119 = vcmp.eq.f32.partialorder %v3116, %v3118
      %v3120 = vsel %vm3119, %v3115, inf
      %3121 = vmin.xlane.f32.xlu0 %v3120
      %v3122 = vpop.xlane.xlu0 %3121
      %v3123 = vcvt.f32.s32 %v3122
      %v3124 = vcvt.f32.s32 %v3118
      %v3125 = vshll.u32 %v3124, 16
      %v3126 = vadd.s32 %v3125, %v3123
      %v3127 = vand.u32 %v2874, 65535
      %v3128 = vshra.s32 %v2874, 16
      %v3129 = vcvt.s32.f32 %v3127
      %v3130 = vcvt.s32.f32 %v3128
      %3131 = vmin.xlane.f32.xlu0 %v3130
      %v3132 = vpop.xlane.xlu0 %3131
      %vm3133 = vcmp.eq.f32.partialorder %v3130, %v3132
      %v3134 = vsel %vm3133, %v3129, inf
      %3135 = vmin.xlane.f32.xlu0 %v3134
      %v3136 = vpop.xlane.xlu0 %3135
      %v3137 = vcvt.f32.s32 %v3136
      %v3138 = vcvt.f32.s32 %v3132
      %v3139 = vshll.u32 %v3138, 16
      %v3140 = vadd.s32 %v3139, %v3137
      %v3141 = vand.u32 %v2875, 65535
      %v3142 = vshra.s32 %v2875, 16
      %v3143 = vcvt.s32.f32 %v3141
      %v3144 = vcvt.s32.f32 %v3142
      %3145 = vmin.xlane.f32.xlu0 %v3144
      %v3146 = vpop.xlane.xlu0 %3145
      %vm3147 = vcmp.eq.f32.partialorder %v3144, %v3146
      %v3148 = vsel %vm3147, %v3143, inf
      %3149 = vmin.xlane.f32.xlu0 %v3148
      %v3150 = vpop.xlane.xlu0 %3149
      %v3151 = vcvt.f32.s32 %v3150
      %v3152 = vcvt.f32.s32 %v3146
      %v3153 = vshll.u32 %v3152, 16
      %v3154 = vadd.s32 %v3153, %v3151
      %v3155 = vand.u32 %v2876, 65535
      %v3156 = vshra.s32 %v2876, 16
      %v3157 = vcvt.s32.f32 %v3155
      %v3158 = vcvt.s32.f32 %v3156
      %3159 = vmin.xlane.f32.xlu0 %v3158
      %v3160 = vpop.xlane.xlu0 %3159
      %vm3161 = vcmp.eq.f32.partialorder %v3158, %v3160
      %v3162 = vsel %vm3161, %v3157, inf
      %3163 = vmin.xlane.f32.xlu0 %v3162
      %v3164 = vpop.xlane.xlu0 %3163
      %v3165 = vcvt.f32.s32 %v3164
      %v3166 = vcvt.f32.s32 %v3160
      %v3167 = vshll.u32 %v3166, 16
      %v3168 = vadd.s32 %v3167, %v3165
      %v3169 = vand.u32 %v2877, 65535
      %v3170 = vshra.s32 %v2877, 16
      %v3171 = vcvt.s32.f32 %v3169
      %v3172 = vcvt.s32.f32 %v3170
      %3173 = vmin.xlane.f32.xlu0 %v3172
      %v3174 = vpop.xlane.xlu0 %3173
      %vm3175 = vcmp.eq.f32.partialorder %v3172, %v3174
      %v3176 = vsel %vm3175, %v3171, inf
      %3177 = vmin.xlane.f32.xlu0 %v3176
      %v3178 = vpop.xlane.xlu0 %3177
      %v3179 = vcvt.f32.s32 %v3178
      %v3180 = vcvt.f32.s32 %v3174
      %v3181 = vshll.u32 %v3180, 16
      %v3182 = vadd.s32 %v3181, %v3179
      %v3183 = vand.u32 %v2878, 65535
      %v3184 = vshra.s32 %v2878, 16
      %v3185 = vcvt.s32.f32 %v3183
      %v3186 = vcvt.s32.f32 %v3184
      %3187 = vmin.xlane.f32.xlu0 %v3186
      %v3188 = vpop.xlane.xlu0 %3187
      %vm3189 = vcmp.eq.f32.partialorder %v3186, %v3188
      %v3190 = vsel %vm3189, %v3185, inf
      %3191 = vmin.xlane.f32.xlu0 %v3190
      %v3192 = vpop.xlane.xlu0 %3191
      %v3193 = vcvt.f32.s32 %v3192
      %v3194 = vcvt.f32.s32 %v3188
      %v3195 = vshll.u32 %v3194, 16
      %v3196 = vadd.s32 %v3195, %v3193
      %v3197 = vand.u32 %v2879, 65535
      %v3198 = vshra.s32 %v2879, 16
      %v3199 = vcvt.s32.f32 %v3197
      %v3200 = vcvt.s32.f32 %v3198
      %3201 = vmin.xlane.f32.xlu0 %v3200
      %v3202 = vpop.xlane.xlu0 %3201
      %vm3203 = vcmp.eq.f32.partialorder %v3200, %v3202
      %v3204 = vsel %vm3203, %v3199, inf
      %3205 = vmin.xlane.f32.xlu0 %v3204
      %v3206 = vpop.xlane.xlu0 %3205
      %v3207 = vcvt.f32.s32 %v3206
      %v3208 = vcvt.f32.s32 %v3202
      %v3209 = vshll.u32 %v3208, 16
      %v3210 = vadd.s32 %v3209, %v3207
      %v3211 = vand.u32 %v2880, 65535
      %v3212 = vshra.s32 %v2880, 16
      %v3213 = vcvt.s32.f32 %v3211
      %v3214 = vcvt.s32.f32 %v3212
      %3215 = vmin.xlane.f32.xlu0 %v3214
      %v3216 = vpop.xlane.xlu0 %3215
      %vm3217 = vcmp.eq.f32.partialorder %v3214, %v3216
      %v3218 = vsel %vm3217, %v3213, inf
      %3219 = vmin.xlane.f32.xlu0 %v3218
      %v3220 = vpop.xlane.xlu0 %3219
      %v3221 = vcvt.f32.s32 %v3220
      %v3222 = vcvt.f32.s32 %v3216
      %v3223 = vshll.u32 %v3222, 16
      %v3224 = vadd.s32 %v3223, %v3221
      %v3225 = vand.u32 %v2881, 65535
      %v3226 = vshra.s32 %v2881, 16
      %v3227 = vcvt.s32.f32 %v3225
      %v3228 = vcvt.s32.f32 %v3226
      %3229 = vmin.xlane.f32.xlu0 %v3228
      %v3230 = vpop.xlane.xlu0 %3229
      %vm3231 = vcmp.eq.f32.partialorder %v3228, %v3230
      %v3232 = vsel %vm3231, %v3227, inf
      %3233 = vmin.xlane.f32.xlu0 %v3232
      %v3234 = vpop.xlane.xlu0 %3233
      %v3235 = vcvt.f32.s32 %v3234
      %v3236 = vcvt.f32.s32 %v3230
      %v3237 = vshll.u32 %v3236, 16
      %v3238 = vadd.s32 %v3237, %v3235
      %v3239 = vand.u32 %v2882, 65535
      %v3240 = vshra.s32 %v2882, 16
      %v3241 = vcvt.s32.f32 %v3239
      %v3242 = vcvt.s32.f32 %v3240
      %3243 = vmin.xlane.f32.xlu0 %v3242
      %v3244 = vpop.xlane.xlu0 %3243
      %vm3245 = vcmp.eq.f32.partialorder %v3242, %v3244
      %v3246 = vsel %vm3245, %v3241, inf
      %3247 = vmin.xlane.f32.xlu0 %v3246
      %v3248 = vpop.xlane.xlu0 %3247
      %v3249 = vcvt.f32.s32 %v3248
      %v3250 = vcvt.f32.s32 %v3244
      %v3251 = vshll.u32 %v3250, 16
      %v3252 = vadd.s32 %v3251, %v3249
      %v3253 = vand.u32 %v2883, 65535
      %v3254 = vshra.s32 %v2883, 16
      %v3255 = vcvt.s32.f32 %v3253
      %v3256 = vcvt.s32.f32 %v3254
      %3257 = vmin.xlane.f32.xlu0 %v3256
      %v3258 = vpop.xlane.xlu0 %3257
      %vm3259 = vcmp.eq.f32.partialorder %v3256, %v3258
      %v3260 = vsel %vm3259, %v3255, inf
      %3261 = vmin.xlane.f32.xlu0 %v3260
      %v3262 = vpop.xlane.xlu0 %3261
      %v3263 = vcvt.f32.s32 %v3262
      %v3264 = vcvt.f32.s32 %v3258
      %v3265 = vshll.u32 %v3264, 16
      %v3266 = vadd.s32 %v3265, %v3263
      %v3267 = vand.u32 %v2884, 65535
      %v3268 = vshra.s32 %v2884, 16
      %v3269 = vcvt.s32.f32 %v3267
      %v3270 = vcvt.s32.f32 %v3268
      %3271 = vmin.xlane.f32.xlu0 %v3270
      %v3272 = vpop.xlane.xlu0 %3271
      %vm3273 = vcmp.eq.f32.partialorder %v3270, %v3272
      %v3274 = vsel %vm3273, %v3269, inf
      %3275 = vmin.xlane.f32.xlu0 %v3274
      %v3276 = vpop.xlane.xlu0 %3275
      %v3277 = vcvt.f32.s32 %v3276
      %v3278 = vcvt.f32.s32 %v3272
      %v3279 = vshll.u32 %v3278, 16
      %v3280 = vadd.s32 %v3279, %v3277
      %v3281 = vand.u32 %v2885, 65535
      %v3282 = vshra.s32 %v2885, 16
      %v3283 = vcvt.s32.f32 %v3281
      %v3284 = vcvt.s32.f32 %v3282
      %3285 = vmin.xlane.f32.xlu0 %v3284
      %v3286 = vpop.xlane.xlu0 %3285
      %vm3287 = vcmp.eq.f32.partialorder %v3284, %v3286
      %v3288 = vsel %vm3287, %v3283, inf
      %3289 = vmin.xlane.f32.xlu0 %v3288
      %v3290 = vpop.xlane.xlu0 %3289
      %v3291 = vcvt.f32.s32 %v3290
      %v3292 = vcvt.f32.s32 %v3286
      %v3293 = vshll.u32 %v3292, 16
      %v3294 = vadd.s32 %v3293, %v3291
      %v3295 = vand.u32 %v2886, 65535
      %v3296 = vshra.s32 %v2886, 16
      %v3297 = vcvt.s32.f32 %v3295
      %v3298 = vcvt.s32.f32 %v3296
      %3299 = vmin.xlane.f32.xlu0 %v3298
      %v3300 = vpop.xlane.xlu0 %3299
      %vm3301 = vcmp.eq.f32.partialorder %v3298, %v3300
      %v3302 = vsel %vm3301, %v3297, inf
      %3303 = vmin.xlane.f32.xlu0 %v3302
      %v3304 = vpop.xlane.xlu0 %3303
      %v3305 = vcvt.f32.s32 %v3304
      %v3306 = vcvt.f32.s32 %v3300
      %v3307 = vshll.u32 %v3306, 16
      %v3308 = vadd.s32 %v3307, %v3305
      %v3309 = vand.u32 %v2887, 65535
      %v3310 = vshra.s32 %v2887, 16
      %v3311 = vcvt.s32.f32 %v3309
      %v3312 = vcvt.s32.f32 %v3310
      %3313 = vmin.xlane.f32.xlu0 %v3312
      %v3314 = vpop.xlane.xlu0 %3313
      %vm3315 = vcmp.eq.f32.partialorder %v3312, %v3314
      %v3316 = vsel %vm3315, %v3311, inf
      %3317 = vmin.xlane.f32.xlu0 %v3316
      %v3318 = vpop.xlane.xlu0 %3317
      %v3319 = vcvt.f32.s32 %v3318
      %v3320 = vcvt.f32.s32 %v3314
      %v3321 = vshll.u32 %v3320, 16
      %v3322 = vadd.s32 %v3321, %v3319
      %v3323 = vand.u32 %v2888, 65535
      %v3324 = vshra.s32 %v2888, 16
      %v3325 = vcvt.s32.f32 %v3323
      %v3326 = vcvt.s32.f32 %v3324
      %3327 = vmin.xlane.f32.xlu0 %v3326
      %v3328 = vpop.xlane.xlu0 %3327
      %vm3329 = vcmp.eq.f32.partialorder %v3326, %v3328
      %v3330 = vsel %vm3329, %v3325, inf
      %3331 = vmin.xlane.f32.xlu0 %v3330
      %v3332 = vpop.xlane.xlu0 %3331
      %v3333 = vcvt.f32.s32 %v3332
      %v3334 = vcvt.f32.s32 %v3328
      %v3335 = vshll.u32 %v3334, 16
      %v3336 = vadd.s32 %v3335, %v3333
      %vm3337 = vcmp.eq.s32.totalorder %v1077, %v2902
      %vm3338 = vcmp.eq.s32.totalorder %v1077, %v2916
      %vm3339 = vcmp.eq.s32.totalorder %v1077, %v2930
      %vm3340 = vcmp.eq.s32.totalorder %v1077, %v2944
      %vm3341 = vcmp.eq.s32.totalorder %v1077, %v2958
      %vm3342 = vcmp.eq.s32.totalorder %v1077, %v2972
      %vm3343 = vcmp.eq.s32.totalorder %v1077, %v2986
      %vm3344 = vcmp.eq.s32.totalorder %v1077, %v3000
      %vm3345 = vcmp.eq.s32.totalorder %v1077, %v3014
      %vm3346 = vcmp.eq.s32.totalorder %v1077, %v3028
      %vm3347 = vcmp.eq.s32.totalorder %v1077, %v3042
      %vm3348 = vcmp.eq.s32.totalorder %v1077, %v3056
      %vm3349 = vcmp.eq.s32.totalorder %v1077, %v3070
      %vm3350 = vcmp.eq.s32.totalorder %v1077, %v3084
      %vm3351 = vcmp.eq.s32.totalorder %v1077, %v3098
      %vm3352 = vcmp.eq.s32.totalorder %v1077, %v3112
      %vm3353 = vcmp.eq.s32.totalorder %v1077, %v3126
      %vm3354 = vcmp.eq.s32.totalorder %v1077, %v3140
      %vm3355 = vcmp.eq.s32.totalorder %v1077, %v3154
      %vm3356 = vcmp.eq.s32.totalorder %v1077, %v3168
      %vm3357 = vcmp.eq.s32.totalorder %v1077, %v3182
      %vm3358 = vcmp.eq.s32.totalorder %v1077, %v3196
      %vm3359 = vcmp.eq.s32.totalorder %v1077, %v3210
      %vm3360 = vcmp.eq.s32.totalorder %v1077, %v3224
      %vm3361 = vcmp.eq.s32.totalorder %v1077, %v3238
      %vm3362 = vcmp.eq.s32.totalorder %v1077, %v3252
      %vm3363 = vcmp.eq.s32.totalorder %v1077, %v3266
      %vm3364 = vcmp.eq.s32.totalorder %v1077, %v3280
      %vm3365 = vcmp.eq.s32.totalorder %v1077, %v3294
      %vm3366 = vcmp.eq.s32.totalorder %v1077, %v3308
      %vm3367 = vcmp.eq.s32.totalorder %v1077, %v3322
      %vm3368 = vcmp.eq.s32.totalorder %v1077, %v3336
      %v3369 = vsel %vm3337, 1, 0
      %v3370 = vsel %vm3338, 1, 0
      %v3371 = vsel %vm3339, 1, 0
      %v3372 = vsel %vm3340, 1, 0
      %v3373 = vsel %vm3341, 1, 0
      %v3374 = vsel %vm3342, 1, 0
      %v3375 = vsel %vm3343, 1, 0
      %v3376 = vsel %vm3344, 1, 0
      %v3377 = vsel %vm3345, 1, 0
      %v3378 = vsel %vm3346, 1, 0
      %v3379 = vsel %vm3347, 1, 0
      %v3380 = vsel %vm3348, 1, 0
      %v3381 = vsel %vm3349, 1, 0
      %v3382 = vsel %vm3350, 1, 0
      %v3383 = vsel %vm3351, 1, 0
      %v3384 = vsel %vm3352, 1, 0
      %v3385 = vsel %vm3353, 1, 0
      %v3386 = vsel %vm3354, 1, 0
      %v3387 = vsel %vm3355, 1, 0
      %v3388 = vsel %vm3356, 1, 0
      %v3389 = vsel %vm3357, 1, 0
      %v3390 = vsel %vm3358, 1, 0
      %v3391 = vsel %vm3359, 1, 0
      %v3392 = vsel %vm3360, 1, 0
      %v3393 = vsel %vm3361, 1, 0
      %v3394 = vsel %vm3362, 1, 0
      %v3395 = vsel %vm3363, 1, 0
      %v3396 = vsel %vm3364, 1, 0
      %v3397 = vsel %vm3365, 1, 0
      %v3398 = vsel %vm3366, 1, 0
      %v3399 = vsel %vm3367, 1, 0
      %v3400 = vsel %vm3368, 1, 0
      %v3401 = vcvt.s32.f32 %v3369
      %v3402 = vcvt.s32.f32 %v3370
      %v3403 = vcvt.s32.f32 %v3371
      %v3404 = vcvt.s32.f32 %v3372
      %v3405 = vcvt.s32.f32 %v3373
      %v3406 = vcvt.s32.f32 %v3374
      %v3407 = vcvt.s32.f32 %v3375
      %v3408 = vcvt.s32.f32 %v3376
      %v3409 = vcvt.s32.f32 %v3377
      %v3410 = vcvt.s32.f32 %v3378
      %v3411 = vcvt.s32.f32 %v3379
      %v3412 = vcvt.s32.f32 %v3380
      %v3413 = vcvt.s32.f32 %v3381
      %v3414 = vcvt.s32.f32 %v3382
      %v3415 = vcvt.s32.f32 %v3383
      %v3416 = vcvt.s32.f32 %v3384
      %v3417 = vcvt.s32.f32 %v3385
      %v3418 = vcvt.s32.f32 %v3386
      %v3419 = vcvt.s32.f32 %v3387
      %v3420 = vcvt.s32.f32 %v3388
      %v3421 = vcvt.s32.f32 %v3389
      %v3422 = vcvt.s32.f32 %v3390
      %v3423 = vcvt.s32.f32 %v3391
      %v3424 = vcvt.s32.f32 %v3392
      %v3425 = vcvt.s32.f32 %v3393
      %v3426 = vcvt.s32.f32 %v3394
      %v3427 = vcvt.s32.f32 %v3395
      %v3428 = vcvt.s32.f32 %v3396
      %v3429 = vcvt.s32.f32 %v3397
      %v3430 = vcvt.s32.f32 %v3398
      %v3431 = vcvt.s32.f32 %v3399
      %v3432 = vcvt.s32.f32 %v3400
      %3433 = vmatprep.subr.mxu0 0.0
      %3434 = vmatpush1.xpose.msra.mxu0 %v2463
      %3435 = vmatprep.subr.mxu0 0.0
      %3436 = vmatpush1.xpose.msra.mxu0 %v2462
      %3437 = vmatprep.subr.mxu0 0.0
      %3438 = vmatpush1.xpose.msra.mxu0 %v2461
      %3439 = vmatprep.subr.mxu0 0.0
      %3440 = vmatpush1.xpose.msra.mxu0 %v2460
      %3441 = vmatprep.subr.mxu0 0.0
      %3442 = vmatpush1.xpose.msra.mxu0 %v2459
      %3443 = vmatprep.subr.mxu0 0.0
      %3444 = vmatpush1.xpose.msra.mxu0 %v2458
      %3445 = vmatprep.subr.mxu0 0.0
      %3446 = vmatpush1.xpose.msra.mxu0 %v2457
      %3447 = vmatprep.subr.mxu0 0.0
      %3448 = vmatpush1.xpose.msra.mxu0 %v2456
      %3449 = vmatprep.subr.mxu0 0.0
      %3450 = vmatpush1.xpose.msra.mxu0 %v2455
      %3451 = vmatprep.subr.mxu0 0.0
      %3452 = vmatpush1.xpose.msra.mxu0 %v2454
      %3453 = vmatprep.subr.mxu0 0.0
      %3454 = vmatpush1.xpose.msra.mxu0 %v2453
      %3455 = vmatprep.subr.mxu0 0.0
      %3456 = vmatpush1.xpose.msra.mxu0 %v2452
      %3457 = vmatprep.subr.mxu0 0.0
      %3458 = vmatpush1.xpose.msra.mxu0 %v2451
      %3459 = vmatprep.subr.mxu0 0.0
      %3460 = vmatpush1.xpose.msra.mxu0 %v2450
      %3461 = vmatprep.subr.mxu0 0.0
      %3462 = vmatpush1.xpose.msra.mxu0 %v2449
      %3463 = vmatprep.subr.mxu0 0.0
      %3464 = vmatpush1.xpose.msra.mxu0 %v2448
      %3465 = vmatprep.subr.mxu0 0.0
      %3466 = vmatpush2.xpose.msra.mxu0 0.0
      %3467 = vmatprep.subr.mxu0 0.0
      %3468 = vmatpush2.xpose.msra.mxu0 0.0
      %3469 = vmatprep.subr.mxu0 0.0
      %3470 = vmatpush2.xpose.msra.mxu0 0.0
      %3471 = vmatprep.subr.mxu0 0.0
      %3472 = vmatpush2.xpose.msra.mxu0 0.0
      %3473 = vmatprep.subr.mxu0 0.0
      %3474 = vmatpush2.xpose.msra.mxu0 0.0
      %3475 = vmatprep.subr.mxu0 0.0
      %3476 = vmatpush2.xpose.msra.mxu0 0.0
      %3477 = vmatprep.subr.mxu0 0.0
      %3478 = vmatpush2.xpose.msra.mxu0 0.0
      %3479 = vmatprep.subr.mxu0 0.0
      %3480 = vmatpush2.xpose.msra.mxu0 0.0
      %3481 = vmatprep.subr.mxu0 0.0
      %3482 = vmatpush2.xpose.msra.mxu0 0.0
      %3483 = vmatprep.subr.mxu0 0.0
      %3484 = vmatpush2.xpose.msra.mxu0 0.0
      %3485 = vmatprep.subr.mxu0 0.0
      %3486 = vmatpush2.xpose.msra.mxu0 0.0
      %3487 = vmatprep.subr.mxu0 0.0
      %3488 = vmatpush2.xpose.msra.mxu0 0.0
      %3489 = vmatprep.subr.mxu0 0.0
      %3490 = vmatpush2.xpose.msra.mxu0 0.0
      %3491 = vmatprep.subr.mxu0 0.0
      %3492 = vmatpush2.xpose.msra.mxu0 0.0
      %3493 = vmatprep.subr.mxu0 0.0
      %3494 = vmatpush2.xpose.msra.mxu0 0.0
      %3495 = vmatprep.subr.mxu0 0.0
      %3496 = vmatpush2.xpose.msra.mxu0 0.0
      %3497 = vmatprep.mubr.f32.mxu0 0.0
      %3498 = vmatmul.mubr.f32.gmra.mxu0 %v3401
      %v3499 = vpop.f32.mrf.mxu0
      %v3500 = vadd.f32 0.0, %v3499
      %v3501 = vpop.f32.mrf.mxu0
      %3502 = vmatprep.mubr.f32.mxu0 0.0
      %3503 = vmatmul.mubr.f32.gmra.mxu0 %v3402
      %v3504 = vpop.f32.mrf.mxu0
      %v3505 = vadd.f32 0.0, %v3504
      %v3506 = vpop.f32.mrf.mxu0
      %3507 = vmatprep.mubr.f32.mxu0 0.0
      %3508 = vmatmul.mubr.f32.gmra.mxu0 %v3403
      %v3509 = vpop.f32.mrf.mxu0
      %v3510 = vadd.f32 0.0, %v3509
      %v3511 = vpop.f32.mrf.mxu0
      %3512 = vmatprep.mubr.f32.mxu0 0.0
      %3513 = vmatmul.mubr.f32.gmra.mxu0 %v3404
      %v3514 = vpop.f32.mrf.mxu0
      %v3515 = vadd.f32 0.0, %v3514
      %v3516 = vpop.f32.mrf.mxu0
      %3517 = vmatprep.mubr.f32.mxu0 0.0
      %3518 = vmatmul.mubr.f32.gmra.mxu0 %v3405
      %v3519 = vpop.f32.mrf.mxu0
      %v3520 = vadd.f32 0.0, %v3519
      %v3521 = vpop.f32.mrf.mxu0
      %3522 = vmatprep.mubr.f32.mxu0 0.0
      %3523 = vmatmul.mubr.f32.gmra.mxu0 %v3406
      %v3524 = vpop.f32.mrf.mxu0
      %v3525 = vadd.f32 0.0, %v3524
      %v3526 = vpop.f32.mrf.mxu0
      %3527 = vmatprep.mubr.f32.mxu0 0.0
      %3528 = vmatmul.mubr.f32.gmra.mxu0 %v3407
      %v3529 = vpop.f32.mrf.mxu0
      %v3530 = vadd.f32 0.0, %v3529
      %v3531 = vpop.f32.mrf.mxu0
      %3532 = vmatprep.mubr.f32.mxu0 0.0
      %3533 = vmatmul.mubr.f32.gmra.mxu0 %v3408
      %v3534 = vpop.f32.mrf.mxu0
      %v3535 = vadd.f32 0.0, %v3534
      %v3536 = vpop.f32.mrf.mxu0
      %3537 = vmatprep.mubr.f32.mxu0 0.0
      %3538 = vmatmul.mubr.f32.gmra.mxu0 %v3409
      %v3539 = vpop.f32.mrf.mxu0
      %v3540 = vadd.f32 0.0, %v3539
      %v3541 = vpop.f32.mrf.mxu0
      %3542 = vmatprep.mubr.f32.mxu0 0.0
      %3543 = vmatmul.mubr.f32.gmra.mxu0 %v3410
      %v3544 = vpop.f32.mrf.mxu0
      %v3545 = vadd.f32 0.0, %v3544
      %v3546 = vpop.f32.mrf.mxu0
      %3547 = vmatprep.mubr.f32.mxu0 0.0
      %3548 = vmatmul.mubr.f32.gmra.mxu0 %v3411
      %v3549 = vpop.f32.mrf.mxu0
      %v3550 = vadd.f32 0.0, %v3549
      %v3551 = vpop.f32.mrf.mxu0
      %3552 = vmatprep.mubr.f32.mxu0 0.0
      %3553 = vmatmul.mubr.f32.gmra.mxu0 %v3412
      %v3554 = vpop.f32.mrf.mxu0
      %v3555 = vadd.f32 0.0, %v3554
      %v3556 = vpop.f32.mrf.mxu0
      %3557 = vmatprep.mubr.f32.mxu0 0.0
      %3558 = vmatmul.mubr.f32.gmra.mxu0 %v3413
      %v3559 = vpop.f32.mrf.mxu0
      %v3560 = vadd.f32 0.0, %v3559
      %v3561 = vpop.f32.mrf.mxu0
      %3562 = vmatprep.mubr.f32.mxu0 0.0
      %3563 = vmatmul.mubr.f32.gmra.mxu0 %v3414
      %v3564 = vpop.f32.mrf.mxu0
      %v3565 = vadd.f32 0.0, %v3564
      %v3566 = vpop.f32.mrf.mxu0
      %3567 = vmatprep.mubr.f32.mxu0 0.0
      %3568 = vmatmul.mubr.f32.gmra.mxu0 %v3415
      %v3569 = vpop.f32.mrf.mxu0
      %v3570 = vadd.f32 0.0, %v3569
      %v3571 = vpop.f32.mrf.mxu0
      %3572 = vmatprep.mubr.f32.mxu0 0.0
      %3573 = vmatmul.mubr.f32.gmra.mxu0 %v3416
      %v3574 = vpop.f32.mrf.mxu0
      %v3575 = vadd.f32 0.0, %v3574
      %v3576 = vpop.f32.mrf.mxu0
      %3577 = vmatprep.mubr.f32.mxu0 0.0
      %3578 = vmatmul.mubr.f32.gmra.mxu0 %v3417
      %v3579 = vpop.f32.mrf.mxu0
      %v3580 = vadd.f32 0.0, %v3579
      %v3581 = vpop.f32.mrf.mxu0
      %3582 = vmatprep.mubr.f32.mxu0 0.0
      %3583 = vmatmul.mubr.f32.gmra.mxu0 %v3418
      %v3584 = vpop.f32.mrf.mxu0
      %v3585 = vadd.f32 0.0, %v3584
      %v3586 = vpop.f32.mrf.mxu0
      %3587 = vmatprep.mubr.f32.mxu0 0.0
      %3588 = vmatmul.mubr.f32.gmra.mxu0 %v3419
      %v3589 = vpop.f32.mrf.mxu0
      %v3590 = vadd.f32 0.0, %v3589
      %v3591 = vpop.f32.mrf.mxu0
      %3592 = vmatprep.mubr.f32.mxu0 0.0
      %3593 = vmatmul.mubr.f32.gmra.mxu0 %v3420
      %v3594 = vpop.f32.mrf.mxu0
      %v3595 = vadd.f32 0.0, %v3594
      %v3596 = vpop.f32.mrf.mxu0
      %3597 = vmatprep.mubr.f32.mxu0 0.0
      %3598 = vmatmul.mubr.f32.gmra.mxu0 %v3421
      %v3599 = vpop.f32.mrf.mxu0
      %v3600 = vadd.f32 0.0, %v3599
      %v3601 = vpop.f32.mrf.mxu0
      %3602 = vmatprep.mubr.f32.mxu0 0.0
      %3603 = vmatmul.mubr.f32.gmra.mxu0 %v3422
      %v3604 = vpop.f32.mrf.mxu0
      %v3605 = vadd.f32 0.0, %v3604
      %v3606 = vpop.f32.mrf.mxu0
      %3607 = vmatprep.mubr.f32.mxu0 0.0
      %3608 = vmatmul.mubr.f32.gmra.mxu0 %v3423
      %v3609 = vpop.f32.mrf.mxu0
      %v3610 = vadd.f32 0.0, %v3609
      %v3611 = vpop.f32.mrf.mxu0
      %3612 = vmatprep.mubr.f32.mxu0 0.0
      %3613 = vmatmul.mubr.f32.gmra.mxu0 %v3424
      %v3614 = vpop.f32.mrf.mxu0
      %v3615 = vadd.f32 0.0, %v3614
      %v3616 = vpop.f32.mrf.mxu0
      %3617 = vmatprep.mubr.f32.mxu0 0.0
      %3618 = vmatmul.mubr.f32.gmra.mxu0 %v3425
      %v3619 = vpop.f32.mrf.mxu0
      %v3620 = vadd.f32 0.0, %v3619
      %v3621 = vpop.f32.mrf.mxu0
      %3622 = vmatprep.mubr.f32.mxu0 0.0
      %3623 = vmatmul.mubr.f32.gmra.mxu0 %v3426
      %v3624 = vpop.f32.mrf.mxu0
      %v3625 = vadd.f32 0.0, %v3624
      %v3626 = vpop.f32.mrf.mxu0
      %3627 = vmatprep.mubr.f32.mxu0 0.0
      %3628 = vmatmul.mubr.f32.gmra.mxu0 %v3427
      %v3629 = vpop.f32.mrf.mxu0
      %v3630 = vadd.f32 0.0, %v3629
      %v3631 = vpop.f32.mrf.mxu0
      %3632 = vmatprep.mubr.f32.mxu0 0.0
      %3633 = vmatmul.mubr.f32.gmra.mxu0 %v3428
      %v3634 = vpop.f32.mrf.mxu0
      %v3635 = vadd.f32 0.0, %v3634
      %v3636 = vpop.f32.mrf.mxu0
      %3637 = vmatprep.mubr.f32.mxu0 0.0
      %3638 = vmatmul.mubr.f32.gmra.mxu0 %v3429
      %v3639 = vpop.f32.mrf.mxu0
      %v3640 = vadd.f32 0.0, %v3639
      %v3641 = vpop.f32.mrf.mxu0
      %3642 = vmatprep.mubr.f32.mxu0 0.0
      %3643 = vmatmul.mubr.f32.gmra.mxu0 %v3430
      %v3644 = vpop.f32.mrf.mxu0
      %v3645 = vadd.f32 0.0, %v3644
      %v3646 = vpop.f32.mrf.mxu0
      %3647 = vmatprep.mubr.f32.mxu0 0.0
      %3648 = vmatmul.mubr.f32.gmra.mxu0 %v3431
      %v3649 = vpop.f32.mrf.mxu0
      %v3650 = vadd.f32 0.0, %v3649
      %v3651 = vpop.f32.mrf.mxu0
      %3652 = vmatprep.mubr.f32.mxu0 0.0
      %3653 = vmatmul.mubr.f32.gmra.mxu0 %v3432
      %v3654 = vpop.f32.mrf.mxu0
      %v3655 = vadd.f32 0.0, %v3654
      %v3656 = vpop.f32.mrf.mxu0
      %3657 = vdwg.mxu0
      %v3658 = vsub.f32 %v3500, %v2415
      %v3659 = vsub.f32 %v3505, %v2416
      %v3660 = vsub.f32 %v3510, %v2417
      %v3661 = vsub.f32 %v3515, %v2418
      %v3662 = vsub.f32 %v3520, %v2419
      %v3663 = vsub.f32 %v3525, %v2420
      %v3664 = vsub.f32 %v3530, %v2421
      %v3665 = vsub.f32 %v3535, %v2422
      %v3666 = vsub.f32 %v3540, %v2423
      %v3667 = vsub.f32 %v3545, %v2424
      %v3668 = vsub.f32 %v3550, %v2425
      %v3669 = vsub.f32 %v3555, %v2426
      %v3670 = vsub.f32 %v3560, %v2427
      %v3671 = vsub.f32 %v3565, %v2428
      %v3672 = vsub.f32 %v3570, %v2429
      %v3673 = vsub.f32 %v3575, %v2430
      %v3674 = vsub.f32 %v3580, %v2431
      %v3675 = vsub.f32 %v3585, %v2432
      %v3676 = vsub.f32 %v3590, %v2433
      %v3677 = vsub.f32 %v3595, %v2434
      %v3678 = vsub.f32 %v3600, %v2435
      %v3679 = vsub.f32 %v3605, %v2436
      %v3680 = vsub.f32 %v3610, %v2437
      %v3681 = vsub.f32 %v3615, %v2438
      %v3682 = vsub.f32 %v3620, %v2439
      %v3683 = vsub.f32 %v3625, %v2440
      %v3684 = vsub.f32 %v3630, %v2441
      %v3685 = vsub.f32 %v3635, %v2442
      %v3686 = vsub.f32 %v3640, %v2443
      %v3687 = vsub.f32 %v3645, %v2444
      %v3688 = vsub.f32 %v3650, %v2445
      %v3689 = vsub.f32 %v3655, %v2446
      %v3690 = vmul.f32 %v3658, %v3658
      %v3691 = vmul.f32 %v3659, %v3659
      %v3692 = vmul.f32 %v3660, %v3660
      %v3693 = vmul.f32 %v3661, %v3661
      %v3694 = vmul.f32 %v3662, %v3662
      %v3695 = vmul.f32 %v3663, %v3663
      %v3696 = vmul.f32 %v3664, %v3664
      %v3697 = vmul.f32 %v3665, %v3665
      %v3698 = vmul.f32 %v3666, %v3666
      %v3699 = vmul.f32 %v3667, %v3667
      %v3700 = vmul.f32 %v3668, %v3668
      %v3701 = vmul.f32 %v3669, %v3669
      %v3702 = vmul.f32 %v3670, %v3670
      %v3703 = vmul.f32 %v3671, %v3671
      %v3704 = vmul.f32 %v3672, %v3672
      %v3705 = vmul.f32 %v3673, %v3673
      %v3706 = vmul.f32 %v3674, %v3674
      %v3707 = vmul.f32 %v3675, %v3675
      %v3708 = vmul.f32 %v3676, %v3676
      %v3709 = vmul.f32 %v3677, %v3677
      %v3710 = vmul.f32 %v3678, %v3678
      %v3711 = vmul.f32 %v3679, %v3679
      %v3712 = vmul.f32 %v3680, %v3680
      %v3713 = vmul.f32 %v3681, %v3681
      %v3714 = vmul.f32 %v3682, %v3682
      %v3715 = vmul.f32 %v3683, %v3683
      %v3716 = vmul.f32 %v3684, %v3684
      %v3717 = vmul.f32 %v3685, %v3685
      %v3718 = vmul.f32 %v3686, %v3686
      %v3719 = vmul.f32 %v3687, %v3687
      %v3720 = vmul.f32 %v3688, %v3688
      %v3721 = vmul.f32 %v3689, %v3689
      %v3722 = vadd.f32 %v2351, %v3690
      %v3723 = vadd.f32 %v2352, %v3691
      %v3724 = vadd.f32 %v2353, %v3692
      %v3725 = vadd.f32 %v2354, %v3693
      %v3726 = vadd.f32 %v2355, %v3694
      %v3727 = vadd.f32 %v2356, %v3695
      %v3728 = vadd.f32 %v2357, %v3696
      %v3729 = vadd.f32 %v2358, %v3697
      %v3730 = vadd.f32 %v2359, %v3698
      %v3731 = vadd.f32 %v2360, %v3699
      %v3732 = vadd.f32 %v2361, %v3700
      %v3733 = vadd.f32 %v2362, %v3701
      %v3734 = vadd.f32 %v2363, %v3702
      %v3735 = vadd.f32 %v2364, %v3703
      %v3736 = vadd.f32 %v2365, %v3704
      %v3737 = vadd.f32 %v2366, %v3705
      %v3738 = vadd.f32 %v2367, %v3706
      %v3739 = vadd.f32 %v2368, %v3707
      %v3740 = vadd.f32 %v2369, %v3708
      %v3741 = vadd.f32 %v2370, %v3709
      %v3742 = vadd.f32 %v2371, %v3710
      %v3743 = vadd.f32 %v2372, %v3711
      %v3744 = vadd.f32 %v2373, %v3712
      %v3745 = vadd.f32 %v2374, %v3713
      %v3746 = vadd.f32 %v2375, %v3714
      %v3747 = vadd.f32 %v2376, %v3715
      %v3748 = vadd.f32 %v2377, %v3716
      %v3749 = vadd.f32 %v2378, %v3717
      %v3750 = vadd.f32 %v2379, %v3718
      %v3751 = vadd.f32 %v2380, %v3719
      %v3752 = vadd.f32 %v2381, %v3720
      %v3753 = vadd.f32 %v2382, %v3721
      %v3754 = vadd.f32 %v2383, %v3500
      %v3755 = vadd.f32 %v2384, %v3505
      %v3756 = vadd.f32 %v2385, %v3510
      %v3757 = vadd.f32 %v2386, %v3515
      %v3758 = vadd.f32 %v2387, %v3520
      %v3759 = vadd.f32 %v2388, %v3525
      %v3760 = vadd.f32 %v2389, %v3530
      %v3761 = vadd.f32 %v2390, %v3535
      %v3762 = vadd.f32 %v2391, %v3540
      %v3763 = vadd.f32 %v2392, %v3545
      %v3764 = vadd.f32 %v2393, %v3550
      %v3765 = vadd.f32 %v2394, %v3555
      %v3766 = vadd.f32 %v2395, %v3560
      %v3767 = vadd.f32 %v2396, %v3565
      %v3768 = vadd.f32 %v2397, %v3570
      %v3769 = vadd.f32 %v2398, %v3575
      %v3770 = vadd.f32 %v2399, %v3580
      %v3771 = vadd.f32 %v2400, %v3585
      %v3772 = vadd.f32 %v2401, %v3590
      %v3773 = vadd.f32 %v2402, %v3595
      %v3774 = vadd.f32 %v2403, %v3600
      %v3775 = vadd.f32 %v2404, %v3605
      %v3776 = vadd.f32 %v2405, %v3610
      %v3777 = vadd.f32 %v2406, %v3615
      %v3778 = vadd.f32 %v2407, %v3620
      %v3779 = vadd.f32 %v2408, %v3625
      %v3780 = vadd.f32 %v2409, %v3630
      %v3781 = vadd.f32 %v2410, %v3635
      %v3782 = vadd.f32 %v2411, %v3640
      %v3783 = vadd.f32 %v2412, %v3645
      %v3784 = vadd.f32 %v2413, %v3650
      %v3785 = vadd.f32 %v2414, %v3655
      %v3786 = vsub.f32 %v2415, %v3500
      %v3787 = vsub.f32 %v2416, %v3505
      %v3788 = vsub.f32 %v2417, %v3510
      %v3789 = vsub.f32 %v2418, %v3515
      %v3790 = vsub.f32 %v2419, %v3520
      %v3791 = vsub.f32 %v2420, %v3525
      %v3792 = vsub.f32 %v2421, %v3530
      %v3793 = vsub.f32 %v2422, %v3535
      %v3794 = vsub.f32 %v2423, %v3540
      %v3795 = vsub.f32 %v2424, %v3545
      %v3796 = vsub.f32 %v2425, %v3550
      %v3797 = vsub.f32 %v2426, %v3555
      %v3798 = vsub.f32 %v2427, %v3560
      %v3799 = vsub.f32 %v2428, %v3565
      %v3800 = vsub.f32 %v2429, %v3570
      %v3801 = vsub.f32 %v2430, %v3575
      %v3802 = vsub.f32 %v2431, %v3580
      %v3803 = vsub.f32 %v2432, %v3585
      %v3804 = vsub.f32 %v2433, %v3590
      %v3805 = vsub.f32 %v2434, %v3595
      %v3806 = vsub.f32 %v2435, %v3600
      %v3807 = vsub.f32 %v2436, %v3605
      %v3808 = vsub.f32 %v2437, %v3610
      %v3809 = vsub.f32 %v2438, %v3615
      %v3810 = vsub.f32 %v2439, %v3620
      %v3811 = vsub.f32 %v2440, %v3625
      %v3812 = vsub.f32 %v2441, %v3630
      %v3813 = vsub.f32 %v2442, %v3635
      %v3814 = vsub.f32 %v2443, %v3640
      %v3815 = vsub.f32 %v2444, %v3645
      %v3816 = vsub.f32 %v2445, %v3650
      %v3817 = vsub.f32 %v2446, %v3655
      %s3818 = scalar_lea.vmem %s5, 256
      %v3819 = vld [vmem:[%s3818] sm:$0xff]
      %v3820 = vld [vmem:[%s3818 + $0x8] sm:$0xff]
      %v3821 = vld [vmem:[%s3818 + $0x10] sm:$0xff]
      %v3822 = vld [vmem:[%s3818 + $0x18] sm:$0xff]
      %v3823 = vld [vmem:[%s3818 + $0x20] sm:$0xff]
      %v3824 = vld [vmem:[%s3818 + $0x28] sm:$0xff]
      %v3825 = vld [vmem:[%s3818 + $0x30] sm:$0xff]
      %v3826 = vld [vmem:[%s3818 + $0x38] sm:$0xff]
      %v3827 = vld [vmem:[%s3818 + $0x40] sm:$0xff]
      %v3828 = vld [vmem:[%s3818 + $0x48] sm:$0xff]
      %v3829 = vld [vmem:[%s3818 + $0x50] sm:$0xff]
      %v3830 = vld [vmem:[%s3818 + $0x58] sm:$0xff]
      %v3831 = vld [vmem:[%s3818 + $0x60] sm:$0xff]
      %v3832 = vld [vmem:[%s3818 + $0x68] sm:$0xff]
      %v3833 = vld [vmem:[%s3818 + $0x70] sm:$0xff]
      %v3834 = vld [vmem:[%s3818 + $0x78] sm:$0xff]
      %s3835 = scalar_lea.vmem %s6, 2
      %v3836 = vld [vmem:[%s3835] sm:$0x1]
      %3837 = vmatprep.subr.mxu0 0.0
      %3838 = vmatpush1.msra.mxu0 %v3834
      %3839 = vmatprep.subr.mxu0 0.0
      %3840 = vmatpush1.msra.mxu0 %v3833
      %3841 = vmatprep.subr.mxu0 0.0
      %3842 = vmatpush1.msra.mxu0 %v3832
      %3843 = vmatprep.subr.mxu0 0.0
      %3844 = vmatpush1.msra.mxu0 %v3831
      %3845 = vmatprep.subr.mxu0 0.0
      %3846 = vmatpush1.msra.mxu0 %v3830
      %3847 = vmatprep.subr.mxu0 0.0
      %3848 = vmatpush1.msra.mxu0 %v3829
      %3849 = vmatprep.subr.mxu0 0.0
      %3850 = vmatpush1.msra.mxu0 %v3828
      %3851 = vmatprep.subr.mxu0 0.0
      %3852 = vmatpush1.msra.mxu0 %v3827
      %3853 = vmatprep.subr.mxu0 0.0
      %3854 = vmatpush1.msra.mxu0 %v3826
      %3855 = vmatprep.subr.mxu0 0.0
      %3856 = vmatpush1.msra.mxu0 %v3825
      %3857 = vmatprep.subr.mxu0 0.0
      %3858 = vmatpush1.msra.mxu0 %v3824
      %3859 = vmatprep.subr.mxu0 0.0
      %3860 = vmatpush1.msra.mxu0 %v3823
      %3861 = vmatprep.subr.mxu0 0.0
      %3862 = vmatpush1.msra.mxu0 %v3822
      %3863 = vmatprep.subr.mxu0 0.0
      %3864 = vmatpush1.msra.mxu0 %v3821
      %3865 = vmatprep.subr.mxu0 0.0
      %3866 = vmatpush1.msra.mxu0 %v3820
      %3867 = vmatprep.subr.mxu0 0.0
      %3868 = vmatpush1.msra.mxu0 %v3819
      %3869 = vmatprep.subr.mxu0 0.0
      %3870 = vmatpush2.msra.mxu0 0.0
      %3871 = vmatprep.subr.mxu0 0.0
      %3872 = vmatpush2.msra.mxu0 0.0
      %3873 = vmatprep.subr.mxu0 0.0
      %3874 = vmatpush2.msra.mxu0 0.0
      %3875 = vmatprep.subr.mxu0 0.0
      %3876 = vmatpush2.msra.mxu0 0.0
      %3877 = vmatprep.subr.mxu0 0.0
      %3878 = vmatpush2.msra.mxu0 0.0
      %3879 = vmatprep.subr.mxu0 0.0
      %3880 = vmatpush2.msra.mxu0 0.0
      %3881 = vmatprep.subr.mxu0 0.0
      %3882 = vmatpush2.msra.mxu0 0.0
      %3883 = vmatprep.subr.mxu0 0.0
      %3884 = vmatpush2.msra.mxu0 0.0
      %3885 = vmatprep.subr.mxu0 0.0
      %3886 = vmatpush2.msra.mxu0 0.0
      %3887 = vmatprep.subr.mxu0 0.0
      %3888 = vmatpush2.msra.mxu0 0.0
      %3889 = vmatprep.subr.mxu0 0.0
      %3890 = vmatpush2.msra.mxu0 0.0
      %3891 = vmatprep.subr.mxu0 0.0
      %3892 = vmatpush2.msra.mxu0 0.0
      %3893 = vmatprep.subr.mxu0 0.0
      %3894 = vmatpush2.msra.mxu0 0.0
      %3895 = vmatprep.subr.mxu0 0.0
      %3896 = vmatpush2.msra.mxu0 0.0
      %3897 = vmatprep.subr.mxu0 0.0
      %3898 = vmatpush2.msra.mxu0 0.0
      %3899 = vmatprep.subr.mxu0 0.0
      %3900 = vmatpush2.msra.mxu0 0.0
      %3901 = vmatprep.mubr.f32.mxu0 0.0
      %3902 = vmatmul.mubr.f32.gmra.mxu0 %v3786
      %v3903 = vpop.f32.mrf.mxu0
      %v3904 = vadd.f32 0.0, %v3903
      %v3905 = vpop.f32.mrf.mxu0
      %3906 = vmatprep.mubr.f32.mxu0 0.0
      %3907 = vmatmul.mubr.f32.gmra.mxu0 %v3787
      %v3908 = vpop.f32.mrf.mxu0
      %v3909 = vadd.f32 0.0, %v3908
      %v3910 = vpop.f32.mrf.mxu0
      %3911 = vmatprep.mubr.f32.mxu0 0.0
      %3912 = vmatmul.mubr.f32.gmra.mxu0 %v3788
      %v3913 = vpop.f32.mrf.mxu0
      %v3914 = vadd.f32 0.0, %v3913
      %v3915 = vpop.f32.mrf.mxu0
      %3916 = vmatprep.mubr.f32.mxu0 0.0
      %3917 = vmatmul.mubr.f32.gmra.mxu0 %v3789
      %v3918 = vpop.f32.mrf.mxu0
      %v3919 = vadd.f32 0.0, %v3918
      %v3920 = vpop.f32.mrf.mxu0
      %3921 = vmatprep.mubr.f32.mxu0 0.0
      %3922 = vmatmul.mubr.f32.gmra.mxu0 %v3790
      %v3923 = vpop.f32.mrf.mxu0
      %v3924 = vadd.f32 0.0, %v3923
      %v3925 = vpop.f32.mrf.mxu0
      %3926 = vmatprep.mubr.f32.mxu0 0.0
      %3927 = vmatmul.mubr.f32.gmra.mxu0 %v3791
      %v3928 = vpop.f32.mrf.mxu0
      %v3929 = vadd.f32 0.0, %v3928
      %v3930 = vpop.f32.mrf.mxu0
      %3931 = vmatprep.mubr.f32.mxu0 0.0
      %3932 = vmatmul.mubr.f32.gmra.mxu0 %v3792
      %v3933 = vpop.f32.mrf.mxu0
      %v3934 = vadd.f32 0.0, %v3933
      %v3935 = vpop.f32.mrf.mxu0
      %3936 = vmatprep.mubr.f32.mxu0 0.0
      %3937 = vmatmul.mubr.f32.gmra.mxu0 %v3793
      %v3938 = vpop.f32.mrf.mxu0
      %v3939 = vadd.f32 0.0, %v3938
      %v3940 = vpop.f32.mrf.mxu0
      %3941 = vmatprep.mubr.f32.mxu0 0.0
      %3942 = vmatmul.mubr.f32.gmra.mxu0 %v3794
      %v3943 = vpop.f32.mrf.mxu0
      %v3944 = vadd.f32 0.0, %v3943
      %v3945 = vpop.f32.mrf.mxu0
      %3946 = vmatprep.mubr.f32.mxu0 0.0
      %3947 = vmatmul.mubr.f32.gmra.mxu0 %v3795
      %v3948 = vpop.f32.mrf.mxu0
      %v3949 = vadd.f32 0.0, %v3948
      %v3950 = vpop.f32.mrf.mxu0
      %3951 = vmatprep.mubr.f32.mxu0 0.0
      %3952 = vmatmul.mubr.f32.gmra.mxu0 %v3796
      %v3953 = vpop.f32.mrf.mxu0
      %v3954 = vadd.f32 0.0, %v3953
      %v3955 = vpop.f32.mrf.mxu0
      %3956 = vmatprep.mubr.f32.mxu0 0.0
      %3957 = vmatmul.mubr.f32.gmra.mxu0 %v3797
      %v3958 = vpop.f32.mrf.mxu0
      %v3959 = vadd.f32 0.0, %v3958
      %v3960 = vpop.f32.mrf.mxu0
      %3961 = vmatprep.mubr.f32.mxu0 0.0
      %3962 = vmatmul.mubr.f32.gmra.mxu0 %v3798
      %v3963 = vpop.f32.mrf.mxu0
      %v3964 = vadd.f32 0.0, %v3963
      %v3965 = vpop.f32.mrf.mxu0
      %3966 = vmatprep.mubr.f32.mxu0 0.0
      %3967 = vmatmul.mubr.f32.gmra.mxu0 %v3799
      %v3968 = vpop.f32.mrf.mxu0
      %v3969 = vadd.f32 0.0, %v3968
      %v3970 = vpop.f32.mrf.mxu0
      %3971 = vmatprep.mubr.f32.mxu0 0.0
      %3972 = vmatmul.mubr.f32.gmra.mxu0 %v3800
      %v3973 = vpop.f32.mrf.mxu0
      %v3974 = vadd.f32 0.0, %v3973
      %v3975 = vpop.f32.mrf.mxu0
      %3976 = vmatprep.mubr.f32.mxu0 0.0
      %3977 = vmatmul.mubr.f32.gmra.mxu0 %v3801
      %v3978 = vpop.f32.mrf.mxu0
      %v3979 = vadd.f32 0.0, %v3978
      %v3980 = vpop.f32.mrf.mxu0
      %3981 = vmatprep.mubr.f32.mxu0 0.0
      %3982 = vmatmul.mubr.f32.gmra.mxu0 %v3802
      %v3983 = vpop.f32.mrf.mxu0
      %v3984 = vadd.f32 0.0, %v3983
      %v3985 = vpop.f32.mrf.mxu0
      %3986 = vmatprep.mubr.f32.mxu0 0.0
      %3987 = vmatmul.mubr.f32.gmra.mxu0 %v3803
      %v3988 = vpop.f32.mrf.mxu0
      %v3989 = vadd.f32 0.0, %v3988
      %v3990 = vpop.f32.mrf.mxu0
      %3991 = vmatprep.mubr.f32.mxu0 0.0
      %3992 = vmatmul.mubr.f32.gmra.mxu0 %v3804
      %v3993 = vpop.f32.mrf.mxu0
      %v3994 = vadd.f32 0.0, %v3993
      %v3995 = vpop.f32.mrf.mxu0
      %3996 = vmatprep.mubr.f32.mxu0 0.0
      %3997 = vmatmul.mubr.f32.gmra.mxu0 %v3805
      %v3998 = vpop.f32.mrf.mxu0
      %v3999 = vadd.f32 0.0, %v3998
      %v4000 = vpop.f32.mrf.mxu0
      %4001 = vmatprep.mubr.f32.mxu0 0.0
      %4002 = vmatmul.mubr.f32.gmra.mxu0 %v3806
      %v4003 = vpop.f32.mrf.mxu0
      %v4004 = vadd.f32 0.0, %v4003
      %v4005 = vpop.f32.mrf.mxu0
      %4006 = vmatprep.mubr.f32.mxu0 0.0
      %4007 = vmatmul.mubr.f32.gmra.mxu0 %v3807
      %v4008 = vpop.f32.mrf.mxu0
      %v4009 = vadd.f32 0.0, %v4008
      %v4010 = vpop.f32.mrf.mxu0
      %4011 = vmatprep.mubr.f32.mxu0 0.0
      %4012 = vmatmul.mubr.f32.gmra.mxu0 %v3808
      %v4013 = vpop.f32.mrf.mxu0
      %v4014 = vadd.f32 0.0, %v4013
      %v4015 = vpop.f32.mrf.mxu0
      %4016 = vmatprep.mubr.f32.mxu0 0.0
      %4017 = vmatmul.mubr.f32.gmra.mxu0 %v3809
      %v4018 = vpop.f32.mrf.mxu0
      %v4019 = vadd.f32 0.0, %v4018
      %v4020 = vpop.f32.mrf.mxu0
      %4021 = vmatprep.mubr.f32.mxu0 0.0
      %4022 = vmatmul.mubr.f32.gmra.mxu0 %v3810
      %v4023 = vpop.f32.mrf.mxu0
      %v4024 = vadd.f32 0.0, %v4023
      %v4025 = vpop.f32.mrf.mxu0
      %4026 = vmatprep.mubr.f32.mxu0 0.0
      %4027 = vmatmul.mubr.f32.gmra.mxu0 %v3811
      %v4028 = vpop.f32.mrf.mxu0
      %v4029 = vadd.f32 0.0, %v4028
      %v4030 = vpop.f32.mrf.mxu0
      %4031 = vmatprep.mubr.f32.mxu0 0.0
      %4032 = vmatmul.mubr.f32.gmra.mxu0 %v3812
      %v4033 = vpop.f32.mrf.mxu0
      %v4034 = vadd.f32 0.0, %v4033
      %v4035 = vpop.f32.mrf.mxu0
      %4036 = vmatprep.mubr.f32.mxu0 0.0
      %4037 = vmatmul.mubr.f32.gmra.mxu0 %v3813
      %v4038 = vpop.f32.mrf.mxu0
      %v4039 = vadd.f32 0.0, %v4038
      %v4040 = vpop.f32.mrf.mxu0
      %4041 = vmatprep.mubr.f32.mxu0 0.0
      %4042 = vmatmul.mubr.f32.gmra.mxu0 %v3814
      %v4043 = vpop.f32.mrf.mxu0
      %v4044 = vadd.f32 0.0, %v4043
      %v4045 = vpop.f32.mrf.mxu0
      %4046 = vmatprep.mubr.f32.mxu0 0.0
      %4047 = vmatmul.mubr.f32.gmra.mxu0 %v3815
      %v4048 = vpop.f32.mrf.mxu0
      %v4049 = vadd.f32 0.0, %v4048
      %v4050 = vpop.f32.mrf.mxu0
      %4051 = vmatprep.mubr.f32.mxu0 0.0
      %4052 = vmatmul.mubr.f32.gmra.mxu0 %v3816
      %v4053 = vpop.f32.mrf.mxu0
      %v4054 = vadd.f32 0.0, %v4053
      %v4055 = vpop.f32.mrf.mxu0
      %4056 = vmatprep.mubr.f32.mxu0 0.0
      %4057 = vmatmul.mubr.f32.gmra.mxu0 %v3817
      %v4058 = vpop.f32.mrf.mxu0
      %v4059 = vadd.f32 0.0, %v4058
      %v4060 = vpop.f32.mrf.mxu0
      %4061 = vdwg.mxu0
      %v4062 = vmul.f32 %v3904, 2.0
      %v4063 = vmul.f32 %v3909, 2.0
      %v4064 = vmul.f32 %v3914, 2.0
      %v4065 = vmul.f32 %v3919, 2.0
      %v4066 = vmul.f32 %v3924, 2.0
      %v4067 = vmul.f32 %v3929, 2.0
      %v4068 = vmul.f32 %v3934, 2.0
      %v4069 = vmul.f32 %v3939, 2.0
      %v4070 = vmul.f32 %v3944, 2.0
      %v4071 = vmul.f32 %v3949, 2.0
      %v4072 = vmul.f32 %v3954, 2.0
      %v4073 = vmul.f32 %v3959, 2.0
      %v4074 = vmul.f32 %v3964, 2.0
      %v4075 = vmul.f32 %v3969, 2.0
      %v4076 = vmul.f32 %v3974, 2.0
      %v4077 = vmul.f32 %v3979, 2.0
      %v4078 = vmul.f32 %v3984, 2.0
      %v4079 = vmul.f32 %v3989, 2.0
      %v4080 = vmul.f32 %v3994, 2.0
      %v4081 = vmul.f32 %v3999, 2.0
      %v4082 = vmul.f32 %v4004, 2.0
      %v4083 = vmul.f32 %v4009, 2.0
      %v4084 = vmul.f32 %v4014, 2.0
      %v4085 = vmul.f32 %v4019, 2.0
      %v4086 = vmul.f32 %v4024, 2.0
      %v4087 = vmul.f32 %v4029, 2.0
      %v4088 = vmul.f32 %v4034, 2.0
      %v4089 = vmul.f32 %v4039, 2.0
      %v4090 = vmul.f32 %v4044, 2.0
      %v4091 = vmul.f32 %v4049, 2.0
      %v4092 = vmul.f32 %v4054, 2.0
      %v4093 = vmul.f32 %v4059, 2.0
      %v4095 = vlaneseq
      %v4096 = vshrl.u32 %v4095, 7
      %v4097 = vsub.s32 0, %v4096
      %v4098 = vrot.slane %v3836, %v4097
      %v4100 = vsub.f32 %v4098, %v4062
      %v4101 = vsub.f32 %v4098, %v4063
      %v4102 = vsub.f32 %v4098, %v4064
      %v4103 = vsub.f32 %v4098, %v4065
      %v4104 = vsub.f32 %v4098, %v4066
      %v4105 = vsub.f32 %v4098, %v4067
      %v4106 = vsub.f32 %v4098, %v4068
      %v4107 = vsub.f32 %v4098, %v4069
      %v4108 = vsub.f32 %v4098, %v4070
      %v4109 = vsub.f32 %v4098, %v4071
      %v4110 = vsub.f32 %v4098, %v4072
      %v4111 = vsub.f32 %v4098, %v4073
      %v4112 = vsub.f32 %v4098, %v4074
      %v4113 = vsub.f32 %v4098, %v4075
      %v4114 = vsub.f32 %v4098, %v4076
      %v4115 = vsub.f32 %v4098, %v4077
      %v4116 = vsub.f32 %v4098, %v4078
      %v4117 = vsub.f32 %v4098, %v4079
      %v4118 = vsub.f32 %v4098, %v4080
      %v4119 = vsub.f32 %v4098, %v4081
      %v4120 = vsub.f32 %v4098, %v4082
      %v4121 = vsub.f32 %v4098, %v4083
      %v4122 = vsub.f32 %v4098, %v4084
      %v4123 = vsub.f32 %v4098, %v4085
      %v4124 = vsub.f32 %v4098, %v4086
      %v4125 = vsub.f32 %v4098, %v4087
      %v4126 = vsub.f32 %v4098, %v4088
      %v4127 = vsub.f32 %v4098, %v4089
      %v4128 = vsub.f32 %v4098, %v4090
      %v4129 = vsub.f32 %v4098, %v4091
      %v4130 = vsub.f32 %v4098, %v4092
      %v4131 = vsub.f32 %v4098, %v4093
      %4132 = vmin.xlane.f32.xlu0 %v4100
      %v4133 = vpop.xlane.xlu0 %4132
      %4134 = vmin.xlane.f32.xlu0 %v4101
      %v4135 = vpop.xlane.xlu0 %4134
      %4136 = vmin.xlane.f32.xlu0 %v4102
      %v4137 = vpop.xlane.xlu0 %4136
      %4138 = vmin.xlane.f32.xlu0 %v4103
      %v4139 = vpop.xlane.xlu0 %4138
      %4140 = vmin.xlane.f32.xlu0 %v4104
      %v4141 = vpop.xlane.xlu0 %4140
      %4142 = vmin.xlane.f32.xlu0 %v4105
      %v4143 = vpop.xlane.xlu0 %4142
      %4144 = vmin.xlane.f32.xlu0 %v4106
      %v4145 = vpop.xlane.xlu0 %4144
      %4146 = vmin.xlane.f32.xlu0 %v4107
      %v4147 = vpop.xlane.xlu0 %4146
      %4148 = vmin.xlane.f32.xlu0 %v4108
      %v4149 = vpop.xlane.xlu0 %4148
      %4150 = vmin.xlane.f32.xlu0 %v4109
      %v4151 = vpop.xlane.xlu0 %4150
      %4152 = vmin.xlane.f32.xlu0 %v4110
      %v4153 = vpop.xlane.xlu0 %4152
      %4154 = vmin.xlane.f32.xlu0 %v4111
      %v4155 = vpop.xlane.xlu0 %4154
      %4156 = vmin.xlane.f32.xlu0 %v4112
      %v4157 = vpop.xlane.xlu0 %4156
      %4158 = vmin.xlane.f32.xlu0 %v4113
      %v4159 = vpop.xlane.xlu0 %4158
      %4160 = vmin.xlane.f32.xlu0 %v4114
      %v4161 = vpop.xlane.xlu0 %4160
      %4162 = vmin.xlane.f32.xlu0 %v4115
      %v4163 = vpop.xlane.xlu0 %4162
      %4164 = vmin.xlane.f32.xlu0 %v4116
      %v4165 = vpop.xlane.xlu0 %4164
      %4166 = vmin.xlane.f32.xlu0 %v4117
      %v4167 = vpop.xlane.xlu0 %4166
      %4168 = vmin.xlane.f32.xlu0 %v4118
      %v4169 = vpop.xlane.xlu0 %4168
      %4170 = vmin.xlane.f32.xlu0 %v4119
      %v4171 = vpop.xlane.xlu0 %4170
      %4172 = vmin.xlane.f32.xlu0 %v4120
      %v4173 = vpop.xlane.xlu0 %4172
      %4174 = vmin.xlane.f32.xlu0 %v4121
      %v4175 = vpop.xlane.xlu0 %4174
      %4176 = vmin.xlane.f32.xlu0 %v4122
      %v4177 = vpop.xlane.xlu0 %4176
      %4178 = vmin.xlane.f32.xlu0 %v4123
      %v4179 = vpop.xlane.xlu0 %4178
      %4180 = vmin.xlane.f32.xlu0 %v4124
      %v4181 = vpop.xlane.xlu0 %4180
      %4182 = vmin.xlane.f32.xlu0 %v4125
      %v4183 = vpop.xlane.xlu0 %4182
      %4184 = vmin.xlane.f32.xlu0 %v4126
      %v4185 = vpop.xlane.xlu0 %4184
      %4186 = vmin.xlane.f32.xlu0 %v4127
      %v4187 = vpop.xlane.xlu0 %4186
      %4188 = vmin.xlane.f32.xlu0 %v4128
      %v4189 = vpop.xlane.xlu0 %4188
      %4190 = vmin.xlane.f32.xlu0 %v4129
      %v4191 = vpop.xlane.xlu0 %4190
      %4192 = vmin.xlane.f32.xlu0 %v4130
      %v4193 = vpop.xlane.xlu0 %4192
      %4194 = vmin.xlane.f32.xlu0 %v4131
      %v4195 = vpop.xlane.xlu0 %4194
      %vm4196 = vcmp.eq.f32.partialorder %v4100, %v4133
      %vm4197 = vcmp.eq.f32.partialorder %v4101, %v4135
      %vm4198 = vcmp.eq.f32.partialorder %v4102, %v4137
      %vm4199 = vcmp.eq.f32.partialorder %v4103, %v4139
      %vm4200 = vcmp.eq.f32.partialorder %v4104, %v4141
      %vm4201 = vcmp.eq.f32.partialorder %v4105, %v4143
      %vm4202 = vcmp.eq.f32.partialorder %v4106, %v4145
      %vm4203 = vcmp.eq.f32.partialorder %v4107, %v4147
      %vm4204 = vcmp.eq.f32.partialorder %v4108, %v4149
      %vm4205 = vcmp.eq.f32.partialorder %v4109, %v4151
      %vm4206 = vcmp.eq.f32.partialorder %v4110, %v4153
      %vm4207 = vcmp.eq.f32.partialorder %v4111, %v4155
      %vm4208 = vcmp.eq.f32.partialorder %v4112, %v4157
      %vm4209 = vcmp.eq.f32.partialorder %v4113, %v4159
      %vm4210 = vcmp.eq.f32.partialorder %v4114, %v4161
      %vm4211 = vcmp.eq.f32.partialorder %v4115, %v4163
      %vm4212 = vcmp.eq.f32.partialorder %v4116, %v4165
      %vm4213 = vcmp.eq.f32.partialorder %v4117, %v4167
      %vm4214 = vcmp.eq.f32.partialorder %v4118, %v4169
      %vm4215 = vcmp.eq.f32.partialorder %v4119, %v4171
      %vm4216 = vcmp.eq.f32.partialorder %v4120, %v4173
      %vm4217 = vcmp.eq.f32.partialorder %v4121, %v4175
      %vm4218 = vcmp.eq.f32.partialorder %v4122, %v4177
      %vm4219 = vcmp.eq.f32.partialorder %v4123, %v4179
      %vm4220 = vcmp.eq.f32.partialorder %v4124, %v4181
      %vm4221 = vcmp.eq.f32.partialorder %v4125, %v4183
      %vm4222 = vcmp.eq.f32.partialorder %v4126, %v4185
      %vm4223 = vcmp.eq.f32.partialorder %v4127, %v4187
      %vm4224 = vcmp.eq.f32.partialorder %v4128, %v4189
      %vm4225 = vcmp.eq.f32.partialorder %v4129, %v4191
      %vm4226 = vcmp.eq.f32.partialorder %v4130, %v4193
      %vm4227 = vcmp.eq.f32.partialorder %v4131, %v4195
      %v4228 = vsel %vm4196, %v1077, 128
      %v4229 = vsel %vm4197, %v1077, 128
      %v4230 = vsel %vm4198, %v1077, 128
      %v4231 = vsel %vm4199, %v1077, 128
      %v4232 = vsel %vm4200, %v1077, 128
      %v4233 = vsel %vm4201, %v1077, 128
      %v4234 = vsel %vm4202, %v1077, 128
      %v4235 = vsel %vm4203, %v1077, 128
      %v4236 = vsel %vm4204, %v1077, 128
      %v4237 = vsel %vm4205, %v1077, 128
      %v4238 = vsel %vm4206, %v1077, 128
      %v4239 = vsel %vm4207, %v1077, 128
      %v4240 = vsel %vm4208, %v1077, 128
      %v4241 = vsel %vm4209, %v1077, 128
      %v4242 = vsel %vm4210, %v1077, 128
      %v4243 = vsel %vm4211, %v1077, 128
      %v4244 = vsel %vm4212, %v1077, 128
      %v4245 = vsel %vm4213, %v1077, 128
      %v4246 = vsel %vm4214, %v1077, 128
      %v4247 = vsel %vm4215, %v1077, 128
      %v4248 = vsel %vm4216, %v1077, 128
      %v4249 = vsel %vm4217, %v1077, 128
      %v4250 = vsel %vm4218, %v1077, 128
      %v4251 = vsel %vm4219, %v1077, 128
      %v4252 = vsel %vm4220, %v1077, 128
      %v4253 = vsel %vm4221, %v1077, 128
      %v4254 = vsel %vm4222, %v1077, 128
      %v4255 = vsel %vm4223, %v1077, 128
      %v4256 = vsel %vm4224, %v1077, 128
      %v4257 = vsel %vm4225, %v1077, 128
      %v4258 = vsel %vm4226, %v1077, 128
      %v4259 = vsel %vm4227, %v1077, 128
      %v4260 = vand.u32 %v4228, 65535
      %v4261 = vshra.s32 %v4228, 16
      %v4262 = vcvt.s32.f32 %v4260
      %v4263 = vcvt.s32.f32 %v4261
      %4264 = vmin.xlane.f32.xlu0 %v4263
      %v4265 = vpop.xlane.xlu0 %4264
      %vm4266 = vcmp.eq.f32.partialorder %v4263, %v4265
      %v4267 = vsel %vm4266, %v4262, inf
      %4268 = vmin.xlane.f32.xlu0 %v4267
      %v4269 = vpop.xlane.xlu0 %4268
      %v4270 = vcvt.f32.s32 %v4269
      %v4271 = vcvt.f32.s32 %v4265
      %v4272 = vshll.u32 %v4271, 16
      %v4273 = vadd.s32 %v4272, %v4270
      %v4274 = vand.u32 %v4229, 65535
      %v4275 = vshra.s32 %v4229, 16
      %v4276 = vcvt.s32.f32 %v4274
      %v4277 = vcvt.s32.f32 %v4275
      %4278 = vmin.xlane.f32.xlu0 %v4277
      %v4279 = vpop.xlane.xlu0 %4278
      %vm4280 = vcmp.eq.f32.partialorder %v4277, %v4279
      %v4281 = vsel %vm4280, %v4276, inf
      %4282 = vmin.xlane.f32.xlu0 %v4281
      %v4283 = vpop.xlane.xlu0 %4282
      %v4284 = vcvt.f32.s32 %v4283
      %v4285 = vcvt.f32.s32 %v4279
      %v4286 = vshll.u32 %v4285, 16
      %v4287 = vadd.s32 %v4286, %v4284
      %v4288 = vand.u32 %v4230, 65535
      %v4289 = vshra.s32 %v4230, 16
      %v4290 = vcvt.s32.f32 %v4288
      %v4291 = vcvt.s32.f32 %v4289
      %4292 = vmin.xlane.f32.xlu0 %v4291
      %v4293 = vpop.xlane.xlu0 %4292
      %vm4294 = vcmp.eq.f32.partialorder %v4291, %v4293
      %v4295 = vsel %vm4294, %v4290, inf
      %4296 = vmin.xlane.f32.xlu0 %v4295
      %v4297 = vpop.xlane.xlu0 %4296
      %v4298 = vcvt.f32.s32 %v4297
      %v4299 = vcvt.f32.s32 %v4293
      %v4300 = vshll.u32 %v4299, 16
      %v4301 = vadd.s32 %v4300, %v4298
      %v4302 = vand.u32 %v4231, 65535
      %v4303 = vshra.s32 %v4231, 16
      %v4304 = vcvt.s32.f32 %v4302
      %v4305 = vcvt.s32.f32 %v4303
      %4306 = vmin.xlane.f32.xlu0 %v4305
      %v4307 = vpop.xlane.xlu0 %4306
      %vm4308 = vcmp.eq.f32.partialorder %v4305, %v4307
      %v4309 = vsel %vm4308, %v4304, inf
      %4310 = vmin.xlane.f32.xlu0 %v4309
      %v4311 = vpop.xlane.xlu0 %4310
      %v4312 = vcvt.f32.s32 %v4311
      %v4313 = vcvt.f32.s32 %v4307
      %v4314 = vshll.u32 %v4313, 16
      %v4315 = vadd.s32 %v4314, %v4312
      %v4316 = vand.u32 %v4232, 65535
      %v4317 = vshra.s32 %v4232, 16
      %v4318 = vcvt.s32.f32 %v4316
      %v4319 = vcvt.s32.f32 %v4317
      %4320 = vmin.xlane.f32.xlu0 %v4319
      %v4321 = vpop.xlane.xlu0 %4320
      %vm4322 = vcmp.eq.f32.partialorder %v4319, %v4321
      %v4323 = vsel %vm4322, %v4318, inf
      %4324 = vmin.xlane.f32.xlu0 %v4323
      %v4325 = vpop.xlane.xlu0 %4324
      %v4326 = vcvt.f32.s32 %v4325
      %v4327 = vcvt.f32.s32 %v4321
      %v4328 = vshll.u32 %v4327, 16
      %v4329 = vadd.s32 %v4328, %v4326
      %v4330 = vand.u32 %v4233, 65535
      %v4331 = vshra.s32 %v4233, 16
      %v4332 = vcvt.s32.f32 %v4330
      %v4333 = vcvt.s32.f32 %v4331
      %4334 = vmin.xlane.f32.xlu0 %v4333
      %v4335 = vpop.xlane.xlu0 %4334
      %vm4336 = vcmp.eq.f32.partialorder %v4333, %v4335
      %v4337 = vsel %vm4336, %v4332, inf
      %4338 = vmin.xlane.f32.xlu0 %v4337
      %v4339 = vpop.xlane.xlu0 %4338
      %v4340 = vcvt.f32.s32 %v4339
      %v4341 = vcvt.f32.s32 %v4335
      %v4342 = vshll.u32 %v4341, 16
      %v4343 = vadd.s32 %v4342, %v4340
      %v4344 = vand.u32 %v4234, 65535
      %v4345 = vshra.s32 %v4234, 16
      %v4346 = vcvt.s32.f32 %v4344
      %v4347 = vcvt.s32.f32 %v4345
      %4348 = vmin.xlane.f32.xlu0 %v4347
      %v4349 = vpop.xlane.xlu0 %4348
      %vm4350 = vcmp.eq.f32.partialorder %v4347, %v4349
      %v4351 = vsel %vm4350, %v4346, inf
      %4352 = vmin.xlane.f32.xlu0 %v4351
      %v4353 = vpop.xlane.xlu0 %4352
      %v4354 = vcvt.f32.s32 %v4353
      %v4355 = vcvt.f32.s32 %v4349
      %v4356 = vshll.u32 %v4355, 16
      %v4357 = vadd.s32 %v4356, %v4354
      %v4358 = vand.u32 %v4235, 65535
      %v4359 = vshra.s32 %v4235, 16
      %v4360 = vcvt.s32.f32 %v4358
      %v4361 = vcvt.s32.f32 %v4359
      %4362 = vmin.xlane.f32.xlu0 %v4361
      %v4363 = vpop.xlane.xlu0 %4362
      %vm4364 = vcmp.eq.f32.partialorder %v4361, %v4363
      %v4365 = vsel %vm4364, %v4360, inf
      %4366 = vmin.xlane.f32.xlu0 %v4365
      %v4367 = vpop.xlane.xlu0 %4366
      %v4368 = vcvt.f32.s32 %v4367
      %v4369 = vcvt.f32.s32 %v4363
      %v4370 = vshll.u32 %v4369, 16
      %v4371 = vadd.s32 %v4370, %v4368
      %v4372 = vand.u32 %v4236, 65535
      %v4373 = vshra.s32 %v4236, 16
      %v4374 = vcvt.s32.f32 %v4372
      %v4375 = vcvt.s32.f32 %v4373
      %4376 = vmin.xlane.f32.xlu0 %v4375
      %v4377 = vpop.xlane.xlu0 %4376
      %vm4378 = vcmp.eq.f32.partialorder %v4375, %v4377
      %v4379 = vsel %vm4378, %v4374, inf
      %4380 = vmin.xlane.f32.xlu0 %v4379
      %v4381 = vpop.xlane.xlu0 %4380
      %v4382 = vcvt.f32.s32 %v4381
      %v4383 = vcvt.f32.s32 %v4377
      %v4384 = vshll.u32 %v4383, 16
      %v4385 = vadd.s32 %v4384, %v4382
      %v4386 = vand.u32 %v4237, 65535
      %v4387 = vshra.s32 %v4237, 16
      %v4388 = vcvt.s32.f32 %v4386
      %v4389 = vcvt.s32.f32 %v4387
      %4390 = vmin.xlane.f32.xlu0 %v4389
      %v4391 = vpop.xlane.xlu0 %4390
      %vm4392 = vcmp.eq.f32.partialorder %v4389, %v4391
      %v4393 = vsel %vm4392, %v4388, inf
      %4394 = vmin.xlane.f32.xlu0 %v4393
      %v4395 = vpop.xlane.xlu0 %4394
      %v4396 = vcvt.f32.s32 %v4395
      %v4397 = vcvt.f32.s32 %v4391
      %v4398 = vshll.u32 %v4397, 16
      %v4399 = vadd.s32 %v4398, %v4396
      %v4400 = vand.u32 %v4238, 65535
      %v4401 = vshra.s32 %v4238, 16
      %v4402 = vcvt.s32.f32 %v4400
      %v4403 = vcvt.s32.f32 %v4401
      %4404 = vmin.xlane.f32.xlu0 %v4403
      %v4405 = vpop.xlane.xlu0 %4404
      %vm4406 = vcmp.eq.f32.partialorder %v4403, %v4405
      %v4407 = vsel %vm4406, %v4402, inf
      %4408 = vmin.xlane.f32.xlu0 %v4407
      %v4409 = vpop.xlane.xlu0 %4408
      %v4410 = vcvt.f32.s32 %v4409
      %v4411 = vcvt.f32.s32 %v4405
      %v4412 = vshll.u32 %v4411, 16
      %v4413 = vadd.s32 %v4412, %v4410
      %v4414 = vand.u32 %v4239, 65535
      %v4415 = vshra.s32 %v4239, 16
      %v4416 = vcvt.s32.f32 %v4414
      %v4417 = vcvt.s32.f32 %v4415
      %4418 = vmin.xlane.f32.xlu0 %v4417
      %v4419 = vpop.xlane.xlu0 %4418
      %vm4420 = vcmp.eq.f32.partialorder %v4417, %v4419
      %v4421 = vsel %vm4420, %v4416, inf
      %4422 = vmin.xlane.f32.xlu0 %v4421
      %v4423 = vpop.xlane.xlu0 %4422
      %v4424 = vcvt.f32.s32 %v4423
      %v4425 = vcvt.f32.s32 %v4419
      %v4426 = vshll.u32 %v4425, 16
      %v4427 = vadd.s32 %v4426, %v4424
      %v4428 = vand.u32 %v4240, 65535
      %v4429 = vshra.s32 %v4240, 16
      %v4430 = vcvt.s32.f32 %v4428
      %v4431 = vcvt.s32.f32 %v4429
      %4432 = vmin.xlane.f32.xlu0 %v4431
      %v4433 = vpop.xlane.xlu0 %4432
      %vm4434 = vcmp.eq.f32.partialorder %v4431, %v4433
      %v4435 = vsel %vm4434, %v4430, inf
      %4436 = vmin.xlane.f32.xlu0 %v4435
      %v4437 = vpop.xlane.xlu0 %4436
      %v4438 = vcvt.f32.s32 %v4437
      %v4439 = vcvt.f32.s32 %v4433
      %v4440 = vshll.u32 %v4439, 16
      %v4441 = vadd.s32 %v4440, %v4438
      %v4442 = vand.u32 %v4241, 65535
      %v4443 = vshra.s32 %v4241, 16
      %v4444 = vcvt.s32.f32 %v4442
      %v4445 = vcvt.s32.f32 %v4443
      %4446 = vmin.xlane.f32.xlu0 %v4445
      %v4447 = vpop.xlane.xlu0 %4446
      %vm4448 = vcmp.eq.f32.partialorder %v4445, %v4447
      %v4449 = vsel %vm4448, %v4444, inf
      %4450 = vmin.xlane.f32.xlu0 %v4449
      %v4451 = vpop.xlane.xlu0 %4450
      %v4452 = vcvt.f32.s32 %v4451
      %v4453 = vcvt.f32.s32 %v4447
      %v4454 = vshll.u32 %v4453, 16
      %v4455 = vadd.s32 %v4454, %v4452
      %v4456 = vand.u32 %v4242, 65535
      %v4457 = vshra.s32 %v4242, 16
      %v4458 = vcvt.s32.f32 %v4456
      %v4459 = vcvt.s32.f32 %v4457
      %4460 = vmin.xlane.f32.xlu0 %v4459
      %v4461 = vpop.xlane.xlu0 %4460
      %vm4462 = vcmp.eq.f32.partialorder %v4459, %v4461
      %v4463 = vsel %vm4462, %v4458, inf
      %4464 = vmin.xlane.f32.xlu0 %v4463
      %v4465 = vpop.xlane.xlu0 %4464
      %v4466 = vcvt.f32.s32 %v4465
      %v4467 = vcvt.f32.s32 %v4461
      %v4468 = vshll.u32 %v4467, 16
      %v4469 = vadd.s32 %v4468, %v4466
      %v4470 = vand.u32 %v4243, 65535
      %v4471 = vshra.s32 %v4243, 16
      %v4472 = vcvt.s32.f32 %v4470
      %v4473 = vcvt.s32.f32 %v4471
      %4474 = vmin.xlane.f32.xlu0 %v4473
      %v4475 = vpop.xlane.xlu0 %4474
      %vm4476 = vcmp.eq.f32.partialorder %v4473, %v4475
      %v4477 = vsel %vm4476, %v4472, inf
      %4478 = vmin.xlane.f32.xlu0 %v4477
      %v4479 = vpop.xlane.xlu0 %4478
      %v4480 = vcvt.f32.s32 %v4479
      %v4481 = vcvt.f32.s32 %v4475
      %v4482 = vshll.u32 %v4481, 16
      %v4483 = vadd.s32 %v4482, %v4480
      %v4484 = vand.u32 %v4244, 65535
      %v4485 = vshra.s32 %v4244, 16
      %v4486 = vcvt.s32.f32 %v4484
      %v4487 = vcvt.s32.f32 %v4485
      %4488 = vmin.xlane.f32.xlu0 %v4487
      %v4489 = vpop.xlane.xlu0 %4488
      %vm4490 = vcmp.eq.f32.partialorder %v4487, %v4489
      %v4491 = vsel %vm4490, %v4486, inf
      %4492 = vmin.xlane.f32.xlu0 %v4491
      %v4493 = vpop.xlane.xlu0 %4492
      %v4494 = vcvt.f32.s32 %v4493
      %v4495 = vcvt.f32.s32 %v4489
      %v4496 = vshll.u32 %v4495, 16
      %v4497 = vadd.s32 %v4496, %v4494
      %v4498 = vand.u32 %v4245, 65535
      %v4499 = vshra.s32 %v4245, 16
      %v4500 = vcvt.s32.f32 %v4498
      %v4501 = vcvt.s32.f32 %v4499
      %4502 = vmin.xlane.f32.xlu0 %v4501
      %v4503 = vpop.xlane.xlu0 %4502
      %vm4504 = vcmp.eq.f32.partialorder %v4501, %v4503
      %v4505 = vsel %vm4504, %v4500, inf
      %4506 = vmin.xlane.f32.xlu0 %v4505
      %v4507 = vpop.xlane.xlu0 %4506
      %v4508 = vcvt.f32.s32 %v4507
      %v4509 = vcvt.f32.s32 %v4503
      %v4510 = vshll.u32 %v4509, 16
      %v4511 = vadd.s32 %v4510, %v4508
      %v4512 = vand.u32 %v4246, 65535
      %v4513 = vshra.s32 %v4246, 16
      %v4514 = vcvt.s32.f32 %v4512
      %v4515 = vcvt.s32.f32 %v4513
      %4516 = vmin.xlane.f32.xlu0 %v4515
      %v4517 = vpop.xlane.xlu0 %4516
      %vm4518 = vcmp.eq.f32.partialorder %v4515, %v4517
      %v4519 = vsel %vm4518, %v4514, inf
      %4520 = vmin.xlane.f32.xlu0 %v4519
      %v4521 = vpop.xlane.xlu0 %4520
      %v4522 = vcvt.f32.s32 %v4521
      %v4523 = vcvt.f32.s32 %v4517
      %v4524 = vshll.u32 %v4523, 16
      %v4525 = vadd.s32 %v4524, %v4522
      %v4526 = vand.u32 %v4247, 65535
      %v4527 = vshra.s32 %v4247, 16
      %v4528 = vcvt.s32.f32 %v4526
      %v4529 = vcvt.s32.f32 %v4527
      %4530 = vmin.xlane.f32.xlu0 %v4529
      %v4531 = vpop.xlane.xlu0 %4530
      %vm4532 = vcmp.eq.f32.partialorder %v4529, %v4531
      %v4533 = vsel %vm4532, %v4528, inf
      %4534 = vmin.xlane.f32.xlu0 %v4533
      %v4535 = vpop.xlane.xlu0 %4534
      %v4536 = vcvt.f32.s32 %v4535
      %v4537 = vcvt.f32.s32 %v4531
      %v4538 = vshll.u32 %v4537, 16
      %v4539 = vadd.s32 %v4538, %v4536
      %v4540 = vand.u32 %v4248, 65535
      %v4541 = vshra.s32 %v4248, 16
      %v4542 = vcvt.s32.f32 %v4540
      %v4543 = vcvt.s32.f32 %v4541
      %4544 = vmin.xlane.f32.xlu0 %v4543
      %v4545 = vpop.xlane.xlu0 %4544
      %vm4546 = vcmp.eq.f32.partialorder %v4543, %v4545
      %v4547 = vsel %vm4546, %v4542, inf
      %4548 = vmin.xlane.f32.xlu0 %v4547
      %v4549 = vpop.xlane.xlu0 %4548
      %v4550 = vcvt.f32.s32 %v4549
      %v4551 = vcvt.f32.s32 %v4545
      %v4552 = vshll.u32 %v4551, 16
      %v4553 = vadd.s32 %v4552, %v4550
      %v4554 = vand.u32 %v4249, 65535
      %v4555 = vshra.s32 %v4249, 16
      %v4556 = vcvt.s32.f32 %v4554
      %v4557 = vcvt.s32.f32 %v4555
      %4558 = vmin.xlane.f32.xlu0 %v4557
      %v4559 = vpop.xlane.xlu0 %4558
      %vm4560 = vcmp.eq.f32.partialorder %v4557, %v4559
      %v4561 = vsel %vm4560, %v4556, inf
      %4562 = vmin.xlane.f32.xlu0 %v4561
      %v4563 = vpop.xlane.xlu0 %4562
      %v4564 = vcvt.f32.s32 %v4563
      %v4565 = vcvt.f32.s32 %v4559
      %v4566 = vshll.u32 %v4565, 16
      %v4567 = vadd.s32 %v4566, %v4564
      %v4568 = vand.u32 %v4250, 65535
      %v4569 = vshra.s32 %v4250, 16
      %v4570 = vcvt.s32.f32 %v4568
      %v4571 = vcvt.s32.f32 %v4569
      %4572 = vmin.xlane.f32.xlu0 %v4571
      %v4573 = vpop.xlane.xlu0 %4572
      %vm4574 = vcmp.eq.f32.partialorder %v4571, %v4573
      %v4575 = vsel %vm4574, %v4570, inf
      %4576 = vmin.xlane.f32.xlu0 %v4575
      %v4577 = vpop.xlane.xlu0 %4576
      %v4578 = vcvt.f32.s32 %v4577
      %v4579 = vcvt.f32.s32 %v4573
      %v4580 = vshll.u32 %v4579, 16
      %v4581 = vadd.s32 %v4580, %v4578
      %v4582 = vand.u32 %v4251, 65535
      %v4583 = vshra.s32 %v4251, 16
      %v4584 = vcvt.s32.f32 %v4582
      %v4585 = vcvt.s32.f32 %v4583
      %4586 = vmin.xlane.f32.xlu0 %v4585
      %v4587 = vpop.xlane.xlu0 %4586
      %vm4588 = vcmp.eq.f32.partialorder %v4585, %v4587
      %v4589 = vsel %vm4588, %v4584, inf
      %4590 = vmin.xlane.f32.xlu0 %v4589
      %v4591 = vpop.xlane.xlu0 %4590
      %v4592 = vcvt.f32.s32 %v4591
      %v4593 = vcvt.f32.s32 %v4587
      %v4594 = vshll.u32 %v4593, 16
      %v4595 = vadd.s32 %v4594, %v4592
      %v4596 = vand.u32 %v4252, 65535
      %v4597 = vshra.s32 %v4252, 16
      %v4598 = vcvt.s32.f32 %v4596
      %v4599 = vcvt.s32.f32 %v4597
      %4600 = vmin.xlane.f32.xlu0 %v4599
      %v4601 = vpop.xlane.xlu0 %4600
      %vm4602 = vcmp.eq.f32.partialorder %v4599, %v4601
      %v4603 = vsel %vm4602, %v4598, inf
      %4604 = vmin.xlane.f32.xlu0 %v4603
      %v4605 = vpop.xlane.xlu0 %4604
      %v4606 = vcvt.f32.s32 %v4605
      %v4607 = vcvt.f32.s32 %v4601
      %v4608 = vshll.u32 %v4607, 16
      %v4609 = vadd.s32 %v4608, %v4606
      %v4610 = vand.u32 %v4253, 65535
      %v4611 = vshra.s32 %v4253, 16
      %v4612 = vcvt.s32.f32 %v4610
      %v4613 = vcvt.s32.f32 %v4611
      %4614 = vmin.xlane.f32.xlu0 %v4613
      %v4615 = vpop.xlane.xlu0 %4614
      %vm4616 = vcmp.eq.f32.partialorder %v4613, %v4615
      %v4617 = vsel %vm4616, %v4612, inf
      %4618 = vmin.xlane.f32.xlu0 %v4617
      %v4619 = vpop.xlane.xlu0 %4618
      %v4620 = vcvt.f32.s32 %v4619
      %v4621 = vcvt.f32.s32 %v4615
      %v4622 = vshll.u32 %v4621, 16
      %v4623 = vadd.s32 %v4622, %v4620
      %v4624 = vand.u32 %v4254, 65535
      %v4625 = vshra.s32 %v4254, 16
      %v4626 = vcvt.s32.f32 %v4624
      %v4627 = vcvt.s32.f32 %v4625
      %4628 = vmin.xlane.f32.xlu0 %v4627
      %v4629 = vpop.xlane.xlu0 %4628
      %vm4630 = vcmp.eq.f32.partialorder %v4627, %v4629
      %v4631 = vsel %vm4630, %v4626, inf
      %4632 = vmin.xlane.f32.xlu0 %v4631
      %v4633 = vpop.xlane.xlu0 %4632
      %v4634 = vcvt.f32.s32 %v4633
      %v4635 = vcvt.f32.s32 %v4629
      %v4636 = vshll.u32 %v4635, 16
      %v4637 = vadd.s32 %v4636, %v4634
      %v4638 = vand.u32 %v4255, 65535
      %v4639 = vshra.s32 %v4255, 16
      %v4640 = vcvt.s32.f32 %v4638
      %v4641 = vcvt.s32.f32 %v4639
      %4642 = vmin.xlane.f32.xlu0 %v4641
      %v4643 = vpop.xlane.xlu0 %4642
      %vm4644 = vcmp.eq.f32.partialorder %v4641, %v4643
      %v4645 = vsel %vm4644, %v4640, inf
      %4646 = vmin.xlane.f32.xlu0 %v4645
      %v4647 = vpop.xlane.xlu0 %4646
      %v4648 = vcvt.f32.s32 %v4647
      %v4649 = vcvt.f32.s32 %v4643
      %v4650 = vshll.u32 %v4649, 16
      %v4651 = vadd.s32 %v4650, %v4648
      %v4652 = vand.u32 %v4256, 65535
      %v4653 = vshra.s32 %v4256, 16
      %v4654 = vcvt.s32.f32 %v4652
      %v4655 = vcvt.s32.f32 %v4653
      %4656 = vmin.xlane.f32.xlu0 %v4655
      %v4657 = vpop.xlane.xlu0 %4656
      %vm4658 = vcmp.eq.f32.partialorder %v4655, %v4657
      %v4659 = vsel %vm4658, %v4654, inf
      %4660 = vmin.xlane.f32.xlu0 %v4659
      %v4661 = vpop.xlane.xlu0 %4660
      %v4662 = vcvt.f32.s32 %v4661
      %v4663 = vcvt.f32.s32 %v4657
      %v4664 = vshll.u32 %v4663, 16
      %v4665 = vadd.s32 %v4664, %v4662
      %v4666 = vand.u32 %v4257, 65535
      %v4667 = vshra.s32 %v4257, 16
      %v4668 = vcvt.s32.f32 %v4666
      %v4669 = vcvt.s32.f32 %v4667
      %4670 = vmin.xlane.f32.xlu0 %v4669
      %v4671 = vpop.xlane.xlu0 %4670
      %vm4672 = vcmp.eq.f32.partialorder %v4669, %v4671
      %v4673 = vsel %vm4672, %v4668, inf
      %4674 = vmin.xlane.f32.xlu0 %v4673
      %v4675 = vpop.xlane.xlu0 %4674
      %v4676 = vcvt.f32.s32 %v4675
      %v4677 = vcvt.f32.s32 %v4671
      %v4678 = vshll.u32 %v4677, 16
      %v4679 = vadd.s32 %v4678, %v4676
      %v4680 = vand.u32 %v4258, 65535
      %v4681 = vshra.s32 %v4258, 16
      %v4682 = vcvt.s32.f32 %v4680
      %v4683 = vcvt.s32.f32 %v4681
      %4684 = vmin.xlane.f32.xlu0 %v4683
      %v4685 = vpop.xlane.xlu0 %4684
      %vm4686 = vcmp.eq.f32.partialorder %v4683, %v4685
      %v4687 = vsel %vm4686, %v4682, inf
      %4688 = vmin.xlane.f32.xlu0 %v4687
      %v4689 = vpop.xlane.xlu0 %4688
      %v4690 = vcvt.f32.s32 %v4689
      %v4691 = vcvt.f32.s32 %v4685
      %v4692 = vshll.u32 %v4691, 16
      %v4693 = vadd.s32 %v4692, %v4690
      %v4694 = vand.u32 %v4259, 65535
      %v4695 = vshra.s32 %v4259, 16
      %v4696 = vcvt.s32.f32 %v4694
      %v4697 = vcvt.s32.f32 %v4695
      %4698 = vmin.xlane.f32.xlu0 %v4697
      %v4699 = vpop.xlane.xlu0 %4698
      %vm4700 = vcmp.eq.f32.partialorder %v4697, %v4699
      %v4701 = vsel %vm4700, %v4696, inf
      %4702 = vmin.xlane.f32.xlu0 %v4701
      %v4703 = vpop.xlane.xlu0 %4702
      %v4704 = vcvt.f32.s32 %v4703
      %v4705 = vcvt.f32.s32 %v4699
      %v4706 = vshll.u32 %v4705, 16
      %v4707 = vadd.s32 %v4706, %v4704
      %vm4708 = vcmp.eq.s32.totalorder %v1077, %v4273
      %vm4709 = vcmp.eq.s32.totalorder %v1077, %v4287
      %vm4710 = vcmp.eq.s32.totalorder %v1077, %v4301
      %vm4711 = vcmp.eq.s32.totalorder %v1077, %v4315
      %vm4712 = vcmp.eq.s32.totalorder %v1077, %v4329
      %vm4713 = vcmp.eq.s32.totalorder %v1077, %v4343
      %vm4714 = vcmp.eq.s32.totalorder %v1077, %v4357
      %vm4715 = vcmp.eq.s32.totalorder %v1077, %v4371
      %vm4716 = vcmp.eq.s32.totalorder %v1077, %v4385
      %vm4717 = vcmp.eq.s32.totalorder %v1077, %v4399
      %vm4718 = vcmp.eq.s32.totalorder %v1077, %v4413
      %vm4719 = vcmp.eq.s32.totalorder %v1077, %v4427
      %vm4720 = vcmp.eq.s32.totalorder %v1077, %v4441
      %vm4721 = vcmp.eq.s32.totalorder %v1077, %v4455
      %vm4722 = vcmp.eq.s32.totalorder %v1077, %v4469
      %vm4723 = vcmp.eq.s32.totalorder %v1077, %v4483
      %vm4724 = vcmp.eq.s32.totalorder %v1077, %v4497
      %vm4725 = vcmp.eq.s32.totalorder %v1077, %v4511
      %vm4726 = vcmp.eq.s32.totalorder %v1077, %v4525
      %vm4727 = vcmp.eq.s32.totalorder %v1077, %v4539
      %vm4728 = vcmp.eq.s32.totalorder %v1077, %v4553
      %vm4729 = vcmp.eq.s32.totalorder %v1077, %v4567
      %vm4730 = vcmp.eq.s32.totalorder %v1077, %v4581
      %vm4731 = vcmp.eq.s32.totalorder %v1077, %v4595
      %vm4732 = vcmp.eq.s32.totalorder %v1077, %v4609
      %vm4733 = vcmp.eq.s32.totalorder %v1077, %v4623
      %vm4734 = vcmp.eq.s32.totalorder %v1077, %v4637
      %vm4735 = vcmp.eq.s32.totalorder %v1077, %v4651
      %vm4736 = vcmp.eq.s32.totalorder %v1077, %v4665
      %vm4737 = vcmp.eq.s32.totalorder %v1077, %v4679
      %vm4738 = vcmp.eq.s32.totalorder %v1077, %v4693
      %vm4739 = vcmp.eq.s32.totalorder %v1077, %v4707
      %v4740 = vsel %vm4708, 1, 0
      %v4741 = vsel %vm4709, 1, 0
      %v4742 = vsel %vm4710, 1, 0
      %v4743 = vsel %vm4711, 1, 0
      %v4744 = vsel %vm4712, 1, 0
      %v4745 = vsel %vm4713, 1, 0
      %v4746 = vsel %vm4714, 1, 0
      %v4747 = vsel %vm4715, 1, 0
      %v4748 = vsel %vm4716, 1, 0
      %v4749 = vsel %vm4717, 1, 0
      %v4750 = vsel %vm4718, 1, 0
      %v4751 = vsel %vm4719, 1, 0
      %v4752 = vsel %vm4720, 1, 0
      %v4753 = vsel %vm4721, 1, 0
      %v4754 = vsel %vm4722, 1, 0
      %v4755 = vsel %vm4723, 1, 0
      %v4756 = vsel %vm4724, 1, 0
      %v4757 = vsel %vm4725, 1, 0
      %v4758 = vsel %vm4726, 1, 0
      %v4759 = vsel %vm4727, 1, 0
      %v4760 = vsel %vm4728, 1, 0
      %v4761 = vsel %vm4729, 1, 0
      %v4762 = vsel %vm4730, 1, 0
      %v4763 = vsel %vm4731, 1, 0
      %v4764 = vsel %vm4732, 1, 0
      %v4765 = vsel %vm4733, 1, 0
      %v4766 = vsel %vm4734, 1, 0
      %v4767 = vsel %vm4735, 1, 0
      %v4768 = vsel %vm4736, 1, 0
      %v4769 = vsel %vm4737, 1, 0
      %v4770 = vsel %vm4738, 1, 0
      %v4771 = vsel %vm4739, 1, 0
      %v4772 = vcvt.s32.f32 %v4740
      %v4773 = vcvt.s32.f32 %v4741
      %v4774 = vcvt.s32.f32 %v4742
      %v4775 = vcvt.s32.f32 %v4743
      %v4776 = vcvt.s32.f32 %v4744
      %v4777 = vcvt.s32.f32 %v4745
      %v4778 = vcvt.s32.f32 %v4746
      %v4779 = vcvt.s32.f32 %v4747
      %v4780 = vcvt.s32.f32 %v4748
      %v4781 = vcvt.s32.f32 %v4749
      %v4782 = vcvt.s32.f32 %v4750
      %v4783 = vcvt.s32.f32 %v4751
      %v4784 = vcvt.s32.f32 %v4752
      %v4785 = vcvt.s32.f32 %v4753
      %v4786 = vcvt.s32.f32 %v4754
      %v4787 = vcvt.s32.f32 %v4755
      %v4788 = vcvt.s32.f32 %v4756
      %v4789 = vcvt.s32.f32 %v4757
      %v4790 = vcvt.s32.f32 %v4758
      %v4791 = vcvt.s32.f32 %v4759
      %v4792 = vcvt.s32.f32 %v4760
      %v4793 = vcvt.s32.f32 %v4761
      %v4794 = vcvt.s32.f32 %v4762
      %v4795 = vcvt.s32.f32 %v4763
      %v4796 = vcvt.s32.f32 %v4764
      %v4797 = vcvt.s32.f32 %v4765
      %v4798 = vcvt.s32.f32 %v4766
      %v4799 = vcvt.s32.f32 %v4767
      %v4800 = vcvt.s32.f32 %v4768
      %v4801 = vcvt.s32.f32 %v4769
      %v4802 = vcvt.s32.f32 %v4770
      %v4803 = vcvt.s32.f32 %v4771
      %4804 = vmatprep.subr.mxu0 0.0
      %4805 = vmatpush1.xpose.msra.mxu0 %v3834
      %4806 = vmatprep.subr.mxu0 0.0
      %4807 = vmatpush1.xpose.msra.mxu0 %v3833
      %4808 = vmatprep.subr.mxu0 0.0
      %4809 = vmatpush1.xpose.msra.mxu0 %v3832
      %4810 = vmatprep.subr.mxu0 0.0
      %4811 = vmatpush1.xpose.msra.mxu0 %v3831
      %4812 = vmatprep.subr.mxu0 0.0
      %4813 = vmatpush1.xpose.msra.mxu0 %v3830
      %4814 = vmatprep.subr.mxu0 0.0
      %4815 = vmatpush1.xpose.msra.mxu0 %v3829
      %4816 = vmatprep.subr.mxu0 0.0
      %4817 = vmatpush1.xpose.msra.mxu0 %v3828
      %4818 = vmatprep.subr.mxu0 0.0
      %4819 = vmatpush1.xpose.msra.mxu0 %v3827
      %4820 = vmatprep.subr.mxu0 0.0
      %4821 = vmatpush1.xpose.msra.mxu0 %v3826
      %4822 = vmatprep.subr.mxu0 0.0
      %4823 = vmatpush1.xpose.msra.mxu0 %v3825
      %4824 = vmatprep.subr.mxu0 0.0
      %4825 = vmatpush1.xpose.msra.mxu0 %v3824
      %4826 = vmatprep.subr.mxu0 0.0
      %4827 = vmatpush1.xpose.msra.mxu0 %v3823
      %4828 = vmatprep.subr.mxu0 0.0
      %4829 = vmatpush1.xpose.msra.mxu0 %v3822
      %4830 = vmatprep.subr.mxu0 0.0
      %4831 = vmatpush1.xpose.msra.mxu0 %v3821
      %4832 = vmatprep.subr.mxu0 0.0
      %4833 = vmatpush1.xpose.msra.mxu0 %v3820
      %4834 = vmatprep.subr.mxu0 0.0
      %4835 = vmatpush1.xpose.msra.mxu0 %v3819
      %4836 = vmatprep.subr.mxu0 0.0
      %4837 = vmatpush2.xpose.msra.mxu0 0.0
      %4838 = vmatprep.subr.mxu0 0.0
      %4839 = vmatpush2.xpose.msra.mxu0 0.0
      %4840 = vmatprep.subr.mxu0 0.0
      %4841 = vmatpush2.xpose.msra.mxu0 0.0
      %4842 = vmatprep.subr.mxu0 0.0
      %4843 = vmatpush2.xpose.msra.mxu0 0.0
      %4844 = vmatprep.subr.mxu0 0.0
      %4845 = vmatpush2.xpose.msra.mxu0 0.0
      %4846 = vmatprep.subr.mxu0 0.0
      %4847 = vmatpush2.xpose.msra.mxu0 0.0
      %4848 = vmatprep.subr.mxu0 0.0
      %4849 = vmatpush2.xpose.msra.mxu0 0.0
      %4850 = vmatprep.subr.mxu0 0.0
      %4851 = vmatpush2.xpose.msra.mxu0 0.0
      %4852 = vmatprep.subr.mxu0 0.0
      %4853 = vmatpush2.xpose.msra.mxu0 0.0
      %4854 = vmatprep.subr.mxu0 0.0
      %4855 = vmatpush2.xpose.msra.mxu0 0.0
      %4856 = vmatprep.subr.mxu0 0.0
      %4857 = vmatpush2.xpose.msra.mxu0 0.0
      %4858 = vmatprep.subr.mxu0 0.0
      %4859 = vmatpush2.xpose.msra.mxu0 0.0
      %4860 = vmatprep.subr.mxu0 0.0
      %4861 = vmatpush2.xpose.msra.mxu0 0.0
      %4862 = vmatprep.subr.mxu0 0.0
      %4863 = vmatpush2.xpose.msra.mxu0 0.0
      %4864 = vmatprep.subr.mxu0 0.0
      %4865 = vmatpush2.xpose.msra.mxu0 0.0
      %4866 = vmatprep.subr.mxu0 0.0
      %4867 = vmatpush2.xpose.msra.mxu0 0.0
      %4868 = vmatprep.mubr.f32.mxu0 0.0
      %4869 = vmatmul.mubr.f32.gmra.mxu0 %v4772
      %v4870 = vpop.f32.mrf.mxu0
      %v4871 = vadd.f32 0.0, %v4870
      %v4872 = vpop.f32.mrf.mxu0
      %4873 = vmatprep.mubr.f32.mxu0 0.0
      %4874 = vmatmul.mubr.f32.gmra.mxu0 %v4773
      %v4875 = vpop.f32.mrf.mxu0
      %v4876 = vadd.f32 0.0, %v4875
      %v4877 = vpop.f32.mrf.mxu0
      %4878 = vmatprep.mubr.f32.mxu0 0.0
      %4879 = vmatmul.mubr.f32.gmra.mxu0 %v4774
      %v4880 = vpop.f32.mrf.mxu0
      %v4881 = vadd.f32 0.0, %v4880
      %v4882 = vpop.f32.mrf.mxu0
      %4883 = vmatprep.mubr.f32.mxu0 0.0
      %4884 = vmatmul.mubr.f32.gmra.mxu0 %v4775
      %v4885 = vpop.f32.mrf.mxu0
      %v4886 = vadd.f32 0.0, %v4885
      %v4887 = vpop.f32.mrf.mxu0
      %4888 = vmatprep.mubr.f32.mxu0 0.0
      %4889 = vmatmul.mubr.f32.gmra.mxu0 %v4776
      %v4890 = vpop.f32.mrf.mxu0
      %v4891 = vadd.f32 0.0, %v4890
      %v4892 = vpop.f32.mrf.mxu0
      %4893 = vmatprep.mubr.f32.mxu0 0.0
      %4894 = vmatmul.mubr.f32.gmra.mxu0 %v4777
      %v4895 = vpop.f32.mrf.mxu0
      %v4896 = vadd.f32 0.0, %v4895
      %v4897 = vpop.f32.mrf.mxu0
      %4898 = vmatprep.mubr.f32.mxu0 0.0
      %4899 = vmatmul.mubr.f32.gmra.mxu0 %v4778
      %v4900 = vpop.f32.mrf.mxu0
      %v4901 = vadd.f32 0.0, %v4900
      %v4902 = vpop.f32.mrf.mxu0
      %4903 = vmatprep.mubr.f32.mxu0 0.0
      %4904 = vmatmul.mubr.f32.gmra.mxu0 %v4779
      %v4905 = vpop.f32.mrf.mxu0
      %v4906 = vadd.f32 0.0, %v4905
      %v4907 = vpop.f32.mrf.mxu0
      %4908 = vmatprep.mubr.f32.mxu0 0.0
      %4909 = vmatmul.mubr.f32.gmra.mxu0 %v4780
      %v4910 = vpop.f32.mrf.mxu0
      %v4911 = vadd.f32 0.0, %v4910
      %v4912 = vpop.f32.mrf.mxu0
      %4913 = vmatprep.mubr.f32.mxu0 0.0
      %4914 = vmatmul.mubr.f32.gmra.mxu0 %v4781
      %v4915 = vpop.f32.mrf.mxu0
      %v4916 = vadd.f32 0.0, %v4915
      %v4917 = vpop.f32.mrf.mxu0
      %4918 = vmatprep.mubr.f32.mxu0 0.0
      %4919 = vmatmul.mubr.f32.gmra.mxu0 %v4782
      %v4920 = vpop.f32.mrf.mxu0
      %v4921 = vadd.f32 0.0, %v4920
      %v4922 = vpop.f32.mrf.mxu0
      %4923 = vmatprep.mubr.f32.mxu0 0.0
      %4924 = vmatmul.mubr.f32.gmra.mxu0 %v4783
      %v4925 = vpop.f32.mrf.mxu0
      %v4926 = vadd.f32 0.0, %v4925
      %v4927 = vpop.f32.mrf.mxu0
      %4928 = vmatprep.mubr.f32.mxu0 0.0
      %4929 = vmatmul.mubr.f32.gmra.mxu0 %v4784
      %v4930 = vpop.f32.mrf.mxu0
      %v4931 = vadd.f32 0.0, %v4930
      %v4932 = vpop.f32.mrf.mxu0
      %4933 = vmatprep.mubr.f32.mxu0 0.0
      %4934 = vmatmul.mubr.f32.gmra.mxu0 %v4785
      %v4935 = vpop.f32.mrf.mxu0
      %v4936 = vadd.f32 0.0, %v4935
      %v4937 = vpop.f32.mrf.mxu0
      %4938 = vmatprep.mubr.f32.mxu0 0.0
      %4939 = vmatmul.mubr.f32.gmra.mxu0 %v4786
      %v4940 = vpop.f32.mrf.mxu0
      %v4941 = vadd.f32 0.0, %v4940
      %v4942 = vpop.f32.mrf.mxu0
      %4943 = vmatprep.mubr.f32.mxu0 0.0
      %4944 = vmatmul.mubr.f32.gmra.mxu0 %v4787
      %v4945 = vpop.f32.mrf.mxu0
      %v4946 = vadd.f32 0.0, %v4945
      %v4947 = vpop.f32.mrf.mxu0
      %4948 = vmatprep.mubr.f32.mxu0 0.0
      %4949 = vmatmul.mubr.f32.gmra.mxu0 %v4788
      %v4950 = vpop.f32.mrf.mxu0
      %v4951 = vadd.f32 0.0, %v4950
      %v4952 = vpop.f32.mrf.mxu0
      %4953 = vmatprep.mubr.f32.mxu0 0.0
      %4954 = vmatmul.mubr.f32.gmra.mxu0 %v4789
      %v4955 = vpop.f32.mrf.mxu0
      %v4956 = vadd.f32 0.0, %v4955
      %v4957 = vpop.f32.mrf.mxu0
      %4958 = vmatprep.mubr.f32.mxu0 0.0
      %4959 = vmatmul.mubr.f32.gmra.mxu0 %v4790
      %v4960 = vpop.f32.mrf.mxu0
      %v4961 = vadd.f32 0.0, %v4960
      %v4962 = vpop.f32.mrf.mxu0
      %4963 = vmatprep.mubr.f32.mxu0 0.0
      %4964 = vmatmul.mubr.f32.gmra.mxu0 %v4791
      %v4965 = vpop.f32.mrf.mxu0
      %v4966 = vadd.f32 0.0, %v4965
      %v4967 = vpop.f32.mrf.mxu0
      %4968 = vmatprep.mubr.f32.mxu0 0.0
      %4969 = vmatmul.mubr.f32.gmra.mxu0 %v4792
      %v4970 = vpop.f32.mrf.mxu0
      %v4971 = vadd.f32 0.0, %v4970
      %v4972 = vpop.f32.mrf.mxu0
      %4973 = vmatprep.mubr.f32.mxu0 0.0
      %4974 = vmatmul.mubr.f32.gmra.mxu0 %v4793
      %v4975 = vpop.f32.mrf.mxu0
      %v4976 = vadd.f32 0.0, %v4975
      %v4977 = vpop.f32.mrf.mxu0
      %4978 = vmatprep.mubr.f32.mxu0 0.0
      %4979 = vmatmul.mubr.f32.gmra.mxu0 %v4794
      %v4980 = vpop.f32.mrf.mxu0
      %v4981 = vadd.f32 0.0, %v4980
      %v4982 = vpop.f32.mrf.mxu0
      %4983 = vmatprep.mubr.f32.mxu0 0.0
      %4984 = vmatmul.mubr.f32.gmra.mxu0 %v4795
      %v4985 = vpop.f32.mrf.mxu0
      %v4986 = vadd.f32 0.0, %v4985
      %v4987 = vpop.f32.mrf.mxu0
      %4988 = vmatprep.mubr.f32.mxu0 0.0
      %4989 = vmatmul.mubr.f32.gmra.mxu0 %v4796
      %v4990 = vpop.f32.mrf.mxu0
      %v4991 = vadd.f32 0.0, %v4990
      %v4992 = vpop.f32.mrf.mxu0
      %4993 = vmatprep.mubr.f32.mxu0 0.0
      %4994 = vmatmul.mubr.f32.gmra.mxu0 %v4797
      %v4995 = vpop.f32.mrf.mxu0
      %v4996 = vadd.f32 0.0, %v4995
      %v4997 = vpop.f32.mrf.mxu0
      %4998 = vmatprep.mubr.f32.mxu0 0.0
      %4999 = vmatmul.mubr.f32.gmra.mxu0 %v4798
      %v5000 = vpop.f32.mrf.mxu0
      %v5001 = vadd.f32 0.0, %v5000
      %v5002 = vpop.f32.mrf.mxu0
      %5003 = vmatprep.mubr.f32.mxu0 0.0
      %5004 = vmatmul.mubr.f32.gmra.mxu0 %v4799
      %v5005 = vpop.f32.mrf.mxu0
      %v5006 = vadd.f32 0.0, %v5005
      %v5007 = vpop.f32.mrf.mxu0
      %5008 = vmatprep.mubr.f32.mxu0 0.0
      %5009 = vmatmul.mubr.f32.gmra.mxu0 %v4800
      %v5010 = vpop.f32.mrf.mxu0
      %v5011 = vadd.f32 0.0, %v5010
      %v5012 = vpop.f32.mrf.mxu0
      %5013 = vmatprep.mubr.f32.mxu0 0.0
      %5014 = vmatmul.mubr.f32.gmra.mxu0 %v4801
      %v5015 = vpop.f32.mrf.mxu0
      %v5016 = vadd.f32 0.0, %v5015
      %v5017 = vpop.f32.mrf.mxu0
      %5018 = vmatprep.mubr.f32.mxu0 0.0
      %5019 = vmatmul.mubr.f32.gmra.mxu0 %v4802
      %v5020 = vpop.f32.mrf.mxu0
      %v5021 = vadd.f32 0.0, %v5020
      %v5022 = vpop.f32.mrf.mxu0
      %5023 = vmatprep.mubr.f32.mxu0 0.0
      %5024 = vmatmul.mubr.f32.gmra.mxu0 %v4803
      %v5025 = vpop.f32.mrf.mxu0
      %v5026 = vadd.f32 0.0, %v5025
      %v5027 = vpop.f32.mrf.mxu0
      %5028 = vdwg.mxu0
      %v5029 = vsub.f32 %v4871, %v3786
      %v5030 = vsub.f32 %v4876, %v3787
      %v5031 = vsub.f32 %v4881, %v3788
      %v5032 = vsub.f32 %v4886, %v3789
      %v5033 = vsub.f32 %v4891, %v3790
      %v5034 = vsub.f32 %v4896, %v3791
      %v5035 = vsub.f32 %v4901, %v3792
      %v5036 = vsub.f32 %v4906, %v3793
      %v5037 = vsub.f32 %v4911, %v3794
      %v5038 = vsub.f32 %v4916, %v3795
      %v5039 = vsub.f32 %v4921, %v3796
      %v5040 = vsub.f32 %v4926, %v3797
      %v5041 = vsub.f32 %v4931, %v3798
      %v5042 = vsub.f32 %v4936, %v3799
      %v5043 = vsub.f32 %v4941, %v3800
      %v5044 = vsub.f32 %v4946, %v3801
      %v5045 = vsub.f32 %v4951, %v3802
      %v5046 = vsub.f32 %v4956, %v3803
      %v5047 = vsub.f32 %v4961, %v3804
      %v5048 = vsub.f32 %v4966, %v3805
      %v5049 = vsub.f32 %v4971, %v3806
      %v5050 = vsub.f32 %v4976, %v3807
      %v5051 = vsub.f32 %v4981, %v3808
      %v5052 = vsub.f32 %v4986, %v3809
      %v5053 = vsub.f32 %v4991, %v3810
      %v5054 = vsub.f32 %v4996, %v3811
      %v5055 = vsub.f32 %v5001, %v3812
      %v5056 = vsub.f32 %v5006, %v3813
      %v5057 = vsub.f32 %v5011, %v3814
      %v5058 = vsub.f32 %v5016, %v3815
      %v5059 = vsub.f32 %v5021, %v3816
      %v5060 = vsub.f32 %v5026, %v3817
      %v5061 = vmul.f32 %v5029, %v5029
      %v5062 = vmul.f32 %v5030, %v5030
      %v5063 = vmul.f32 %v5031, %v5031
      %v5064 = vmul.f32 %v5032, %v5032
      %v5065 = vmul.f32 %v5033, %v5033
      %v5066 = vmul.f32 %v5034, %v5034
      %v5067 = vmul.f32 %v5035, %v5035
      %v5068 = vmul.f32 %v5036, %v5036
      %v5069 = vmul.f32 %v5037, %v5037
      %v5070 = vmul.f32 %v5038, %v5038
      %v5071 = vmul.f32 %v5039, %v5039
      %v5072 = vmul.f32 %v5040, %v5040
      %v5073 = vmul.f32 %v5041, %v5041
      %v5074 = vmul.f32 %v5042, %v5042
      %v5075 = vmul.f32 %v5043, %v5043
      %v5076 = vmul.f32 %v5044, %v5044
      %v5077 = vmul.f32 %v5045, %v5045
      %v5078 = vmul.f32 %v5046, %v5046
      %v5079 = vmul.f32 %v5047, %v5047
      %v5080 = vmul.f32 %v5048, %v5048
      %v5081 = vmul.f32 %v5049, %v5049
      %v5082 = vmul.f32 %v5050, %v5050
      %v5083 = vmul.f32 %v5051, %v5051
      %v5084 = vmul.f32 %v5052, %v5052
      %v5085 = vmul.f32 %v5053, %v5053
      %v5086 = vmul.f32 %v5054, %v5054
      %v5087 = vmul.f32 %v5055, %v5055
      %v5088 = vmul.f32 %v5056, %v5056
      %v5089 = vmul.f32 %v5057, %v5057
      %v5090 = vmul.f32 %v5058, %v5058
      %v5091 = vmul.f32 %v5059, %v5059
      %v5092 = vmul.f32 %v5060, %v5060
      %v5093 = vadd.f32 %v3722, %v5061
      %v5094 = vadd.f32 %v3723, %v5062
      %v5095 = vadd.f32 %v3724, %v5063
      %v5096 = vadd.f32 %v3725, %v5064
      %v5097 = vadd.f32 %v3726, %v5065
      %v5098 = vadd.f32 %v3727, %v5066
      %v5099 = vadd.f32 %v3728, %v5067
      %v5100 = vadd.f32 %v3729, %v5068
      %v5101 = vadd.f32 %v3730, %v5069
      %v5102 = vadd.f32 %v3731, %v5070
      %v5103 = vadd.f32 %v3732, %v5071
      %v5104 = vadd.f32 %v3733, %v5072
      %v5105 = vadd.f32 %v3734, %v5073
      %v5106 = vadd.f32 %v3735, %v5074
      %v5107 = vadd.f32 %v3736, %v5075
      %v5108 = vadd.f32 %v3737, %v5076
      %v5109 = vadd.f32 %v3738, %v5077
      %v5110 = vadd.f32 %v3739, %v5078
      %v5111 = vadd.f32 %v3740, %v5079
      %v5112 = vadd.f32 %v3741, %v5080
      %v5113 = vadd.f32 %v3742, %v5081
      %v5114 = vadd.f32 %v3743, %v5082
      %v5115 = vadd.f32 %v3744, %v5083
      %v5116 = vadd.f32 %v3745, %v5084
      %v5117 = vadd.f32 %v3746, %v5085
      %v5118 = vadd.f32 %v3747, %v5086
      %v5119 = vadd.f32 %v3748, %v5087
      %v5120 = vadd.f32 %v3749, %v5088
      %v5121 = vadd.f32 %v3750, %v5089
      %v5122 = vadd.f32 %v3751, %v5090
      %v5123 = vadd.f32 %v3752, %v5091
      %v5124 = vadd.f32 %v3753, %v5092
      %v5125 = vadd.f32 %v3754, %v4871
      %v5126 = vadd.f32 %v3755, %v4876
      %v5127 = vadd.f32 %v3756, %v4881
      %v5128 = vadd.f32 %v3757, %v4886
      %v5129 = vadd.f32 %v3758, %v4891
      %v5130 = vadd.f32 %v3759, %v4896
      %v5131 = vadd.f32 %v3760, %v4901
      %v5132 = vadd.f32 %v3761, %v4906
      %v5133 = vadd.f32 %v3762, %v4911
      %v5134 = vadd.f32 %v3763, %v4916
      %v5135 = vadd.f32 %v3764, %v4921
      %v5136 = vadd.f32 %v3765, %v4926
      %v5137 = vadd.f32 %v3766, %v4931
      %v5138 = vadd.f32 %v3767, %v4936
      %v5139 = vadd.f32 %v3768, %v4941
      %v5140 = vadd.f32 %v3769, %v4946
      %v5141 = vadd.f32 %v3770, %v4951
      %v5142 = vadd.f32 %v3771, %v4956
      %v5143 = vadd.f32 %v3772, %v4961
      %v5144 = vadd.f32 %v3773, %v4966
      %v5145 = vadd.f32 %v3774, %v4971
      %v5146 = vadd.f32 %v3775, %v4976
      %v5147 = vadd.f32 %v3776, %v4981
      %v5148 = vadd.f32 %v3777, %v4986
      %v5149 = vadd.f32 %v3778, %v4991
      %v5150 = vadd.f32 %v3779, %v4996
      %v5151 = vadd.f32 %v3780, %v5001
      %v5152 = vadd.f32 %v3781, %v5006
      %v5153 = vadd.f32 %v3782, %v5011
      %v5154 = vadd.f32 %v3783, %v5016
      %v5155 = vadd.f32 %v3784, %v5021
      %v5156 = vadd.f32 %v3785, %v5026
      %v5157 = vld [vmem:[%s7] sm:$0xff]
      %v5158 = vld [vmem:[%s7 + $0x8] sm:$0xff]
      %v5159 = vld [vmem:[%s7 + $0x10] sm:$0xff]
      %v5160 = vld [vmem:[%s7 + $0x18] sm:$0xff]
      %v5161 = vld [vmem:[%s7 + $0x20] sm:$0xff]
      %v5162 = vld [vmem:[%s7 + $0x28] sm:$0xff]
      %v5163 = vld [vmem:[%s7 + $0x30] sm:$0xff]
      %v5164 = vld [vmem:[%s7 + $0x38] sm:$0xff]
      %v5165 = vld [vmem:[%s7 + $0x40] sm:$0xff]
      %v5166 = vld [vmem:[%s7 + $0x48] sm:$0xff]
      %v5167 = vld [vmem:[%s7 + $0x50] sm:$0xff]
      %v5168 = vld [vmem:[%s7 + $0x58] sm:$0xff]
      %v5169 = vld [vmem:[%s7 + $0x60] sm:$0xff]
      %v5170 = vld [vmem:[%s7 + $0x68] sm:$0xff]
      %v5171 = vld [vmem:[%s7 + $0x70] sm:$0xff]
      %v5172 = vld [vmem:[%s7 + $0x78] sm:$0xff]
      %v5173 = vld [vmem:[%s8] sm:$0x1]
      %v5175 = vlaneseq
      %v5176 = vshrl.u32 %v5175, 7
      %v5177 = vsub.s32 0, %v5176
      %v5178 = vrot.slane %v5173, %v5177
      %5180 = vmatprep.subr.mxu0 0.0
      %5181 = vmatpush1.msra.mxu0 %v5172
      %5182 = vmatprep.subr.mxu0 0.0
      %5183 = vmatpush1.msra.mxu0 %v5171
      %5184 = vmatprep.subr.mxu0 0.0
      %5185 = vmatpush1.msra.mxu0 %v5170
      %5186 = vmatprep.subr.mxu0 0.0
      %5187 = vmatpush1.msra.mxu0 %v5169
      %5188 = vmatprep.subr.mxu0 0.0
      %5189 = vmatpush1.msra.mxu0 %v5168
      %5190 = vmatprep.subr.mxu0 0.0
      %5191 = vmatpush1.msra.mxu0 %v5167
      %5192 = vmatprep.subr.mxu0 0.0
      %5193 = vmatpush1.msra.mxu0 %v5166
      %5194 = vmatprep.subr.mxu0 0.0
      %5195 = vmatpush1.msra.mxu0 %v5165
      %5196 = vmatprep.subr.mxu0 0.0
      %5197 = vmatpush1.msra.mxu0 %v5164
      %5198 = vmatprep.subr.mxu0 0.0
      %5199 = vmatpush1.msra.mxu0 %v5163
      %5200 = vmatprep.subr.mxu0 0.0
      %5201 = vmatpush1.msra.mxu0 %v5162
      %5202 = vmatprep.subr.mxu0 0.0
      %5203 = vmatpush1.msra.mxu0 %v5161
      %5204 = vmatprep.subr.mxu0 0.0
      %5205 = vmatpush1.msra.mxu0 %v5160
      %5206 = vmatprep.subr.mxu0 0.0
      %5207 = vmatpush1.msra.mxu0 %v5159
      %5208 = vmatprep.subr.mxu0 0.0
      %5209 = vmatpush1.msra.mxu0 %v5158
      %5210 = vmatprep.subr.mxu0 0.0
      %5211 = vmatpush1.msra.mxu0 %v5157
      %5212 = vmatprep.subr.mxu0 0.0
      %5213 = vmatpush2.msra.mxu0 0.0
      %5214 = vmatprep.subr.mxu0 0.0
      %5215 = vmatpush2.msra.mxu0 0.0
      %5216 = vmatprep.subr.mxu0 0.0
      %5217 = vmatpush2.msra.mxu0 0.0
      %5218 = vmatprep.subr.mxu0 0.0
      %5219 = vmatpush2.msra.mxu0 0.0
      %5220 = vmatprep.subr.mxu0 0.0
      %5221 = vmatpush2.msra.mxu0 0.0
      %5222 = vmatprep.subr.mxu0 0.0
      %5223 = vmatpush2.msra.mxu0 0.0
      %5224 = vmatprep.subr.mxu0 0.0
      %5225 = vmatpush2.msra.mxu0 0.0
      %5226 = vmatprep.subr.mxu0 0.0
      %5227 = vmatpush2.msra.mxu0 0.0
      %5228 = vmatprep.subr.mxu0 0.0
      %5229 = vmatpush2.msra.mxu0 0.0
      %5230 = vmatprep.subr.mxu0 0.0
      %5231 = vmatpush2.msra.mxu0 0.0
      %5232 = vmatprep.subr.mxu0 0.0
      %5233 = vmatpush2.msra.mxu0 0.0
      %5234 = vmatprep.subr.mxu0 0.0
      %5235 = vmatpush2.msra.mxu0 0.0
      %5236 = vmatprep.subr.mxu0 0.0
      %5237 = vmatpush2.msra.mxu0 0.0
      %5238 = vmatprep.subr.mxu0 0.0
      %5239 = vmatpush2.msra.mxu0 0.0
      %5240 = vmatprep.subr.mxu0 0.0
      %5241 = vmatpush2.msra.mxu0 0.0
      %5242 = vmatprep.subr.mxu0 0.0
      %5243 = vmatpush2.msra.mxu0 0.0
      %5244 = vmatprep.mubr.f32.mxu0 0.0
      %5245 = vmatmul.mubr.f32.gmra.mxu0 %v5125
      %v5246 = vpop.f32.mrf.mxu0
      %v5247 = vadd.f32 %v5178, %v5246
      %v5248 = vpop.f32.mrf.mxu0
      %5249 = vmatprep.mubr.f32.mxu0 0.0
      %5250 = vmatmul.mubr.f32.gmra.mxu0 %v5126
      %v5251 = vpop.f32.mrf.mxu0
      %v5252 = vadd.f32 %v5178, %v5251
      %v5253 = vpop.f32.mrf.mxu0
      %5254 = vmatprep.mubr.f32.mxu0 0.0
      %5255 = vmatmul.mubr.f32.gmra.mxu0 %v5127
      %v5256 = vpop.f32.mrf.mxu0
      %v5257 = vadd.f32 %v5178, %v5256
      %v5258 = vpop.f32.mrf.mxu0
      %5259 = vmatprep.mubr.f32.mxu0 0.0
      %5260 = vmatmul.mubr.f32.gmra.mxu0 %v5128
      %v5261 = vpop.f32.mrf.mxu0
      %v5262 = vadd.f32 %v5178, %v5261
      %v5263 = vpop.f32.mrf.mxu0
      %5264 = vmatprep.mubr.f32.mxu0 0.0
      %5265 = vmatmul.mubr.f32.gmra.mxu0 %v5129
      %v5266 = vpop.f32.mrf.mxu0
      %v5267 = vadd.f32 %v5178, %v5266
      %v5268 = vpop.f32.mrf.mxu0
      %5269 = vmatprep.mubr.f32.mxu0 0.0
      %5270 = vmatmul.mubr.f32.gmra.mxu0 %v5130
      %v5271 = vpop.f32.mrf.mxu0
      %v5272 = vadd.f32 %v5178, %v5271
      %v5273 = vpop.f32.mrf.mxu0
      %5274 = vmatprep.mubr.f32.mxu0 0.0
      %5275 = vmatmul.mubr.f32.gmra.mxu0 %v5131
      %v5276 = vpop.f32.mrf.mxu0
      %v5277 = vadd.f32 %v5178, %v5276
      %v5278 = vpop.f32.mrf.mxu0
      %5279 = vmatprep.mubr.f32.mxu0 0.0
      %5280 = vmatmul.mubr.f32.gmra.mxu0 %v5132
      %v5281 = vpop.f32.mrf.mxu0
      %v5282 = vadd.f32 %v5178, %v5281
      %v5283 = vpop.f32.mrf.mxu0
      %5284 = vmatprep.mubr.f32.mxu0 0.0
      %5285 = vmatmul.mubr.f32.gmra.mxu0 %v5133
      %v5286 = vpop.f32.mrf.mxu0
      %v5287 = vadd.f32 %v5178, %v5286
      %v5288 = vpop.f32.mrf.mxu0
      %5289 = vmatprep.mubr.f32.mxu0 0.0
      %5290 = vmatmul.mubr.f32.gmra.mxu0 %v5134
      %v5291 = vpop.f32.mrf.mxu0
      %v5292 = vadd.f32 %v5178, %v5291
      %v5293 = vpop.f32.mrf.mxu0
      %5294 = vmatprep.mubr.f32.mxu0 0.0
      %5295 = vmatmul.mubr.f32.gmra.mxu0 %v5135
      %v5296 = vpop.f32.mrf.mxu0
      %v5297 = vadd.f32 %v5178, %v5296
      %v5298 = vpop.f32.mrf.mxu0
      %5299 = vmatprep.mubr.f32.mxu0 0.0
      %5300 = vmatmul.mubr.f32.gmra.mxu0 %v5136
      %v5301 = vpop.f32.mrf.mxu0
      %v5302 = vadd.f32 %v5178, %v5301
      %v5303 = vpop.f32.mrf.mxu0
      %5304 = vmatprep.mubr.f32.mxu0 0.0
      %5305 = vmatmul.mubr.f32.gmra.mxu0 %v5137
      %v5306 = vpop.f32.mrf.mxu0
      %v5307 = vadd.f32 %v5178, %v5306
      %v5308 = vpop.f32.mrf.mxu0
      %5309 = vmatprep.mubr.f32.mxu0 0.0
      %5310 = vmatmul.mubr.f32.gmra.mxu0 %v5138
      %v5311 = vpop.f32.mrf.mxu0
      %v5312 = vadd.f32 %v5178, %v5311
      %v5313 = vpop.f32.mrf.mxu0
      %5314 = vmatprep.mubr.f32.mxu0 0.0
      %5315 = vmatmul.mubr.f32.gmra.mxu0 %v5139
      %v5316 = vpop.f32.mrf.mxu0
      %v5317 = vadd.f32 %v5178, %v5316
      %v5318 = vpop.f32.mrf.mxu0
      %5319 = vmatprep.mubr.f32.mxu0 0.0
      %5320 = vmatmul.mubr.f32.gmra.mxu0 %v5140
      %v5321 = vpop.f32.mrf.mxu0
      %v5322 = vadd.f32 %v5178, %v5321
      %v5323 = vpop.f32.mrf.mxu0
      %5324 = vmatprep.mubr.f32.mxu0 0.0
      %5325 = vmatmul.mubr.f32.gmra.mxu0 %v5141
      %v5326 = vpop.f32.mrf.mxu0
      %v5327 = vadd.f32 %v5178, %v5326
      %v5328 = vpop.f32.mrf.mxu0
      %5329 = vmatprep.mubr.f32.mxu0 0.0
      %5330 = vmatmul.mubr.f32.gmra.mxu0 %v5142
      %v5331 = vpop.f32.mrf.mxu0
      %v5332 = vadd.f32 %v5178, %v5331
      %v5333 = vpop.f32.mrf.mxu0
      %5334 = vmatprep.mubr.f32.mxu0 0.0
      %5335 = vmatmul.mubr.f32.gmra.mxu0 %v5143
      %v5336 = vpop.f32.mrf.mxu0
      %v5337 = vadd.f32 %v5178, %v5336
      %v5338 = vpop.f32.mrf.mxu0
      %5339 = vmatprep.mubr.f32.mxu0 0.0
      %5340 = vmatmul.mubr.f32.gmra.mxu0 %v5144
      %v5341 = vpop.f32.mrf.mxu0
      %v5342 = vadd.f32 %v5178, %v5341
      %v5343 = vpop.f32.mrf.mxu0
      %5344 = vmatprep.mubr.f32.mxu0 0.0
      %5345 = vmatmul.mubr.f32.gmra.mxu0 %v5145
      %v5346 = vpop.f32.mrf.mxu0
      %v5347 = vadd.f32 %v5178, %v5346
      %v5348 = vpop.f32.mrf.mxu0
      %5349 = vmatprep.mubr.f32.mxu0 0.0
      %5350 = vmatmul.mubr.f32.gmra.mxu0 %v5146
      %v5351 = vpop.f32.mrf.mxu0
      %v5352 = vadd.f32 %v5178, %v5351
      %v5353 = vpop.f32.mrf.mxu0
      %5354 = vmatprep.mubr.f32.mxu0 0.0
      %5355 = vmatmul.mubr.f32.gmra.mxu0 %v5147
      %v5356 = vpop.f32.mrf.mxu0
      %v5357 = vadd.f32 %v5178, %v5356
      %v5358 = vpop.f32.mrf.mxu0
      %5359 = vmatprep.mubr.f32.mxu0 0.0
      %5360 = vmatmul.mubr.f32.gmra.mxu0 %v5148
      %v5361 = vpop.f32.mrf.mxu0
      %v5362 = vadd.f32 %v5178, %v5361
      %v5363 = vpop.f32.mrf.mxu0
      %5364 = vmatprep.mubr.f32.mxu0 0.0
      %5365 = vmatmul.mubr.f32.gmra.mxu0 %v5149
      %v5366 = vpop.f32.mrf.mxu0
      %v5367 = vadd.f32 %v5178, %v5366
      %v5368 = vpop.f32.mrf.mxu0
      %5369 = vmatprep.mubr.f32.mxu0 0.0
      %5370 = vmatmul.mubr.f32.gmra.mxu0 %v5150
      %v5371 = vpop.f32.mrf.mxu0
      %v5372 = vadd.f32 %v5178, %v5371
      %v5373 = vpop.f32.mrf.mxu0
      %5374 = vmatprep.mubr.f32.mxu0 0.0
      %5375 = vmatmul.mubr.f32.gmra.mxu0 %v5151
      %v5376 = vpop.f32.mrf.mxu0
      %v5377 = vadd.f32 %v5178, %v5376
      %v5378 = vpop.f32.mrf.mxu0
      %5379 = vmatprep.mubr.f32.mxu0 0.0
      %5380 = vmatmul.mubr.f32.gmra.mxu0 %v5152
      %v5381 = vpop.f32.mrf.mxu0
      %v5382 = vadd.f32 %v5178, %v5381
      %v5383 = vpop.f32.mrf.mxu0
      %5384 = vmatprep.mubr.f32.mxu0 0.0
      %5385 = vmatmul.mubr.f32.gmra.mxu0 %v5153
      %v5386 = vpop.f32.mrf.mxu0
      %v5387 = vadd.f32 %v5178, %v5386
      %v5388 = vpop.f32.mrf.mxu0
      %5389 = vmatprep.mubr.f32.mxu0 0.0
      %5390 = vmatmul.mubr.f32.gmra.mxu0 %v5154
      %v5391 = vpop.f32.mrf.mxu0
      %v5392 = vadd.f32 %v5178, %v5391
      %v5393 = vpop.f32.mrf.mxu0
      %5394 = vmatprep.mubr.f32.mxu0 0.0
      %5395 = vmatmul.mubr.f32.gmra.mxu0 %v5155
      %v5396 = vpop.f32.mrf.mxu0
      %v5397 = vadd.f32 %v5178, %v5396
      %v5398 = vpop.f32.mrf.mxu0
      %5399 = vmatprep.mubr.f32.mxu0 0.0
      %5400 = vmatmul.mubr.f32.gmra.mxu0 %v5156
      %v5401 = vpop.f32.mrf.mxu0
      %v5402 = vadd.f32 %v5178, %v5401
      %v5403 = vpop.f32.mrf.mxu0
      %5404 = vdwg.mxu0
      %v5405 = vmax.f32 %v5247, 0.0
      %v5406 = vmax.f32 %v5252, 0.0
      %v5407 = vmax.f32 %v5257, 0.0
      %v5408 = vmax.f32 %v5262, 0.0
      %v5409 = vmax.f32 %v5267, 0.0
      %v5410 = vmax.f32 %v5272, 0.0
      %v5411 = vmax.f32 %v5277, 0.0
      %v5412 = vmax.f32 %v5282, 0.0
      %v5413 = vmax.f32 %v5287, 0.0
      %v5414 = vmax.f32 %v5292, 0.0
      %v5415 = vmax.f32 %v5297, 0.0
      %v5416 = vmax.f32 %v5302, 0.0
      %v5417 = vmax.f32 %v5307, 0.0
      %v5418 = vmax.f32 %v5312, 0.0
      %v5419 = vmax.f32 %v5317, 0.0
      %v5420 = vmax.f32 %v5322, 0.0
      %v5421 = vmax.f32 %v5327, 0.0
      %v5422 = vmax.f32 %v5332, 0.0
      %v5423 = vmax.f32 %v5337, 0.0
      %v5424 = vmax.f32 %v5342, 0.0
      %v5425 = vmax.f32 %v5347, 0.0
      %v5426 = vmax.f32 %v5352, 0.0
      %v5427 = vmax.f32 %v5357, 0.0
      %v5428 = vmax.f32 %v5362, 0.0
      %v5429 = vmax.f32 %v5367, 0.0
      %v5430 = vmax.f32 %v5372, 0.0
      %v5431 = vmax.f32 %v5377, 0.0
      %v5432 = vmax.f32 %v5382, 0.0
      %v5433 = vmax.f32 %v5387, 0.0
      %v5434 = vmax.f32 %v5392, 0.0
      %v5435 = vmax.f32 %v5397, 0.0
      %v5436 = vmax.f32 %v5402, 0.0
      %v5437 = vld [vmem:[%s9] sm:$0xff]
      %v5438 = vld [vmem:[%s9 + $0x8] sm:$0xff]
      %v5439 = vld [vmem:[%s9 + $0x10] sm:$0xff]
      %v5440 = vld [vmem:[%s9 + $0x18] sm:$0xff]
      %v5441 = vld [vmem:[%s9 + $0x20] sm:$0xff]
      %v5442 = vld [vmem:[%s9 + $0x28] sm:$0xff]
      %v5443 = vld [vmem:[%s9 + $0x30] sm:$0xff]
      %v5444 = vld [vmem:[%s9 + $0x38] sm:$0xff]
      %v5445 = vld [vmem:[%s9 + $0x40] sm:$0xff]
      %v5446 = vld [vmem:[%s9 + $0x48] sm:$0xff]
      %v5447 = vld [vmem:[%s9 + $0x50] sm:$0xff]
      %v5448 = vld [vmem:[%s9 + $0x58] sm:$0xff]
      %v5449 = vld [vmem:[%s9 + $0x60] sm:$0xff]
      %v5450 = vld [vmem:[%s9 + $0x68] sm:$0xff]
      %v5451 = vld [vmem:[%s9 + $0x70] sm:$0xff]
      %v5452 = vld [vmem:[%s9 + $0x78] sm:$0xff]
      %v5453 = vld [vmem:[%s10] sm:$0x1]
      %v5455 = vlaneseq
      %v5456 = vshrl.u32 %v5455, 7
      %v5457 = vsub.s32 0, %v5456
      %v5458 = vrot.slane %v5453, %v5457
      %5460 = vmatprep.subr.mxu0 0.0
      %5461 = vmatpush1.msra.mxu0 %v5452
      %5462 = vmatprep.subr.mxu0 0.0
      %5463 = vmatpush1.msra.mxu0 %v5451
      %5464 = vmatprep.subr.mxu0 0.0
      %5465 = vmatpush1.msra.mxu0 %v5450
      %5466 = vmatprep.subr.mxu0 0.0
      %5467 = vmatpush1.msra.mxu0 %v5449
      %5468 = vmatprep.subr.mxu0 0.0
      %5469 = vmatpush1.msra.mxu0 %v5448
      %5470 = vmatprep.subr.mxu0 0.0
      %5471 = vmatpush1.msra.mxu0 %v5447
      %5472 = vmatprep.subr.mxu0 0.0
      %5473 = vmatpush1.msra.mxu0 %v5446
      %5474 = vmatprep.subr.mxu0 0.0
      %5475 = vmatpush1.msra.mxu0 %v5445
      %5476 = vmatprep.subr.mxu0 0.0
      %5477 = vmatpush1.msra.mxu0 %v5444
      %5478 = vmatprep.subr.mxu0 0.0
      %5479 = vmatpush1.msra.mxu0 %v5443
      %5480 = vmatprep.subr.mxu0 0.0
      %5481 = vmatpush1.msra.mxu0 %v5442
      %5482 = vmatprep.subr.mxu0 0.0
      %5483 = vmatpush1.msra.mxu0 %v5441
      %5484 = vmatprep.subr.mxu0 0.0
      %5485 = vmatpush1.msra.mxu0 %v5440
      %5486 = vmatprep.subr.mxu0 0.0
      %5487 = vmatpush1.msra.mxu0 %v5439
      %5488 = vmatprep.subr.mxu0 0.0
      %5489 = vmatpush1.msra.mxu0 %v5438
      %5490 = vmatprep.subr.mxu0 0.0
      %5491 = vmatpush1.msra.mxu0 %v5437
      %5492 = vmatprep.subr.mxu0 0.0
      %5493 = vmatpush2.msra.mxu0 0.0
      %5494 = vmatprep.subr.mxu0 0.0
      %5495 = vmatpush2.msra.mxu0 0.0
      %5496 = vmatprep.subr.mxu0 0.0
      %5497 = vmatpush2.msra.mxu0 0.0
      %5498 = vmatprep.subr.mxu0 0.0
      %5499 = vmatpush2.msra.mxu0 0.0
      %5500 = vmatprep.subr.mxu0 0.0
      %5501 = vmatpush2.msra.mxu0 0.0
      %5502 = vmatprep.subr.mxu0 0.0
      %5503 = vmatpush2.msra.mxu0 0.0
      %5504 = vmatprep.subr.mxu0 0.0
      %5505 = vmatpush2.msra.mxu0 0.0
      %5506 = vmatprep.subr.mxu0 0.0
      %5507 = vmatpush2.msra.mxu0 0.0
      %5508 = vmatprep.subr.mxu0 0.0
      %5509 = vmatpush2.msra.mxu0 0.0
      %5510 = vmatprep.subr.mxu0 0.0
      %5511 = vmatpush2.msra.mxu0 0.0
      %5512 = vmatprep.subr.mxu0 0.0
      %5513 = vmatpush2.msra.mxu0 0.0
      %5514 = vmatprep.subr.mxu0 0.0
      %5515 = vmatpush2.msra.mxu0 0.0
      %5516 = vmatprep.subr.mxu0 0.0
      %5517 = vmatpush2.msra.mxu0 0.0
      %5518 = vmatprep.subr.mxu0 0.0
      %5519 = vmatpush2.msra.mxu0 0.0
      %5520 = vmatprep.subr.mxu0 0.0
      %5521 = vmatpush2.msra.mxu0 0.0
      %5522 = vmatprep.subr.mxu0 0.0
      %5523 = vmatpush2.msra.mxu0 0.0
      %5524 = vmatprep.mubr.f32.mxu0 0.0
      %5525 = vmatmul.mubr.f32.gmra.mxu0 %v5405
      %v5526 = vpop.f32.mrf.mxu0
      %v5527 = vadd.f32 %v5458, %v5526
      %v5528 = vpop.f32.mrf.mxu0
      %5529 = vmatprep.mubr.f32.mxu0 0.0
      %5530 = vmatmul.mubr.f32.gmra.mxu0 %v5406
      %v5531 = vpop.f32.mrf.mxu0
      %v5532 = vadd.f32 %v5458, %v5531
      %v5533 = vpop.f32.mrf.mxu0
      %5534 = vmatprep.mubr.f32.mxu0 0.0
      %5535 = vmatmul.mubr.f32.gmra.mxu0 %v5407
      %v5536 = vpop.f32.mrf.mxu0
      %v5537 = vadd.f32 %v5458, %v5536
      %v5538 = vpop.f32.mrf.mxu0
      %5539 = vmatprep.mubr.f32.mxu0 0.0
      %5540 = vmatmul.mubr.f32.gmra.mxu0 %v5408
      %v5541 = vpop.f32.mrf.mxu0
      %v5542 = vadd.f32 %v5458, %v5541
      %v5543 = vpop.f32.mrf.mxu0
      %5544 = vmatprep.mubr.f32.mxu0 0.0
      %5545 = vmatmul.mubr.f32.gmra.mxu0 %v5409
      %v5546 = vpop.f32.mrf.mxu0
      %v5547 = vadd.f32 %v5458, %v5546
      %v5548 = vpop.f32.mrf.mxu0
      %5549 = vmatprep.mubr.f32.mxu0 0.0
      %5550 = vmatmul.mubr.f32.gmra.mxu0 %v5410
      %v5551 = vpop.f32.mrf.mxu0
      %v5552 = vadd.f32 %v5458, %v5551
      %v5553 = vpop.f32.mrf.mxu0
      %5554 = vmatprep.mubr.f32.mxu0 0.0
      %5555 = vmatmul.mubr.f32.gmra.mxu0 %v5411
      %v5556 = vpop.f32.mrf.mxu0
      %v5557 = vadd.f32 %v5458, %v5556
      %v5558 = vpop.f32.mrf.mxu0
      %5559 = vmatprep.mubr.f32.mxu0 0.0
      %5560 = vmatmul.mubr.f32.gmra.mxu0 %v5412
      %v5561 = vpop.f32.mrf.mxu0
      %v5562 = vadd.f32 %v5458, %v5561
      %v5563 = vpop.f32.mrf.mxu0
      %5564 = vmatprep.mubr.f32.mxu0 0.0
      %5565 = vmatmul.mubr.f32.gmra.mxu0 %v5413
      %v5566 = vpop.f32.mrf.mxu0
      %v5567 = vadd.f32 %v5458, %v5566
      %v5568 = vpop.f32.mrf.mxu0
      %5569 = vmatprep.mubr.f32.mxu0 0.0
      %5570 = vmatmul.mubr.f32.gmra.mxu0 %v5414
      %v5571 = vpop.f32.mrf.mxu0
      %v5572 = vadd.f32 %v5458, %v5571
      %v5573 = vpop.f32.mrf.mxu0
      %5574 = vmatprep.mubr.f32.mxu0 0.0
      %5575 = vmatmul.mubr.f32.gmra.mxu0 %v5415
      %v5576 = vpop.f32.mrf.mxu0
      %v5577 = vadd.f32 %v5458, %v5576
      %v5578 = vpop.f32.mrf.mxu0
      %5579 = vmatprep.mubr.f32.mxu0 0.0
      %5580 = vmatmul.mubr.f32.gmra.mxu0 %v5416
      %v5581 = vpop.f32.mrf.mxu0
      %v5582 = vadd.f32 %v5458, %v5581
      %v5583 = vpop.f32.mrf.mxu0
      %5584 = vmatprep.mubr.f32.mxu0 0.0
      %5585 = vmatmul.mubr.f32.gmra.mxu0 %v5417
      %v5586 = vpop.f32.mrf.mxu0
      %v5587 = vadd.f32 %v5458, %v5586
      %v5588 = vpop.f32.mrf.mxu0
      %5589 = vmatprep.mubr.f32.mxu0 0.0
      %5590 = vmatmul.mubr.f32.gmra.mxu0 %v5418
      %v5591 = vpop.f32.mrf.mxu0
      %v5592 = vadd.f32 %v5458, %v5591
      %v5593 = vpop.f32.mrf.mxu0
      %5594 = vmatprep.mubr.f32.mxu0 0.0
      %5595 = vmatmul.mubr.f32.gmra.mxu0 %v5419
      %v5596 = vpop.f32.mrf.mxu0
      %v5597 = vadd.f32 %v5458, %v5596
      %v5598 = vpop.f32.mrf.mxu0
      %5599 = vmatprep.mubr.f32.mxu0 0.0
      %5600 = vmatmul.mubr.f32.gmra.mxu0 %v5420
      %v5601 = vpop.f32.mrf.mxu0
      %v5602 = vadd.f32 %v5458, %v5601
      %v5603 = vpop.f32.mrf.mxu0
      %5604 = vmatprep.mubr.f32.mxu0 0.0
      %5605 = vmatmul.mubr.f32.gmra.mxu0 %v5421
      %v5606 = vpop.f32.mrf.mxu0
      %v5607 = vadd.f32 %v5458, %v5606
      %v5608 = vpop.f32.mrf.mxu0
      %5609 = vmatprep.mubr.f32.mxu0 0.0
      %5610 = vmatmul.mubr.f32.gmra.mxu0 %v5422
      %v5611 = vpop.f32.mrf.mxu0
      %v5612 = vadd.f32 %v5458, %v5611
      %v5613 = vpop.f32.mrf.mxu0
      %5614 = vmatprep.mubr.f32.mxu0 0.0
      %5615 = vmatmul.mubr.f32.gmra.mxu0 %v5423
      %v5616 = vpop.f32.mrf.mxu0
      %v5617 = vadd.f32 %v5458, %v5616
      %v5618 = vpop.f32.mrf.mxu0
      %5619 = vmatprep.mubr.f32.mxu0 0.0
      %5620 = vmatmul.mubr.f32.gmra.mxu0 %v5424
      %v5621 = vpop.f32.mrf.mxu0
      %v5622 = vadd.f32 %v5458, %v5621
      %v5623 = vpop.f32.mrf.mxu0
      %5624 = vmatprep.mubr.f32.mxu0 0.0
      %5625 = vmatmul.mubr.f32.gmra.mxu0 %v5425
      %v5626 = vpop.f32.mrf.mxu0
      %v5627 = vadd.f32 %v5458, %v5626
      %v5628 = vpop.f32.mrf.mxu0
      %5629 = vmatprep.mubr.f32.mxu0 0.0
      %5630 = vmatmul.mubr.f32.gmra.mxu0 %v5426
      %v5631 = vpop.f32.mrf.mxu0
      %v5632 = vadd.f32 %v5458, %v5631
      %v5633 = vpop.f32.mrf.mxu0
      %5634 = vmatprep.mubr.f32.mxu0 0.0
      %5635 = vmatmul.mubr.f32.gmra.mxu0 %v5427
      %v5636 = vpop.f32.mrf.mxu0
      %v5637 = vadd.f32 %v5458, %v5636
      %v5638 = vpop.f32.mrf.mxu0
      %5639 = vmatprep.mubr.f32.mxu0 0.0
      %5640 = vmatmul.mubr.f32.gmra.mxu0 %v5428
      %v5641 = vpop.f32.mrf.mxu0
      %v5642 = vadd.f32 %v5458, %v5641
      %v5643 = vpop.f32.mrf.mxu0
      %5644 = vmatprep.mubr.f32.mxu0 0.0
      %5645 = vmatmul.mubr.f32.gmra.mxu0 %v5429
      %v5646 = vpop.f32.mrf.mxu0
      %v5647 = vadd.f32 %v5458, %v5646
      %v5648 = vpop.f32.mrf.mxu0
      %5649 = vmatprep.mubr.f32.mxu0 0.0
      %5650 = vmatmul.mubr.f32.gmra.mxu0 %v5430
      %v5651 = vpop.f32.mrf.mxu0
      %v5652 = vadd.f32 %v5458, %v5651
      %v5653 = vpop.f32.mrf.mxu0
      %5654 = vmatprep.mubr.f32.mxu0 0.0
      %5655 = vmatmul.mubr.f32.gmra.mxu0 %v5431
      %v5656 = vpop.f32.mrf.mxu0
      %v5657 = vadd.f32 %v5458, %v5656
      %v5658 = vpop.f32.mrf.mxu0
      %5659 = vmatprep.mubr.f32.mxu0 0.0
      %5660 = vmatmul.mubr.f32.gmra.mxu0 %v5432
      %v5661 = vpop.f32.mrf.mxu0
      %v5662 = vadd.f32 %v5458, %v5661
      %v5663 = vpop.f32.mrf.mxu0
      %5664 = vmatprep.mubr.f32.mxu0 0.0
      %5665 = vmatmul.mubr.f32.gmra.mxu0 %v5433
      %v5666 = vpop.f32.mrf.mxu0
      %v5667 = vadd.f32 %v5458, %v5666
      %v5668 = vpop.f32.mrf.mxu0
      %5669 = vmatprep.mubr.f32.mxu0 0.0
      %5670 = vmatmul.mubr.f32.gmra.mxu0 %v5434
      %v5671 = vpop.f32.mrf.mxu0
      %v5672 = vadd.f32 %v5458, %v5671
      %v5673 = vpop.f32.mrf.mxu0
      %5674 = vmatprep.mubr.f32.mxu0 0.0
      %5675 = vmatmul.mubr.f32.gmra.mxu0 %v5435
      %v5676 = vpop.f32.mrf.mxu0
      %v5677 = vadd.f32 %v5458, %v5676
      %v5678 = vpop.f32.mrf.mxu0
      %5679 = vmatprep.mubr.f32.mxu0 0.0
      %5680 = vmatmul.mubr.f32.gmra.mxu0 %v5436
      %v5681 = vpop.f32.mrf.mxu0
      %v5682 = vadd.f32 %v5458, %v5681
      %v5683 = vpop.f32.mrf.mxu0
      %5684 = vdwg.mxu0
      %5685 = vst.msk [vmem:[%s423] sm:$0xff] %vm474, %v5527
      %5686 = vst.msk [vmem:[%s423 + $0x8] sm:$0xff] %vm474, %v5532
      %5687 = vst.msk [vmem:[%s423 + $0x10] sm:$0xff] %vm474, %v5537
      %5688 = vst.msk [vmem:[%s423 + $0x18] sm:$0xff] %vm474, %v5542
      %5689 = vst.msk [vmem:[%s423 + $0x20] sm:$0xff] %vm474, %v5547
      %5690 = vst.msk [vmem:[%s423 + $0x28] sm:$0xff] %vm474, %v5552
      %5691 = vst.msk [vmem:[%s423 + $0x30] sm:$0xff] %vm474, %v5557
      %5692 = vst.msk [vmem:[%s423 + $0x38] sm:$0xff] %vm474, %v5562
      %5693 = vst.msk [vmem:[%s423 + $0x40] sm:$0xff] %vm474, %v5567
      %5694 = vst.msk [vmem:[%s423 + $0x48] sm:$0xff] %vm474, %v5572
      %5695 = vst.msk [vmem:[%s423 + $0x50] sm:$0xff] %vm474, %v5577
      %5696 = vst.msk [vmem:[%s423 + $0x58] sm:$0xff] %vm474, %v5582
      %5697 = vst.msk [vmem:[%s423 + $0x60] sm:$0xff] %vm474, %v5587
      %5698 = vst.msk [vmem:[%s423 + $0x68] sm:$0xff] %vm474, %v5592
      %5699 = vst.msk [vmem:[%s423 + $0x70] sm:$0xff] %vm474, %v5597
      %5700 = vst.msk [vmem:[%s423 + $0x78] sm:$0xff] %vm474, %v5602
      %5701 = vst.msk [vmem:[%s423 + $0x80] sm:$0xff] %vm474, %v5607
      %5702 = vst.msk [vmem:[%s423 + $0x88] sm:$0xff] %vm474, %v5612
      %5703 = vst.msk [vmem:[%s423 + $0x90] sm:$0xff] %vm474, %v5617
      %5704 = vst.msk [vmem:[%s423 + $0x98] sm:$0xff] %vm474, %v5622
      %5705 = vst.msk [vmem:[%s423 + $0xa0] sm:$0xff] %vm474, %v5627
      %5706 = vst.msk [vmem:[%s423 + $0xa8] sm:$0xff] %vm474, %v5632
      %5707 = vst.msk [vmem:[%s423 + $0xb0] sm:$0xff] %vm474, %v5637
      %5708 = vst.msk [vmem:[%s423 + $0xb8] sm:$0xff] %vm474, %v5642
      %5709 = vst.msk [vmem:[%s423 + $0xc0] sm:$0xff] %vm474, %v5647
      %5710 = vst.msk [vmem:[%s423 + $0xc8] sm:$0xff] %vm474, %v5652
      %5711 = vst.msk [vmem:[%s423 + $0xd0] sm:$0xff] %vm474, %v5657
      %5712 = vst.msk [vmem:[%s423 + $0xd8] sm:$0xff] %vm474, %v5662
      %5713 = vst.msk [vmem:[%s423 + $0xe0] sm:$0xff] %vm474, %v5667
      %5714 = vst.msk [vmem:[%s423 + $0xe8] sm:$0xff] %vm474, %v5672
      %5715 = vst.msk [vmem:[%s423 + $0xf0] sm:$0xff] %vm474, %v5677
      %5716 = vst.msk [vmem:[%s423 + $0xf8] sm:$0xff] %vm474, %v5682
      %5717 = vadd.xlane.f32.xlu0 %v5093
      %v5718 = vpop.xlane.xlu0 %5717
      %5719 = vadd.xlane.f32.xlu0 %v5094
      %v5720 = vpop.xlane.xlu0 %5719
      %5721 = vadd.xlane.f32.xlu0 %v5095
      %v5722 = vpop.xlane.xlu0 %5721
      %5723 = vadd.xlane.f32.xlu0 %v5096
      %v5724 = vpop.xlane.xlu0 %5723
      %5725 = vadd.xlane.f32.xlu0 %v5097
      %v5726 = vpop.xlane.xlu0 %5725
      %5727 = vadd.xlane.f32.xlu0 %v5098
      %v5728 = vpop.xlane.xlu0 %5727
      %5729 = vadd.xlane.f32.xlu0 %v5099
      %v5730 = vpop.xlane.xlu0 %5729
      %5731 = vadd.xlane.f32.xlu0 %v5100
      %v5732 = vpop.xlane.xlu0 %5731
      %5733 = vadd.xlane.f32.xlu0 %v5101
      %v5734 = vpop.xlane.xlu0 %5733
      %5735 = vadd.xlane.f32.xlu0 %v5102
      %v5736 = vpop.xlane.xlu0 %5735
      %5737 = vadd.xlane.f32.xlu0 %v5103
      %v5738 = vpop.xlane.xlu0 %5737
      %5739 = vadd.xlane.f32.xlu0 %v5104
      %v5740 = vpop.xlane.xlu0 %5739
      %5741 = vadd.xlane.f32.xlu0 %v5105
      %v5742 = vpop.xlane.xlu0 %5741
      %5743 = vadd.xlane.f32.xlu0 %v5106
      %v5744 = vpop.xlane.xlu0 %5743
      %5745 = vadd.xlane.f32.xlu0 %v5107
      %v5746 = vpop.xlane.xlu0 %5745
      %5747 = vadd.xlane.f32.xlu0 %v5108
      %v5748 = vpop.xlane.xlu0 %5747
      %5749 = vadd.xlane.f32.xlu0 %v5109
      %v5750 = vpop.xlane.xlu0 %5749
      %5751 = vadd.xlane.f32.xlu0 %v5110
      %v5752 = vpop.xlane.xlu0 %5751
      %5753 = vadd.xlane.f32.xlu0 %v5111
      %v5754 = vpop.xlane.xlu0 %5753
      %5755 = vadd.xlane.f32.xlu0 %v5112
      %v5756 = vpop.xlane.xlu0 %5755
      %5757 = vadd.xlane.f32.xlu0 %v5113
      %v5758 = vpop.xlane.xlu0 %5757
      %5759 = vadd.xlane.f32.xlu0 %v5114
      %v5760 = vpop.xlane.xlu0 %5759
      %5761 = vadd.xlane.f32.xlu0 %v5115
      %v5762 = vpop.xlane.xlu0 %5761
      %5763 = vadd.xlane.f32.xlu0 %v5116
      %v5764 = vpop.xlane.xlu0 %5763
      %5765 = vadd.xlane.f32.xlu0 %v5117
      %v5766 = vpop.xlane.xlu0 %5765
      %5767 = vadd.xlane.f32.xlu0 %v5118
      %v5768 = vpop.xlane.xlu0 %5767
      %5769 = vadd.xlane.f32.xlu0 %v5119
      %v5770 = vpop.xlane.xlu0 %5769
      %5771 = vadd.xlane.f32.xlu0 %v5120
      %v5772 = vpop.xlane.xlu0 %5771
      %5773 = vadd.xlane.f32.xlu0 %v5121
      %v5774 = vpop.xlane.xlu0 %5773
      %5775 = vadd.xlane.f32.xlu0 %v5122
      %v5776 = vpop.xlane.xlu0 %5775
      %5777 = vadd.xlane.f32.xlu0 %v5123
      %v5778 = vpop.xlane.xlu0 %5777
      %5779 = vadd.xlane.f32.xlu0 %v5124
      %v5780 = vpop.xlane.xlu0 %5779
      %vm5781 = vcmask 7168
      %5782 = vst.msk [vmem:[%s429] sm:$0xff] %vm5781, %v5718
      %5783 = vst.msk [vmem:[%s429 + $0x8] sm:$0xff] %vm5781, %v5720
      %5784 = vst.msk [vmem:[%s429 + $0x10] sm:$0xff] %vm5781, %v5722
      %5785 = vst.msk [vmem:[%s429 + $0x18] sm:$0xff] %vm5781, %v5724
      %5786 = vst.msk [vmem:[%s429 + $0x20] sm:$0xff] %vm5781, %v5726
      %5787 = vst.msk [vmem:[%s429 + $0x28] sm:$0xff] %vm5781, %v5728
      %5788 = vst.msk [vmem:[%s429 + $0x30] sm:$0xff] %vm5781, %v5730
      %5789 = vst.msk [vmem:[%s429 + $0x38] sm:$0xff] %vm5781, %v5732
      %5790 = vst.msk [vmem:[%s429 + $0x40] sm:$0xff] %vm5781, %v5734
      %5791 = vst.msk [vmem:[%s429 + $0x48] sm:$0xff] %vm5781, %v5736
      %5792 = vst.msk [vmem:[%s429 + $0x50] sm:$0xff] %vm5781, %v5738
      %5793 = vst.msk [vmem:[%s429 + $0x58] sm:$0xff] %vm5781, %v5740
      %5794 = vst.msk [vmem:[%s429 + $0x60] sm:$0xff] %vm5781, %v5742
      %5795 = vst.msk [vmem:[%s429 + $0x68] sm:$0xff] %vm5781, %v5744
      %5796 = vst.msk [vmem:[%s429 + $0x70] sm:$0xff] %vm5781, %v5746
      %5797 = vst.msk [vmem:[%s429 + $0x78] sm:$0xff] %vm5781, %v5748
      %5798 = vst.msk [vmem:[%s429 + $0x80] sm:$0xff] %vm5781, %v5750
      %5799 = vst.msk [vmem:[%s429 + $0x88] sm:$0xff] %vm5781, %v5752
      %5800 = vst.msk [vmem:[%s429 + $0x90] sm:$0xff] %vm5781, %v5754
      %5801 = vst.msk [vmem:[%s429 + $0x98] sm:$0xff] %vm5781, %v5756
      %5802 = vst.msk [vmem:[%s429 + $0xa0] sm:$0xff] %vm5781, %v5758
      %5803 = vst.msk [vmem:[%s429 + $0xa8] sm:$0xff] %vm5781, %v5760
      %5804 = vst.msk [vmem:[%s429 + $0xb0] sm:$0xff] %vm5781, %v5762
      %5805 = vst.msk [vmem:[%s429 + $0xb8] sm:$0xff] %vm5781, %v5764
      %5806 = vst.msk [vmem:[%s429 + $0xc0] sm:$0xff] %vm5781, %v5766
      %5807 = vst.msk [vmem:[%s429 + $0xc8] sm:$0xff] %vm5781, %v5768
      %5808 = vst.msk [vmem:[%s429 + $0xd0] sm:$0xff] %vm5781, %v5770
      %5809 = vst.msk [vmem:[%s429 + $0xd8] sm:$0xff] %vm5781, %v5772
      %5810 = vst.msk [vmem:[%s429 + $0xe0] sm:$0xff] %vm5781, %v5774
      %5811 = vst.msk [vmem:[%s429 + $0xe8] sm:$0xff] %vm5781, %v5776
      %5812 = vst.msk [vmem:[%s429 + $0xf0] sm:$0xff] %vm5781, %v5778
      %5813 = vst.msk [vmem:[%s429 + $0xf8] sm:$0xff] %vm5781, %v5780
      %s5814 = smul.u32 32, %s24
      %p5815 = scmp.lt.s32.totalorder %s5814, 63
      %s5816 = scalar_select %p5815, %s5814, 63
      %s5817 = smul.addr %s5816, 8
      %s5818 = scalar_lea.vmem %s11, %s5817
      %s5819 = smul.u32 32, %s24
      %p5820 = scmp.lt.s32.totalorder %s5819, 63
      %s5821 = scalar_select %p5820, %s5819, 63
      %s5822 = smul.addr %s5821, 8
      %s5823 = scalar_lea.vmem %s12, %s5822
      // Predicated region
      $region65: #{tpu_custom_call.1} parent=63 // pred_check
        %p5824 = pneg %p278
      $region66: #{tpu_custom_call.1} parent=63 // pred_check_branch
        %5826 = sbr.rel (%p5824) target = $region68
      $region67: #{tpu_custom_call.1} parent=63 // pred_region
        %s5827 = smul.u32 32, %s24
      $region68: #{tpu_custom_call.1} parent=63 // pred_fallthru
        _
      // Predicated region
      $region69: #{tpu_custom_call.1} parent=63 // pred_check
        %p5828 = pneg %p304
      $region70: #{tpu_custom_call.1} parent=63 // pred_check_branch
        %5830 = sbr.rel (%p5828) target = $region72
      $region71: #{tpu_custom_call.1} parent=63 // pred_region
        %s5831 = smul.u32 32, %s24
      $region72: #{tpu_custom_call.1} parent=63 // pred_fallthru
        _
    $region64: #{tpu_custom_call.1} parent=5 // pred_fallthru
      _
    %p5832 = scmp.le.s32.totalorder 2, %s19
    // Predicated region
    $region73: #{tpu_custom_call.1} parent=5 // pred_check
      %p5833 = pneg %p5832
    $region74: #{tpu_custom_call.1} parent=5 // pred_check_branch
      %5835 = sbr.rel (%p5833) target = $region76
    $region75: #{tpu_custom_call.1} parent=5 // pred_region
      %s5836 = ssub.s32 %s19, 2
      // Predicated region
      $region77: #{tpu_custom_call.1} parent=75 // pred_check
        %p5837 = pneg %p284
      $region78: #{tpu_custom_call.1} parent=75 // pred_check_branch
        %5839 = sbr.rel (%p5837) target = $region80
      $region79: #{tpu_custom_call.1} parent=75 // pred_region
        %s5840 = smul.u32 32, %s25
        %p5841 = scmp.lt.s32.totalorder %s5840, 63
        %s5842 = scalar_select %p5841, %s5840, 63
        %s5843 = smul.addr %s5842, 8
        %s5844 = scalar_lea.vmem %s11, %s5843
      $region80: #{tpu_custom_call.1} parent=75 // pred_fallthru
        _
      // Predicated region
      $region81: #{tpu_custom_call.1} parent=75 // pred_check
        %p5845 = pneg %p310
      $region82: #{tpu_custom_call.1} parent=75 // pred_check_branch
        %5847 = sbr.rel (%p5845) target = $region84
      $region83: #{tpu_custom_call.1} parent=75 // pred_region
        %s5848 = smul.u32 32, %s25
        %p5849 = scmp.lt.s32.totalorder %s5848, 63
        %s5850 = scalar_select %p5849, %s5848, 63
        %s5851 = smul.addr %s5850, 8
        %s5852 = scalar_lea.vmem %s12, %s5851
      $region84: #{tpu_custom_call.1} parent=75 // pred_fallthru
        _
    $region76: #{tpu_custom_call.1} parent=5 // pred_fallthru
      _
  $region6: #{tpu_custom_call.1} parent=0 // loop_footer
    %s23 = sadd.s32 1, %s19
  $region7: #{tpu_custom_call.1} parent=0 // loop_footer_branch
    %18 = sbr.rel target = $region3
  $region8: #{tpu_custom_call.1} parent=0 // loop_exit
    _

</llo_original>
